<compile_context>
chip_gen: v7x
topology: tpu7x:2x2x1
jax: 0.10.0
libtpu: 0.0.40
codegen_flags: <defaults>
</compile_context>

<pallas_src>
import functools

import jax
import jax.numpy as jnp
from jax.experimental import pallas as pl
from jax.experimental.pallas import tpu as pltpu


# ---------------------------------------------------------------------------
# Fused kernel
# ---------------------------------------------------------------------------
def _bottleneck_kernel(x_ref, w1_ref, b1_ref, w2_ref, b2_ref, o_ref, ypad_ref,
                       *, add):
    """Fused cv1 + pad + cv2 (+ residual) for one batch element.

    x_ref   : (1, H, W, C1)   compute dtype (f32 or bf16)
    w1_ref  : (C1, C_)        compute dtype (BN folded)
    b1_ref  : (1, C_)         f32 (BN folded bias)
    w2_ref  : (3, 3*C_, C2)   compute dtype; per-ky taps concatenated kx-major
    b2_ref  : (1, C2)         f32
    o_ref   : (1, H, W, C2)   f32
    ypad_ref: (H+2, W, C_)    VMEM scratch: cv1 output, zero-padded along H only
    """
    H = x_ref.shape[1]
    W = x_ref.shape[2]
    C1 = x_ref.shape[3]
    C_ = w1_ref.shape[1]
    C2 = w2_ref.shape[2]
    cdt = ypad_ref.dtype

    xb = x_ref[0]                                            # (H, W, C1), loaded once

    # Zero the halo rows once; the scratch persists across grid iterations and
    # rows 0 / H+1 are never written again, so they stay zero for every batch.
    @pl.when(pl.program_id(0) == 0)
    def _():
        zrow = jnp.zeros((1, W, C_), cdt)
        ypad_ref[0:1] = zrow                                 # top pad row
        ypad_ref[H + 1:H + 2] = zrow                         # bottom pad row

    # ---- cv1: 1x1 conv (+BN bias) + SiLU, written into the H-padded scratch ----
    y = jnp.dot(xb.reshape(H * W, C1), w1_ref[...],
                preferred_element_type=jnp.float32)          # (H*W, C_) f32
    y = y + b1_ref[...]
    y = y * jax.nn.sigmoid(y)                                # SiLU (exp on EUP slot)
    ypad_ref[1:H + 1] = y.reshape(H, W, C_).astype(cdt)      # leading-dim aligned store

    # ---- cv2: 3x3 conv via 3 fat matmuls (kx taps folded into K) ---------------
    # kx shifts are done with pltpu.roll along the sublane (W) axis (XLU slot) +
    # a cheap edge mask, avoiding offset sublane slices / per-tap relayout copies.
    col = jax.lax.broadcasted_iota(jnp.int32, (H, W, C_), 1)
    left_edge = col == 0                                     # hoisted out of ky loop
    right_edge = col == W - 1
    zero_c = jnp.zeros((H, W, C_), cdt)
    acc = jnp.zeros((H * W, C2), jnp.float32)
    for ky in range(3):
        slab = ypad_ref[ky:ky + H]                           # (H, W, C_) leading-dim slice
        left = pltpu.roll(slab, shift=1, axis=1)             # out[w] needs in[w-1]
        left = jnp.where(left_edge, zero_c, left)
        right = pltpu.roll(slab, shift=W - 1, axis=1)        # out[w] needs in[w+1]
        right = jnp.where(right_edge, zero_c, right)
        lhs = jnp.concatenate([left, slab, right], axis=-1)  # (H, W, 3*C_) kx-major
        acc = acc + jnp.dot(lhs.reshape(H * W, 3 * C_), w2_ref[ky],
                            preferred_element_type=jnp.float32)

    acc = acc + b2_ref[...]
    acc = acc * jax.nn.sigmoid(acc)                          # SiLU epilogue in f32
    out = acc.reshape(H, W, C2)
    if add:
        out = out + xb.astype(jnp.float32)                   # residual: x already in VMEM
    o_ref[0] = out.astype(o_ref.dtype)
    # TODO(synk): for lane-dense stores when C2 < 128, pad channels to 128 (real
    # CSPDarknet channel counts are >=64/128 so the plain NHWC store is fine there).


# ---------------------------------------------------------------------------
# Wrapper (glue in plain JAX)
# ---------------------------------------------------------------------------
def _fold_bn(w_oihw, gamma, beta, mean, var, eps=1e-3):
    """Fold eval-mode BatchNorm into a bias-free conv. Returns (w_oihw', bias)."""
    scale = gamma / jnp.sqrt(var + eps)                      # (c_out,)
    w_folded = w_oihw * scale[:, None, None, None]
    bias = beta - mean * scale
    return w_folded, bias


def bottleneck_forward(x_nchw, params, shortcut=True, compute_dtype=jnp.float32):
    """Forward pass of Bottleneck. x_nchw: (N, C1, H, W) float32.

    compute_dtype: matmul-operand dtype (use jnp.bfloat16 on v6e/v7x to halve
    HBM traffic and hit the bf16 MXU; epilogue stays f32).
    """
    N, C1, H, W = x_nchw.shape
    w1 = params["cv1_w"]          # (C_, C1, 1, 1)
    w2 = params["cv2_w"]          # (C2, C_, 3, 3)
    C_ = w1.shape[0]
    C2 = w2.shape[0]
    add = bool(shortcut and (C1 == C2))

    # Fold BN into conv weights/bias (eps=0.001 matches the torch module).
    w1f, b1 = _fold_bn(w1, params["bn1_g"], params["bn1_b"],
                       params["bn1_m"], params["bn1_v"])
    w2f, b2 = _fold_bn(w2, params["bn2_g"], params["bn2_b"],
                       params["bn2_m"], params["bn2_v"])

    # Rearrange weights for channels-last matmuls.
    w1_mat = jnp.transpose(w1f[:, :, 0, 0], (1, 0)).astype(compute_dtype)   # (C1, C_)
    # (C2, C_, 3, 3) -> (ky, kx, C_, C2) -> (3, 3*C_, C2), kx-major along K
    w2_cat = jnp.transpose(w2f, (2, 3, 1, 0)).reshape(3, 3 * C_, C2).astype(compute_dtype)
    b1_v = b1.reshape(1, C_).astype(jnp.float32)
    b2_v = b2.reshape(1, C2).astype(jnp.float32)

    # NCHW -> NHWC
    x = jnp.transpose(x_nchw, (0, 2, 3, 1)).astype(compute_dtype)           # (N,H,W,C1)

    # Explicit scoped-VMEM budget (important on v7x's 64 MiB physical VMEM).
    it = jnp.dtype(compute_dtype).itemsize
    est = (2 * H * W * C1 * it                 # x block (double-buffered)
           + 2 * H * W * C2 * 4                # f32 output block (double-buffered)
           + (H + 2) * W * C_ * it             # padded cv1 scratch
           + 2 * (C1 * C_ + 9 * C_ * C2) * it  # weights (double-buffered)
           + 2 * (C_ + C2) * 4)                # biases
    vmem_limit = int(min(64 * 1024 * 1024, max(32 * 1024 * 1024, 3 * est)))

    # TODO(synk): add halo-based row tiling (grid over (N, H/tile_h)) for large
    # feature maps; at these sizes one image per grid step fits VMEM comfortably.
    out = pl.pallas_call(
        functools.partial(_bottleneck_kernel, add=add),
        out_shape=jax.ShapeDtypeStruct((N, H, W, C2), jnp.float32),
        grid=(N,),
        in_specs=[
            pl.BlockSpec((1, H, W, C1), lambda n: (n, 0, 0, 0)),
            pl.BlockSpec((C1, C_), lambda n: (0, 0)),
            pl.BlockSpec((1, C_), lambda n: (0, 0)),
            pl.BlockSpec((3, 3 * C_, C2), lambda n: (0, 0, 0)),
            pl.BlockSpec((1, C2), lambda n: (0, 0)),
        ],
        out_specs=pl.BlockSpec((1, H, W, C2), lambda n: (n, 0, 0, 0)),
        scratch_shapes=[pltpu.VMEM((H + 2, W, C_), compute_dtype)],
        compiler_params=pltpu.CompilerParams(
            dimension_semantics=("arbitrary",),   # scratch halo rows written once at n==0
            vmem_limit_bytes=vmem_limit,
        ),
    )(x, w1_mat, b1_v, w2_cat, b2_v)

    # NHWC -> NCHW
    return jnp.transpose(out, (0, 3, 1, 2))


# ---------------------------------------------------------------------------
# Pure-JAX reference (for sanity check only)
# ---------------------------------------------------------------------------
def _reference(x_nchw, params, shortcut=True):
    def conv_bn_silu(x, w, g, b, m, v, pad):
        y = jax.lax.conv_general_dilated(
            x, w, window_strides=(1, 1), padding=[(pad, pad), (pad, pad)],
            dimension_numbers=("NCHW", "OIHW", "NCHW"))
        scale = g / jnp.sqrt(v + 1e-3)
        y = y * scale[None, :, None, None] + (b - m * scale)[None, :, None, None]
        return y * jax.nn.sigmoid(y)

    y = conv_bn_silu(x_nchw, params["cv1_w"], params["bn1_g"], params["bn1_b"],
                     params["bn1_m"], params["bn1_v"], pad=0)
    y = conv_bn_silu(y, params["cv2_w"], params["bn2_g"], params["bn2_b"],
                     params["bn2_m"], params["bn2_v"], pad=1)
    if shortcut and x_nchw.shape[1] == params["cv2_w"].shape[0]:
        y = y + x_nchw
    return y


# ---------------------------------------------------------------------------
if __name__ == "__main__":
    # Bottleneck(c1=4, c2=4, shortcut=True, g=1, e=0.5) -> c_ = 2
    N, C1, C2, H, W = 2, 4, 4, 16, 16
    C_ = int(C2 * 0.5)

    key = jax.random.PRNGKey(0)
    ks = jax.random.split(key, 11)
    params = {
        "cv1_w": 0.2 * jax.random.normal(ks[0], (C_, C1, 1, 1), jnp.float32),
        "bn1_g": 1.0 + 0.1 * jax.random.normal(ks[1], (C_,), jnp.float32),
        "bn1_b": 0.1 * jax.random.normal(ks[2], (C_,), jnp.float32),
        "bn1_m": 0.1 * jax.random.normal(ks[3], (C_,), jnp.float32),
        "bn1_v": jnp.abs(jax.random.normal(ks[4], (C_,), jnp.float32)) + 0.5,
        "cv2_w": 0.2 * jax.random.normal(ks[5], (C2, C_, 3, 3), jnp.float32),
        "bn2_g": 1.0 + 0.1 * jax.random.normal(ks[6], (C2,), jnp.float32),
        "bn2_b": 0.1 * jax.random.normal(ks[7], (C2,), jnp.float32),
        "bn2_m": 0.1 * jax.random.normal(ks[8], (C2,), jnp.float32),
        "bn2_v": jnp.abs(jax.random.normal(ks[9], (C2,), jnp.float32)) + 0.5,
    }
    x = jax.random.normal(ks[10], (N, C1, H, W), jnp.float32)

    ref = jax.block_until_ready(_reference(x, params, shortcut=True))

    # Exact-semantics path (f32 operands): tight tolerance vs reference.
    out_f32 = jax.block_until_ready(
        bottleneck_forward(x, params, shortcut=True, compute_dtype=jnp.float32))
    assert out_f32.shape == (N, C2, H, W)
    assert jnp.allclose(out_f32, ref, atol=1e-4, rtol=1e-4), \
        float(jnp.max(jnp.abs(out_f32 - ref)))

    # Fast path for v6e/v7x (bf16 matmul operands, f32 epilogue): loose tolerance.
    out_bf16 = jax.block_until_ready(
        bottleneck_forward(x, params, shortcut=True, compute_dtype=jnp.bfloat16))
    assert out_bf16.shape == (N, C2, H, W)
    assert jnp.allclose(out_bf16, ref, atol=5e-2, rtol=5e-2), \
        float(jnp.max(jnp.abs(out_bf16 - ref)))

    print("KERNEL_OK")
</pallas_src>

<mosaic_0001>
module attributes {stable_mosaic.version = 11 : i64} {
  func.func @_bottleneck_kernel(%arg0: i32, %arg1: memref<1x16x16x4xf32, #tpu.memory_space<vmem>>, %arg2: memref<4x2xf32, #tpu.memory_space<vmem>>, %arg3: memref<1x2xf32, #tpu.memory_space<vmem>>, %arg4: memref<3x6x4xf32, #tpu.memory_space<vmem>>, %arg5: memref<1x4xf32, #tpu.memory_space<vmem>>, %arg6: memref<1x16x16x4xf32, #tpu.memory_space<vmem>>, %arg7: memref<18x16x2xf32, #tpu.memory_space<vmem>>) attributes {dimension_semantics = [#tpu.dimension_semantics<arbitrary>], iteration_bounds = array<i64: 2>, scalar_prefetch = 0 : i64, scratch_operands = 1 : i64, tpu.core_type = #tpu.core_type<tc>, window_params = [{transform_indices = @transform_0, window_bounds = array<i64: 1, 16, 16, 4>}, {pipeline_mode = #tpu.pipeline_mode<synchronous>, transform_indices = @transform_1, window_bounds = array<i64: 4, 2>}, {pipeline_mode = #tpu.pipeline_mode<synchronous>, transform_indices = @transform_2, window_bounds = array<i64: 1, 2>}, {pipeline_mode = #tpu.pipeline_mode<synchronous>, transform_indices = @transform_3, window_bounds = array<i64: 3, 6, 4>}, {pipeline_mode = #tpu.pipeline_mode<synchronous>, transform_indices = @transform_4, window_bounds = array<i64: 1, 4>}, {transform_indices = @transform_5, window_bounds = array<i64: 1, 16, 16, 4>}]} {
    %c0 = arith.constant 0 : index
    %c0_0 = arith.constant 0 : index
    %c0_1 = arith.constant 0 : index
    %c0_2 = arith.constant 0 : index
    %0 = vector.load %arg1[%c0, %c0_0, %c0_1, %c0_2] : memref<1x16x16x4xf32, #tpu.memory_space<vmem>>, vector<1x16x16x4xf32>
    %1 = vector.shape_cast %0 : vector<1x16x16x4xf32> to vector<16x16x4xf32>
    %c0_i32 = arith.constant 0 : i32
    %2 = arith.cmpi eq, %arg0, %c0_i32 : i32
    %3 = arith.extui %2 : i1 to i32
    %c0_i32_3 = arith.constant 0 : i32
    %4 = arith.cmpi ne, %3, %c0_i32_3 : i32
    scf.if %4 {
      %cst_46 = arith.constant 0.000000e+00 : f32
      %73 = vector.broadcast %cst_46 : f32 to vector<1x16x2xf32>
      %c0_47 = arith.constant 0 : index
      %c0_48 = arith.constant 0 : index
      %c0_49 = arith.constant 0 : index
      %74 = vector.load %arg7[%c0_47, %c0_48, %c0_49] : memref<18x16x2xf32, #tpu.memory_space<vmem>>, vector<1x16x2xf32>
      tpu.vector_store %arg7[%c0_47, %c0_48, %c0_49], %73 {strides = array<i32>} : memref<18x16x2xf32, #tpu.memory_space<vmem>>, vector<1x16x2xf32>,
      %c17 = arith.constant 17 : index
      %c0_50 = arith.constant 0 : index
      %c0_51 = arith.constant 0 : index
      %75 = vector.load %arg7[%c17, %c0_50, %c0_51] : memref<18x16x2xf32, #tpu.memory_space<vmem>>, vector<1x16x2xf32>
      tpu.vector_store %arg7[%c17, %c0_50, %c0_51], %73 {strides = array<i32>} : memref<18x16x2xf32, #tpu.memory_space<vmem>>, vector<1x16x2xf32>,
    } else {
    }
    %5 = vector.shape_cast %1 : vector<16x16x4xf32> to vector<256x4xf32>
    %c0_4 = arith.constant 0 : index
    %c0_5 = arith.constant 0 : index
    %6 = vector.load %arg2[%c0_4, %c0_5] : memref<4x2xf32, #tpu.memory_space<vmem>>, vector<4x2xf32>
    %cst = arith.constant dense<0.000000e+00> : vector<256x2xf32>
    %7 = tpu.matmul %5, %6, %cst {dimension_numbers = #tpu.dot_dimension_numbers<[1], [0], [0], [1], [0, 0, 1, 1], [], []>} : vector<256x4xf32>, vector<4x2xf32>, vector<256x2xf32> -> vector<256x2xf32>
    %c0_6 = arith.constant 0 : index
    %c0_7 = arith.constant 0 : index
    %8 = vector.load %arg3[%c0_6, %c0_7] : memref<1x2xf32, #tpu.memory_space<vmem>>, vector<1x2xf32>
    %9 = vector.broadcast %8 : vector<1x2xf32> to vector<256x2xf32>
    %10 = arith.addf %7, %9 : vector<256x2xf32>
    %11 = arith.negf %10 : vector<256x2xf32>
    %12 = math.exp %11 : vector<256x2xf32>
    %cst_8 = arith.constant 1.000000e+00 : f32
    %13 = vector.broadcast %cst_8 : f32 to vector<256x2xf32>
    %14 = arith.addf %13, %12 : vector<256x2xf32>
    %15 = arith.divf %13, %14 : vector<256x2xf32>
    %16 = arith.mulf %10, %15 : vector<256x2xf32>
    %17 = vector.shape_cast %16 : vector<256x2xf32> to vector<16x16x2xf32>
    %c1 = arith.constant 1 : index
    %c0_9 = arith.constant 0 : index
    %c0_10 = arith.constant 0 : index
    %18 = vector.load %arg7[%c1, %c0_9, %c0_10] : memref<18x16x2xf32, #tpu.memory_space<vmem>>, vector<16x16x2xf32>
    tpu.vector_store %arg7[%c1, %c0_9, %c0_10], %17 {strides = array<i32>} : memref<18x16x2xf32, #tpu.memory_space<vmem>>, vector<16x16x2xf32>,
    %19 = tpu.iota {dimensions = array<i32: 1>} : vector<16x16x2xi32>
    %c0_i32_11 = arith.constant 0 : i32
    %20 = vector.broadcast %c0_i32_11 : i32 to vector<16x16x2xi32>
    %21 = arith.cmpi eq, %19, %20 : vector<16x16x2xi32>
    %c15_i32 = arith.constant 15 : i32
    %22 = vector.broadcast %c15_i32 : i32 to vector<16x16x2xi32>
    %23 = arith.cmpi eq, %19, %22 : vector<16x16x2xi32>
    %cst_12 = arith.constant 0.000000e+00 : f32
    %24 = vector.broadcast %cst_12 : f32 to vector<16x16x2xf32>
    %cst_13 = arith.constant 0.000000e+00 : f32
    %25 = vector.broadcast %cst_13 : f32 to vector<256x4xf32>
    %c0_14 = arith.constant 0 : index
    %c0_15 = arith.constant 0 : index
    %c0_16 = arith.constant 0 : index
    %26 = vector.load %arg7[%c0_14, %c0_15, %c0_16] : memref<18x16x2xf32, #tpu.memory_space<vmem>>, vector<16x16x2xf32>
    %c1_i32 = arith.constant 1 : i32
    %27 = tpu.dynamic_rotate %26 by %c1_i32 dim 1 : vector<16x16x2xf32>, i32 -> vector<16x16x2xf32>
    %28 = arith.select %21, %24, %27 : vector<16x16x2xi1>, vector<16x16x2xf32>
    %c15_i32_17 = arith.constant 15 : i32
    %29 = tpu.dynamic_rotate %26 by %c15_i32_17 dim 1 : vector<16x16x2xf32>, i32 -> vector<16x16x2xf32>
    %30 = arith.select %23, %24, %29 : vector<16x16x2xi1>, vector<16x16x2xf32>
    %31 = tpu.concatenate %28, %26, %30 in 2 : vector<16x16x2xf32>, vector<16x16x2xf32>, vector<16x16x2xf32> -> vector<16x16x6xf32>
    %32 = vector.shape_cast %31 : vector<16x16x6xf32> to vector<256x6xf32>
    %c0_18 = arith.constant 0 : index
    %c0_19 = arith.constant 0 : index
    %c0_20 = arith.constant 0 : index
    %33 = vector.load %arg4[%c0_18, %c0_19, %c0_20] : memref<3x6x4xf32, #tpu.memory_space<vmem>>, vector<1x6x4xf32>
    %34 = vector.shape_cast %33 : vector<1x6x4xf32> to vector<6x4xf32>
    %cst_21 = arith.constant dense<0.000000e+00> : vector<256x4xf32>
    %35 = tpu.matmul %32, %34, %cst_21 {dimension_numbers = #tpu.dot_dimension_numbers<[1], [0], [0], [1], [0, 0, 1, 1], [], []>} : vector<256x6xf32>, vector<6x4xf32>, vector<256x4xf32> -> vector<256x4xf32>
    %36 = arith.addf %25, %35 : vector<256x4xf32>
    %c1_22 = arith.constant 1 : index
    %c0_23 = arith.constant 0 : index
    %c0_24 = arith.constant 0 : index
    %37 = vector.load %arg7[%c1_22, %c0_23, %c0_24] : memref<18x16x2xf32, #tpu.memory_space<vmem>>, vector<16x16x2xf32>
    %c1_i32_25 = arith.constant 1 : i32
    %38 = tpu.dynamic_rotate %37 by %c1_i32_25 dim 1 : vector<16x16x2xf32>, i32 -> vector<16x16x2xf32>
    %39 = arith.select %21, %24, %38 : vector<16x16x2xi1>, vector<16x16x2xf32>
    %c15_i32_26 = arith.constant 15 : i32
    %40 = tpu.dynamic_rotate %37 by %c15_i32_26 dim 1 : vector<16x16x2xf32>, i32 -> vector<16x16x2xf32>
    %41 = arith.select %23, %24, %40 : vector<16x16x2xi1>, vector<16x16x2xf32>
    %42 = tpu.concatenate %39, %37, %41 in 2 : vector<16x16x2xf32>, vector<16x16x2xf32>, vector<16x16x2xf32> -> vector<16x16x6xf32>
    %43 = vector.shape_cast %42 : vector<16x16x6xf32> to vector<256x6xf32>
    %c1_27 = arith.constant 1 : index
    %c0_28 = arith.constant 0 : index
    %c0_29 = arith.constant 0 : index
    %44 = vector.load %arg4[%c1_27, %c0_28, %c0_29] : memref<3x6x4xf32, #tpu.memory_space<vmem>>, vector<1x6x4xf32>
    %45 = vector.shape_cast %44 : vector<1x6x4xf32> to vector<6x4xf32>
    %cst_30 = arith.constant dense<0.000000e+00> : vector<256x4xf32>
    %46 = tpu.matmul %43, %45, %cst_30 {dimension_numbers = #tpu.dot_dimension_numbers<[1], [0], [0], [1], [0, 0, 1, 1], [], []>} : vector<256x6xf32>, vector<6x4xf32>, vector<256x4xf32> -> vector<256x4xf32>
    %47 = arith.addf %36, %46 : vector<256x4xf32>
    %c2 = arith.constant 2 : index
    %c0_31 = arith.constant 0 : index
    %c0_32 = arith.constant 0 : index
    %48 = vector.load %arg7[%c2, %c0_31, %c0_32] : memref<18x16x2xf32, #tpu.memory_space<vmem>>, vector<16x16x2xf32>
    %c1_i32_33 = arith.constant 1 : i32
    %49 = tpu.dynamic_rotate %48 by %c1_i32_33 dim 1 : vector<16x16x2xf32>, i32 -> vector<16x16x2xf32>
    %50 = arith.select %21, %24, %49 : vector<16x16x2xi1>, vector<16x16x2xf32>
    %c15_i32_34 = arith.constant 15 : i32
    %51 = tpu.dynamic_rotate %48 by %c15_i32_34 dim 1 : vector<16x16x2xf32>, i32 -> vector<16x16x2xf32>
    %52 = arith.select %23, %24, %51 : vector<16x16x2xi1>, vector<16x16x2xf32>
    %53 = tpu.concatenate %50, %48, %52 in 2 : vector<16x16x2xf32>, vector<16x16x2xf32>, vector<16x16x2xf32> -> vector<16x16x6xf32>
    %54 = vector.shape_cast %53 : vector<16x16x6xf32> to vector<256x6xf32>
    %c2_35 = arith.constant 2 : index
    %c0_36 = arith.constant 0 : index
    %c0_37 = arith.constant 0 : index
    %55 = vector.load %arg4[%c2_35, %c0_36, %c0_37] : memref<3x6x4xf32, #tpu.memory_space<vmem>>, vector<1x6x4xf32>
    %56 = vector.shape_cast %55 : vector<1x6x4xf32> to vector<6x4xf32>
    %cst_38 = arith.constant dense<0.000000e+00> : vector<256x4xf32>
    %57 = tpu.matmul %54, %56, %cst_38 {dimension_numbers = #tpu.dot_dimension_numbers<[1], [0], [0], [1], [0, 0, 1, 1], [], []>} : vector<256x6xf32>, vector<6x4xf32>, vector<256x4xf32> -> vector<256x4xf32>
    %58 = arith.addf %47, %57 : vector<256x4xf32>
    %c0_39 = arith.constant 0 : index
    %c0_40 = arith.constant 0 : index
    %59 = vector.load %arg5[%c0_39, %c0_40] : memref<1x4xf32, #tpu.memory_space<vmem>>, vector<1x4xf32>
    %60 = vector.broadcast %59 : vector<1x4xf32> to vector<256x4xf32>
    %61 = arith.addf %58, %60 : vector<256x4xf32>
    %62 = arith.negf %61 : vector<256x4xf32>
    %63 = math.exp %62 : vector<256x4xf32>
    %cst_41 = arith.constant 1.000000e+00 : f32
    %64 = vector.broadcast %cst_41 : f32 to vector<256x4xf32>
    %65 = arith.addf %64, %63 : vector<256x4xf32>
    %66 = arith.divf %64, %65 : vector<256x4xf32>
    %67 = arith.mulf %61, %66 : vector<256x4xf32>
    %68 = vector.shape_cast %67 : vector<256x4xf32> to vector<16x16x4xf32>
    %69 = arith.addf %68, %1 : vector<16x16x4xf32>
    %c0_42 = arith.constant 0 : index
    %c0_43 = arith.constant 0 : index
    %c0_44 = arith.constant 0 : index
    %c0_45 = arith.constant 0 : index
    %70 = vector.load %arg6[%c0_42, %c0_43, %c0_44, %c0_45] : memref<1x16x16x4xf32, #tpu.memory_space<vmem>>, vector<1x16x16x4xf32>
    %71 = vector.shape_cast %70 : vector<1x16x16x4xf32> to vector<16x16x4xf32>
    %72 = vector.shape_cast %69 : vector<16x16x4xf32> to vector<1x16x16x4xf32>
    tpu.vector_store %arg6[%c0_42, %c0_43, %c0_44, %c0_45], %72 {strides = array<i32>} : memref<1x16x16x4xf32, #tpu.memory_space<vmem>>, vector<1x16x16x4xf32>,
    return
  }
  func.func @transform_0(%arg0: i32) -> (i32, i32, i32, i32) {
    %c0_i32 = arith.constant 0 : i32
    %c0_i32_0 = arith.constant 0 : i32
    %c0_i32_1 = arith.constant 0 : i32
    %c0_i32_2 = arith.constant 0 : i32
    return %arg0, %c0_i32, %c0_i32_0, %c0_i32_1 : i32, i32, i32, i32
  }
  func.func @transform_1(%arg0: i32) -> (i32, i32) {
    %c0_i32 = arith.constant 0 : i32
    %c0_i32_0 = arith.constant 0 : i32
    %c0_i32_1 = arith.constant 0 : i32
    return %c0_i32, %c0_i32_0 : i32, i32
  }
  func.func @transform_2(%arg0: i32) -> (i32, i32) {
    %c0_i32 = arith.constant 0 : i32
    %c0_i32_0 = arith.constant 0 : i32
    %c0_i32_1 = arith.constant 0 : i32
    return %c0_i32, %c0_i32_0 : i32, i32
  }
  func.func @transform_3(%arg0: i32) -> (i32, i32, i32) {
    %c0_i32 = arith.constant 0 : i32
    %c0_i32_0 = arith.constant 0 : i32
    %c0_i32_1 = arith.constant 0 : i32
    %c0_i32_2 = arith.constant 0 : i32
    return %c0_i32, %c0_i32_0, %c0_i32_1 : i32, i32, i32
  }
  func.func @transform_4(%arg0: i32) -> (i32, i32) {
    %c0_i32 = arith.constant 0 : i32
    %c0_i32_0 = arith.constant 0 : i32
    %c0_i32_1 = arith.constant 0 : i32
    return %c0_i32, %c0_i32_0 : i32, i32
  }
  func.func @transform_5(%arg0: i32) -> (i32, i32, i32, i32) {
    %c0_i32 = arith.constant 0 : i32
    %c0_i32_0 = arith.constant 0 : i32
    %c0_i32_1 = arith.constant 0 : i32
    %c0_i32_2 = arith.constant 0 : i32
    return %arg0, %c0_i32, %c0_i32_0, %c0_i32_1 : i32, i32, i32, i32
  }
}

</mosaic_0001>

<llo_original>
// kernel: tpu_custom_call.1
$region0: #{tpu_custom_call.1}
  #allocation0 [shape = 'u32[]', space=smem, size = 0x4, offset = 0x4, fixed_abs, tag = 'smem constant byte address 0x4 - core index']
  #allocation1 [shape = 'u32[144,128]{1,0:T(1,128)}', space=vmem, size = 0x12000, scoped, tag = 'internal scratch']
  #allocation2 [shape = 'f32[18,16,2]{2,1,0:T(8,128)}', space=vmem, size = 0x24000, scoped, tag = 'scratch operand']
  %s0 = inlined_call_operand.vmem [shape: f32[2,16,16,4], index: 0, kind: input, shape index: {}]
  %s1 = inlined_call_operand.vmem [shape: f32[4,2], index: 1, kind: input, shape index: {}]
  %s2 = inlined_call_operand.vmem [shape: f32[1,2], index: 2, kind: input, shape index: {}]
  %s3 = inlined_call_operand.vmem [shape: f32[3,6,4], index: 3, kind: input, shape index: {}]
  %s4 = inlined_call_operand.vmem [shape: f32[1,4], index: 4, kind: input, shape index: {}]
  %s5 = inlined_call_operand.vmem [shape: f32[2,16,16,4], index: 5, kind: output, shape index: {}]
  %s6 = sld [smem:[#allocation0]]
  $region57: #{tpu_custom_call.1} parent=0
    _
  %s8 = ssub.s32 1, %s6
  %s9 = scalar_select 0, %s8, %s6
  loop: start=0, step=1, limit=4
  $region2: #{tpu_custom_call.1} parent=0 // loop_pre_header
    _
  $region3: #{tpu_custom_call.1} parent=0 // loop_header
    %s11 = sphi 0, %s15
    %p12 = scmp.ge.s32.totalorder %s11, 4
    %s21 = sphi 0, %s23
    %s24 = sphi 0, %s21
    %s25 = sphi 0, %s24
    %s41 = sphi 0, %s25
    %s45 = sphi 0, %s45
    %s47 = sphi 0, %s45
    %s48 = sphi 0, %s47
    %s62 = sphi 0, %s48
    %s66 = sphi 0, %s66
    %s68 = sphi 0, %s66
    %s69 = sphi 0, %s68
    %s83 = sphi 0, %s69
    %s87 = sphi 0, %s87
    %s89 = sphi 0, %s87
    %s90 = sphi 0, %s89
    %s104 = sphi 0, %s90
    %s108 = sphi 0, %s108
    %s110 = sphi 0, %s108
    %s111 = sphi 0, %s110
    %s125 = sphi 0, %s111
    %s131 = sphi 0, %s133
    %s134 = sphi 0, %s131
    %s135 = sphi 0, %s134
    %s151 = sphi 0, %s135
  $region4: #{tpu_custom_call.1} parent=0 // loop_header_branch
    %14 = sbr.rel (%p12) target = $region8
  $region5: #{tpu_custom_call.1} parent=0 // loop_body
    %s16 = ssub.s32 %s11, 1
    %s17 = ssub.s32 %s11, 2
    %s18 = sadd.s32 %s11, 1
    %s19 = ssub.s32 %s11, %s18
    %p20 = scmp.eq.s32.totalorder %s19, 0
    %s22 = sadd.s32 %s21, 1
    %s23 = scalar_select %p20, %s21, %s22
    %p26 = pneg %p20
    %p27 = scmp.eq.s32.totalorder %s11, 1
    %p28 = por %p26, %p27
    %p29 = scmp.ne.s32.totalorder %s21, %s24
    %p30 = scmp.eq.s32.totalorder %s11, 0
    %p31 = por %p29, %p30
    %p32 = scmp.ne.s32.totalorder %s21, %s24
    %p33 = scmp.eq.s32.totalorder %s16, 1
    %p34 = por %p32, %p33
    %p35 = scmp.ne.s32.totalorder %s24, %s25
    %p36 = scmp.eq.s32.totalorder %s16, 0
    %p37 = por %p35, %p36
    %p38 = scmp.ne.s32.totalorder %s24, %s25
    %p39 = scmp.eq.s32.totalorder %s17, 1
    %p40 = por %p38, %p39
    %p42 = scmp.ne.s32.totalorder %s25, %s41
    %p43 = scmp.eq.s32.totalorder %s17, 0
    %p44 = por %p42, %p43
    %s46 = sadd.s32 %s45, 1
    %p49 = scmp.eq.s32.totalorder %s11, 1
    %p50 = scmp.ne.s32.totalorder %s45, %s47
    %p51 = scmp.eq.s32.totalorder %s11, 0
    %p52 = por %p50, %p51
    %p53 = scmp.ne.s32.totalorder %s45, %s47
    %p54 = scmp.eq.s32.totalorder %s16, 1
    %p55 = por %p53, %p54
    %p56 = scmp.ne.s32.totalorder %s47, %s48
    %p57 = scmp.eq.s32.totalorder %s16, 0
    %p58 = por %p56, %p57
    %p59 = scmp.ne.s32.totalorder %s47, %s48
    %p60 = scmp.eq.s32.totalorder %s17, 1
    %p61 = por %p59, %p60
    %p63 = scmp.ne.s32.totalorder %s48, %s62
    %p64 = scmp.eq.s32.totalorder %s17, 0
    %p65 = por %p63, %p64
    %s67 = sadd.s32 %s66, 1
    %p70 = scmp.eq.s32.totalorder %s11, 1
    %p71 = scmp.ne.s32.totalorder %s66, %s68
    %p72 = scmp.eq.s32.totalorder %s11, 0
    %p73 = por %p71, %p72
    %p74 = scmp.ne.s32.totalorder %s66, %s68
    %p75 = scmp.eq.s32.totalorder %s16, 1
    %p76 = por %p74, %p75
    %p77 = scmp.ne.s32.totalorder %s68, %s69
    %p78 = scmp.eq.s32.totalorder %s16, 0
    %p79 = por %p77, %p78
    %p80 = scmp.ne.s32.totalorder %s68, %s69
    %p81 = scmp.eq.s32.totalorder %s17, 1
    %p82 = por %p80, %p81
    %p84 = scmp.ne.s32.totalorder %s69, %s83
    %p85 = scmp.eq.s32.totalorder %s17, 0
    %p86 = por %p84, %p85
    %s88 = sadd.s32 %s87, 1
    %p91 = scmp.eq.s32.totalorder %s11, 1
    %p92 = scmp.ne.s32.totalorder %s87, %s89
    %p93 = scmp.eq.s32.totalorder %s11, 0
    %p94 = por %p92, %p93
    %p95 = scmp.ne.s32.totalorder %s87, %s89
    %p96 = scmp.eq.s32.totalorder %s16, 1
    %p97 = por %p95, %p96
    %p98 = scmp.ne.s32.totalorder %s89, %s90
    %p99 = scmp.eq.s32.totalorder %s16, 0
    %p100 = por %p98, %p99
    %p101 = scmp.ne.s32.totalorder %s89, %s90
    %p102 = scmp.eq.s32.totalorder %s17, 1
    %p103 = por %p101, %p102
    %p105 = scmp.ne.s32.totalorder %s90, %s104
    %p106 = scmp.eq.s32.totalorder %s17, 0
    %p107 = por %p105, %p106
    %s109 = sadd.s32 %s108, 1
    %p112 = scmp.eq.s32.totalorder %s11, 1
    %p113 = scmp.ne.s32.totalorder %s108, %s110
    %p114 = scmp.eq.s32.totalorder %s11, 0
    %p115 = por %p113, %p114
    %p116 = scmp.ne.s32.totalorder %s108, %s110
    %p117 = scmp.eq.s32.totalorder %s16, 1
    %p118 = por %p116, %p117
    %p119 = scmp.ne.s32.totalorder %s110, %s111
    %p120 = scmp.eq.s32.totalorder %s16, 0
    %p121 = por %p119, %p120
    %p122 = scmp.ne.s32.totalorder %s110, %s111
    %p123 = scmp.eq.s32.totalorder %s17, 1
    %p124 = por %p122, %p123
    %p126 = scmp.ne.s32.totalorder %s111, %s125
    %p127 = scmp.eq.s32.totalorder %s17, 0
    %p128 = por %p126, %p127
    %s129 = ssub.s32 %s11, %s18
    %p130 = scmp.eq.s32.totalorder %s129, 0
    %s132 = sadd.s32 %s131, 1
    %s133 = scalar_select %p130, %s131, %s132
    %p136 = pneg %p130
    %p137 = scmp.eq.s32.totalorder %s11, 1
    %p138 = por %p136, %p137
    %p139 = scmp.ne.s32.totalorder %s131, %s134
    %p140 = scmp.eq.s32.totalorder %s11, 0
    %p141 = por %p139, %p140
    %p142 = scmp.ne.s32.totalorder %s131, %s134
    %p143 = scmp.eq.s32.totalorder %s16, 1
    %p144 = por %p142, %p143
    %p145 = scmp.ne.s32.totalorder %s134, %s135
    %p146 = scmp.eq.s32.totalorder %s16, 0
    %p147 = por %p145, %p146
    %p148 = scmp.ne.s32.totalorder %s134, %s135
    %p149 = scmp.eq.s32.totalorder %s17, 1
    %p150 = por %p148, %p149
    %p152 = scmp.ne.s32.totalorder %s135, %s151
    %p153 = scmp.eq.s32.totalorder %s17, 0
    %p154 = por %p152, %p153
    %p155 = scmp.le.s32.totalorder 1, %s11
    %p156 = scmp.lt.s32.totalorder %s11, 3
    %p157 = pnand %p155, %p156
    %p158 = pneg %p157
    // Predicated region
    $region9: #{tpu_custom_call.1} parent=5 // pred_check
      _
    $region10: #{tpu_custom_call.1} parent=5 // pred_check_branch
      %160 = sbr.rel (%p157) target = $region12
    $region11: #{tpu_custom_call.1} parent=5 // pred_region
      %s161 = ssub.s32 %s11, 1
      // Predicated region
      $region13: #{tpu_custom_call.1} parent=11 // pred_check
        %p162 = pneg %p58
      $region14: #{tpu_custom_call.1} parent=11 // pred_check_branch
        %164 = sbr.rel (%p162) target = $region16
      $region15: #{tpu_custom_call.1} parent=11 // pred_region
        _
      $region16: #{tpu_custom_call.1} parent=11 // pred_fallthru
        _
      // Predicated region
      $region17: #{tpu_custom_call.1} parent=11 // pred_check
        %p165 = pneg %p79
      $region18: #{tpu_custom_call.1} parent=11 // pred_check_branch
        %167 = sbr.rel (%p165) target = $region20
      $region19: #{tpu_custom_call.1} parent=11 // pred_region
        _
      $region20: #{tpu_custom_call.1} parent=11 // pred_fallthru
        _
      // Predicated region
      $region21: #{tpu_custom_call.1} parent=11 // pred_check
        %p168 = pneg %p100
      $region22: #{tpu_custom_call.1} parent=11 // pred_check_branch
        %170 = sbr.rel (%p168) target = $region24
      $region23: #{tpu_custom_call.1} parent=11 // pred_region
        _
      $region24: #{tpu_custom_call.1} parent=11 // pred_fallthru
        _
      // Predicated region
      $region25: #{tpu_custom_call.1} parent=11 // pred_check
        %p171 = pneg %p121
      $region26: #{tpu_custom_call.1} parent=11 // pred_check_branch
        %173 = sbr.rel (%p171) target = $region28
      $region27: #{tpu_custom_call.1} parent=11 // pred_region
        _
      $region28: #{tpu_custom_call.1} parent=11 // pred_fallthru
        _
    $region12: #{tpu_custom_call.1} parent=5 // pred_fallthru
      _
    %p174 = scmp.lt.s32.totalorder %s11, 2
    // Predicated region
    $region29: #{tpu_custom_call.1} parent=5 // pred_check
      %p175 = pneg %p174
    $region30: #{tpu_custom_call.1} parent=5 // pred_check_branch
      %177 = sbr.rel (%p175) target = $region32
    $region31: #{tpu_custom_call.1} parent=5 // pred_region
      // Predicated region
      $region33: #{tpu_custom_call.1} parent=31 // pred_check
        %p178 = pneg %p31
      $region34: #{tpu_custom_call.1} parent=31 // pred_check_branch
        %180 = sbr.rel (%p178) target = $region36
      $region35: #{tpu_custom_call.1} parent=31 // pred_region
        %p181 = scmp.lt.s32.totalorder %s11, 1
        %s182 = scalar_select %p181, %s11, 1
        %s183 = smul.addr %s182, 32
        %s184 = smul.addr %s183, 8
        %s185 = scalar_lea.vmem %s0, %s184
      $region36: #{tpu_custom_call.1} parent=31 // pred_fallthru
        _
    $region32: #{tpu_custom_call.1} parent=5 // pred_fallthru
      _
    %p186 = scmp.le.s32.totalorder 1, %s11
    %p187 = scmp.lt.s32.totalorder %s11, 3
    %p188 = pnand %p186, %p187
    %p189 = pneg %p188
    // Predicated region
    $region37: #{tpu_custom_call.1} parent=5 // pred_check
      _
    $region38: #{tpu_custom_call.1} parent=5 // pred_check_branch
      %191 = sbr.rel (%p188) target = $region40
    $region39: #{tpu_custom_call.1} parent=5 // pred_region
      %s192 = ssub.s32 %s11, 1
      %p193 = scmp.lt.s32.totalorder %s16, 1
      %s194 = scalar_select %p193, %s16, 1
      %s195 = smul.addr %s194, 32
      %s196 = smul.addr %s195, 8
      %s197 = scalar_lea.vmem %s0, %s196
      %p198 = pneg %p37
      %p199 = pneg %p34
      %p200 = pneg %p58
      %p201 = pneg %p55
      %p202 = pneg %p79
      %p203 = pneg %p76
      %p204 = pneg %p100
      %p205 = pneg %p97
      %p206 = pneg %p121
      %p207 = pneg %p118
      %p208 = pneg %p147
      %p209 = pneg %p144
      %p210 = scmp.lt.s32.totalorder %s16, 1
      %s211 = scalar_select %p210, %s16, 1
      %s212 = smul.addr %s211, 32
      %s213 = smul.addr %s212, 8
      %s214 = scalar_lea.vmem %s5, %s213
      %p215 = scmp.lt.s32.totalorder %s16, 1
      %s216 = scalar_select %p215, %s16, 1
      %s217 = smul.addr %s216, 32
      %s218 = smul.addr %s217, 8
      %s219 = scalar_lea.vmem %s0, %s218
      %p220 = scmp.lt.s32.totalorder %s16, 1
      %s221 = scalar_select %p220, %s16, 1
      %s222 = smul.addr %s221, 32
      %s223 = smul.addr %s222, 8
      %s224 = scalar_lea.vmem %s5, %s223
      %v225 = vld [vmem:[%s219] sm:$0xff]
      %v226 = vld [vmem:[%s219 + $0x8] sm:$0xff]
      %v227 = vld [vmem:[%s219 + $0x10] sm:$0xff]
      %v228 = vld [vmem:[%s219 + $0x18] sm:$0xff]
      %v229 = vld [vmem:[%s219 + $0x20] sm:$0xff]
      %v230 = vld [vmem:[%s219 + $0x28] sm:$0xff]
      %v231 = vld [vmem:[%s219 + $0x30] sm:$0xff]
      %v232 = vld [vmem:[%s219 + $0x38] sm:$0xff]
      %v233 = vld [vmem:[%s219 + $0x40] sm:$0xff]
      %v234 = vld [vmem:[%s219 + $0x48] sm:$0xff]
      %v235 = vld [vmem:[%s219 + $0x50] sm:$0xff]
      %v236 = vld [vmem:[%s219 + $0x58] sm:$0xff]
      %v237 = vld [vmem:[%s219 + $0x60] sm:$0xff]
      %v238 = vld [vmem:[%s219 + $0x68] sm:$0xff]
      %v239 = vld [vmem:[%s219 + $0x70] sm:$0xff]
      %v240 = vld [vmem:[%s219 + $0x78] sm:$0xff]
      %v241 = vld [vmem:[%s219 + $0x80] sm:$0xff]
      %v242 = vld [vmem:[%s219 + $0x88] sm:$0xff]
      %v243 = vld [vmem:[%s219 + $0x90] sm:$0xff]
      %v244 = vld [vmem:[%s219 + $0x98] sm:$0xff]
      %v245 = vld [vmem:[%s219 + $0xa0] sm:$0xff]
      %v246 = vld [vmem:[%s219 + $0xa8] sm:$0xff]
      %v247 = vld [vmem:[%s219 + $0xb0] sm:$0xff]
      %v248 = vld [vmem:[%s219 + $0xb8] sm:$0xff]
      %v249 = vld [vmem:[%s219 + $0xc0] sm:$0xff]
      %v250 = vld [vmem:[%s219 + $0xc8] sm:$0xff]
      %v251 = vld [vmem:[%s219 + $0xd0] sm:$0xff]
      %v252 = vld [vmem:[%s219 + $0xd8] sm:$0xff]
      %v253 = vld [vmem:[%s219 + $0xe0] sm:$0xff]
      %v254 = vld [vmem:[%s219 + $0xe8] sm:$0xff]
      %v255 = vld [vmem:[%s219 + $0xf0] sm:$0xff]
      %v256 = vld [vmem:[%s219 + $0xf8] sm:$0xff]
      %p257 = scmp.eq.s32.totalorder %s16, 0
      // Predicated region
      $region41: #{tpu_custom_call.1} parent=39 // pred_check
        %p258 = pneg %p257
      $region42: #{tpu_custom_call.1} parent=39 // pred_check_branch
        %260 = sbr.rel (%p258) target = $region44
      $region43: #{tpu_custom_call.1} parent=39 // pred_region
        %vm261 = vcmask 15360
        %262 = vst.msk [vmem:[#allocation2] sm:$0xff] %vm261, 0.0
        %263 = vst.msk [vmem:[#allocation2 + $0x8] sm:$0xff] %vm261, 0.0
        %s264 = scalar_lea.vmem [#allocation2], 272
        %265 = vst.msk [vmem:[%s264] sm:$0xff] %vm261, 0.0
        %266 = vst.msk [vmem:[%s264 + $0x8] sm:$0xff] %vm261, 0.0
      $region44: #{tpu_custom_call.1} parent=39 // pred_fallthru
        _
      %v267 = vld [vmem:[%s1] sm:$0xf]
      %v268 = vld [vmem:[%s2] sm:$0x1]
      %v270 = vlaneseq
      %v271 = vshrl.u32 %v270, 7
      %v272 = vsub.s32 0, %v271
      %v273 = vrot.slane %v268, %v272
      %vm275 = vcmask 31744
      %v277 = vsel %vm275, %v225, 0
      %v280 = vsel %vm275, %v226, 0
      %v283 = vsel %vm275, %v227, 0
      %v286 = vsel %vm275, %v228, 0
      %v289 = vsel %vm275, %v229, 0
      %v292 = vsel %vm275, %v230, 0
      %v295 = vsel %vm275, %v231, 0
      %v298 = vsel %vm275, %v232, 0
      %v301 = vsel %vm275, %v233, 0
      %v304 = vsel %vm275, %v234, 0
      %v307 = vsel %vm275, %v235, 0
      %v310 = vsel %vm275, %v236, 0
      %v313 = vsel %vm275, %v237, 0
      %v316 = vsel %vm275, %v238, 0
      %v319 = vsel %vm275, %v239, 0
      %v322 = vsel %vm275, %v240, 0
      %v325 = vsel %vm275, %v241, 0
      %v328 = vsel %vm275, %v242, 0
      %v331 = vsel %vm275, %v243, 0
      %v334 = vsel %vm275, %v244, 0
      %v337 = vsel %vm275, %v245, 0
      %v340 = vsel %vm275, %v246, 0
      %v343 = vsel %vm275, %v247, 0
      %v346 = vsel %vm275, %v248, 0
      %v349 = vsel %vm275, %v249, 0
      %v352 = vsel %vm275, %v250, 0
      %v355 = vsel %vm275, %v251, 0
      %v358 = vsel %vm275, %v252, 0
      %v361 = vsel %vm275, %v253, 0
      %v364 = vsel %vm275, %v254, 0
      %v367 = vsel %vm275, %v255, 0
      %v370 = vsel %vm275, %v256, 0
      %vm372 = vcmask 1043456
      %v374 = vsel %vm372, %v267, 0
      %376 = vmatprep.subr.mxu0 0.0
      %377 = vmatpush1.msra.mxu0 %v374
      %378 = vmatprep.subr.mxu0 0.0
      %379 = vmatpush1.msra.mxu0 0.0
      %380 = vmatprep.subr.mxu0 0.0
      %381 = vmatpush1.msra.mxu0 0.0
      %382 = vmatprep.subr.mxu0 0.0
      %383 = vmatpush1.msra.mxu0 0.0
      %384 = vmatprep.subr.mxu0 0.0
      %385 = vmatpush1.msra.mxu0 0.0
      %386 = vmatprep.subr.mxu0 0.0
      %387 = vmatpush1.msra.mxu0 0.0
      %388 = vmatprep.subr.mxu0 0.0
      %389 = vmatpush1.msra.mxu0 0.0
      %390 = vmatprep.subr.mxu0 0.0
      %391 = vmatpush1.msra.mxu0 0.0
      %392 = vmatprep.subr.mxu0 0.0
      %393 = vmatpush1.msra.mxu0 0.0
      %394 = vmatprep.subr.mxu0 0.0
      %395 = vmatpush1.msra.mxu0 0.0
      %396 = vmatprep.subr.mxu0 0.0
      %397 = vmatpush1.msra.mxu0 0.0
      %398 = vmatprep.subr.mxu0 0.0
      %399 = vmatpush1.msra.mxu0 0.0
      %400 = vmatprep.subr.mxu0 0.0
      %401 = vmatpush1.msra.mxu0 0.0
      %402 = vmatprep.subr.mxu0 0.0
      %403 = vmatpush1.msra.mxu0 0.0
      %404 = vmatprep.subr.mxu0 0.0
      %405 = vmatpush1.msra.mxu0 0.0
      %406 = vmatprep.subr.mxu0 0.0
      %407 = vmatpush1.msra.mxu0 0.0
      %408 = vmatprep.subr.mxu0 0.0
      %409 = vmatpush1.msra.mxu0 0.0
      %410 = vmatprep.subr.mxu0 0.0
      %411 = vmatpush1.msra.mxu0 0.0
      %412 = vmatprep.subr.mxu0 0.0
      %413 = vmatpush1.msra.mxu0 0.0
      %414 = vmatprep.subr.mxu0 0.0
      %415 = vmatpush1.msra.mxu0 0.0
      %416 = vmatprep.subr.mxu0 0.0
      %417 = vmatpush1.msra.mxu0 0.0
      %418 = vmatprep.subr.mxu0 0.0
      %419 = vmatpush1.msra.mxu0 0.0
      %420 = vmatprep.subr.mxu0 0.0
      %421 = vmatpush1.msra.mxu0 0.0
      %422 = vmatprep.subr.mxu0 0.0
      %423 = vmatpush1.msra.mxu0 0.0
      %424 = vmatprep.subr.mxu0 0.0
      %425 = vmatpush1.msra.mxu0 0.0
      %426 = vmatprep.subr.mxu0 0.0
      %427 = vmatpush1.msra.mxu0 0.0
      %428 = vmatprep.subr.mxu0 0.0
      %429 = vmatpush1.msra.mxu0 0.0
      %430 = vmatprep.subr.mxu0 0.0
      %431 = vmatpush1.msra.mxu0 0.0
      %432 = vmatprep.subr.mxu0 0.0
      %433 = vmatpush1.msra.mxu0 0.0
      %434 = vmatprep.subr.mxu0 0.0
      %435 = vmatpush1.msra.mxu0 0.0
      %436 = vmatprep.subr.mxu0 0.0
      %437 = vmatpush1.msra.mxu0 0.0
      %438 = vmatprep.subr.mxu0 0.0
      %439 = vmatpush1.msra.mxu0 0.0
      %440 = vmatprep.mubr.f32.mxu0 0.0
      %441 = vmatmul.mubr.f32.gmra.mrb[0].mxu0 %v277
      %v442 = vpop.f32.mrb[0].mxu0
      %v443 = vadd.f32 %v273, %v442
      %v444 = vpop.f32.mrb[0].mxu0
      %445 = vmatprep.mubr.f32.mxu0 0.0
      %446 = vmatmul.mubr.f32.gmra.mrb[0].mxu0 %v280
      %v447 = vpop.f32.mrb[0].mxu0
      %v448 = vadd.f32 %v273, %v447
      %v449 = vpop.f32.mrb[0].mxu0
      %450 = vmatprep.mubr.f32.mxu0 0.0
      %451 = vmatmul.mubr.f32.gmra.mrb[0].mxu0 %v283
      %v452 = vpop.f32.mrb[0].mxu0
      %v453 = vadd.f32 %v273, %v452
      %v454 = vpop.f32.mrb[0].mxu0
      %455 = vmatprep.mubr.f32.mxu0 0.0
      %456 = vmatmul.mubr.f32.gmra.mrb[0].mxu0 %v286
      %v457 = vpop.f32.mrb[0].mxu0
      %v458 = vadd.f32 %v273, %v457
      %v459 = vpop.f32.mrb[0].mxu0
      %460 = vmatprep.mubr.f32.mxu0 0.0
      %461 = vmatmul.mubr.f32.gmra.mrb[0].mxu0 %v289
      %v462 = vpop.f32.mrb[0].mxu0
      %v463 = vadd.f32 %v273, %v462
      %v464 = vpop.f32.mrb[0].mxu0
      %465 = vmatprep.mubr.f32.mxu0 0.0
      %466 = vmatmul.mubr.f32.gmra.mrb[0].mxu0 %v292
      %v467 = vpop.f32.mrb[0].mxu0
      %v468 = vadd.f32 %v273, %v467
      %v469 = vpop.f32.mrb[0].mxu0
      %470 = vmatprep.mubr.f32.mxu0 0.0
      %471 = vmatmul.mubr.f32.gmra.mrb[0].mxu0 %v295
      %v472 = vpop.f32.mrb[0].mxu0
      %v473 = vadd.f32 %v273, %v472
      %v474 = vpop.f32.mrb[0].mxu0
      %475 = vmatprep.mubr.f32.mxu0 0.0
      %476 = vmatmul.mubr.f32.gmra.mrb[0].mxu0 %v298
      %v477 = vpop.f32.mrb[0].mxu0
      %v478 = vadd.f32 %v273, %v477
      %v479 = vpop.f32.mrb[0].mxu0
      %480 = vmatprep.mubr.f32.mxu0 0.0
      %481 = vmatmul.mubr.f32.gmra.mrb[0].mxu0 %v301
      %v482 = vpop.f32.mrb[0].mxu0
      %v483 = vadd.f32 %v273, %v482
      %v484 = vpop.f32.mrb[0].mxu0
      %485 = vmatprep.mubr.f32.mxu0 0.0
      %486 = vmatmul.mubr.f32.gmra.mrb[0].mxu0 %v304
      %v487 = vpop.f32.mrb[0].mxu0
      %v488 = vadd.f32 %v273, %v487
      %v489 = vpop.f32.mrb[0].mxu0
      %490 = vmatprep.mubr.f32.mxu0 0.0
      %491 = vmatmul.mubr.f32.gmra.mrb[0].mxu0 %v307
      %v492 = vpop.f32.mrb[0].mxu0
      %v493 = vadd.f32 %v273, %v492
      %v494 = vpop.f32.mrb[0].mxu0
      %495 = vmatprep.mubr.f32.mxu0 0.0
      %496 = vmatmul.mubr.f32.gmra.mrb[0].mxu0 %v310
      %v497 = vpop.f32.mrb[0].mxu0
      %v498 = vadd.f32 %v273, %v497
      %v499 = vpop.f32.mrb[0].mxu0
      %500 = vmatprep.mubr.f32.mxu0 0.0
      %501 = vmatmul.mubr.f32.gmra.mrb[0].mxu0 %v313
      %v502 = vpop.f32.mrb[0].mxu0
      %v503 = vadd.f32 %v273, %v502
      %v504 = vpop.f32.mrb[0].mxu0
      %505 = vmatprep.mubr.f32.mxu0 0.0
      %506 = vmatmul.mubr.f32.gmra.mrb[0].mxu0 %v316
      %v507 = vpop.f32.mrb[0].mxu0
      %v508 = vadd.f32 %v273, %v507
      %v509 = vpop.f32.mrb[0].mxu0
      %510 = vmatprep.mubr.f32.mxu0 0.0
      %511 = vmatmul.mubr.f32.gmra.mrb[0].mxu0 %v319
      %v512 = vpop.f32.mrb[0].mxu0
      %v513 = vadd.f32 %v273, %v512
      %v514 = vpop.f32.mrb[0].mxu0
      %515 = vmatprep.mubr.f32.mxu0 0.0
      %516 = vmatmul.mubr.f32.gmra.mrb[0].mxu0 %v322
      %v517 = vpop.f32.mrb[0].mxu0
      %v518 = vadd.f32 %v273, %v517
      %v519 = vpop.f32.mrb[0].mxu0
      %520 = vmatprep.mubr.f32.mxu0 0.0
      %521 = vmatmul.mubr.f32.gmra.mrb[0].mxu0 %v325
      %v522 = vpop.f32.mrb[0].mxu0
      %v523 = vadd.f32 %v273, %v522
      %v524 = vpop.f32.mrb[0].mxu0
      %525 = vmatprep.mubr.f32.mxu0 0.0
      %526 = vmatmul.mubr.f32.gmra.mrb[0].mxu0 %v328
      %v527 = vpop.f32.mrb[0].mxu0
      %v528 = vadd.f32 %v273, %v527
      %v529 = vpop.f32.mrb[0].mxu0
      %530 = vmatprep.mubr.f32.mxu0 0.0
      %531 = vmatmul.mubr.f32.gmra.mrb[0].mxu0 %v331
      %v532 = vpop.f32.mrb[0].mxu0
      %v533 = vadd.f32 %v273, %v532
      %v534 = vpop.f32.mrb[0].mxu0
      %535 = vmatprep.mubr.f32.mxu0 0.0
      %536 = vmatmul.mubr.f32.gmra.mrb[0].mxu0 %v334
      %v537 = vpop.f32.mrb[0].mxu0
      %v538 = vadd.f32 %v273, %v537
      %v539 = vpop.f32.mrb[0].mxu0
      %540 = vmatprep.mubr.f32.mxu0 0.0
      %541 = vmatmul.mubr.f32.gmra.mrb[0].mxu0 %v337
      %v542 = vpop.f32.mrb[0].mxu0
      %v543 = vadd.f32 %v273, %v542
      %v544 = vpop.f32.mrb[0].mxu0
      %545 = vmatprep.mubr.f32.mxu0 0.0
      %546 = vmatmul.mubr.f32.gmra.mrb[0].mxu0 %v340
      %v547 = vpop.f32.mrb[0].mxu0
      %v548 = vadd.f32 %v273, %v547
      %v549 = vpop.f32.mrb[0].mxu0
      %550 = vmatprep.mubr.f32.mxu0 0.0
      %551 = vmatmul.mubr.f32.gmra.mrb[0].mxu0 %v343
      %v552 = vpop.f32.mrb[0].mxu0
      %v553 = vadd.f32 %v273, %v552
      %v554 = vpop.f32.mrb[0].mxu0
      %555 = vmatprep.mubr.f32.mxu0 0.0
      %556 = vmatmul.mubr.f32.gmra.mrb[0].mxu0 %v346
      %v557 = vpop.f32.mrb[0].mxu0
      %v558 = vadd.f32 %v273, %v557
      %v559 = vpop.f32.mrb[0].mxu0
      %560 = vmatprep.mubr.f32.mxu0 0.0
      %561 = vmatmul.mubr.f32.gmra.mrb[0].mxu0 %v349
      %v562 = vpop.f32.mrb[0].mxu0
      %v563 = vadd.f32 %v273, %v562
      %v564 = vpop.f32.mrb[0].mxu0
      %565 = vmatprep.mubr.f32.mxu0 0.0
      %566 = vmatmul.mubr.f32.gmra.mrb[0].mxu0 %v352
      %v567 = vpop.f32.mrb[0].mxu0
      %v568 = vadd.f32 %v273, %v567
      %v569 = vpop.f32.mrb[0].mxu0
      %570 = vmatprep.mubr.f32.mxu0 0.0
      %571 = vmatmul.mubr.f32.gmra.mrb[0].mxu0 %v355
      %v572 = vpop.f32.mrb[0].mxu0
      %v573 = vadd.f32 %v273, %v572
      %v574 = vpop.f32.mrb[0].mxu0
      %575 = vmatprep.mubr.f32.mxu0 0.0
      %576 = vmatmul.mubr.f32.gmra.mrb[0].mxu0 %v358
      %v577 = vpop.f32.mrb[0].mxu0
      %v578 = vadd.f32 %v273, %v577
      %v579 = vpop.f32.mrb[0].mxu0
      %580 = vmatprep.mubr.f32.mxu0 0.0
      %581 = vmatmul.mubr.f32.gmra.mrb[0].mxu0 %v361
      %v582 = vpop.f32.mrb[0].mxu0
      %v583 = vadd.f32 %v273, %v582
      %v584 = vpop.f32.mrb[0].mxu0
      %585 = vmatprep.mubr.f32.mxu0 0.0
      %586 = vmatmul.mubr.f32.gmra.mrb[0].mxu0 %v364
      %v587 = vpop.f32.mrb[0].mxu0
      %v588 = vadd.f32 %v273, %v587
      %v589 = vpop.f32.mrb[0].mxu0
      %590 = vmatprep.mubr.f32.mxu0 0.0
      %591 = vmatmul.mubr.f32.gmra.mrb[0].mxu0 %v367
      %v592 = vpop.f32.mrb[0].mxu0
      %v593 = vadd.f32 %v273, %v592
      %v594 = vpop.f32.mrb[0].mxu0
      %595 = vmatprep.mubr.f32.mxu0 0.0
      %596 = vmatmul.mubr.f32.gmra.mrb[0].mxu0 %v370
      %v597 = vpop.f32.mrb[0].mxu0
      %v598 = vadd.f32 %v273, %v597
      %v599 = vpop.f32.mrb[0].mxu0
      %600 = vdwg.mxu0
      %v601 = vxor.u32 %v443, 2147483648
      %v602 = vxor.u32 %v448, 2147483648
      %v603 = vxor.u32 %v453, 2147483648
      %v604 = vxor.u32 %v458, 2147483648
      %v605 = vxor.u32 %v463, 2147483648
      %v606 = vxor.u32 %v468, 2147483648
      %v607 = vxor.u32 %v473, 2147483648
      %v608 = vxor.u32 %v478, 2147483648
      %v609 = vxor.u32 %v483, 2147483648
      %v610 = vxor.u32 %v488, 2147483648
      %v611 = vxor.u32 %v493, 2147483648
      %v612 = vxor.u32 %v498, 2147483648
      %v613 = vxor.u32 %v503, 2147483648
      %v614 = vxor.u32 %v508, 2147483648
      %v615 = vxor.u32 %v513, 2147483648
      %v616 = vxor.u32 %v518, 2147483648
      %v617 = vxor.u32 %v523, 2147483648
      %v618 = vxor.u32 %v528, 2147483648
      %v619 = vxor.u32 %v533, 2147483648
      %v620 = vxor.u32 %v538, 2147483648
      %v621 = vxor.u32 %v543, 2147483648
      %v622 = vxor.u32 %v548, 2147483648
      %v623 = vxor.u32 %v553, 2147483648
      %v624 = vxor.u32 %v558, 2147483648
      %v625 = vxor.u32 %v563, 2147483648
      %v626 = vxor.u32 %v568, 2147483648
      %v627 = vxor.u32 %v573, 2147483648
      %v628 = vxor.u32 %v578, 2147483648
      %v629 = vxor.u32 %v583, 2147483648
      %v630 = vxor.u32 %v588, 2147483648
      %v631 = vxor.u32 %v593, 2147483648
      %v632 = vxor.u32 %v598, 2147483648
      %v633 = vmul.f32 %v601, 1.442695
      %v634 = vpow.pop %v633
      %v635 = vmul.f32 %v602, 1.442695
      %v636 = vpow.pop %v635
      %v637 = vmul.f32 %v603, 1.442695
      %v638 = vpow.pop %v637
      %v639 = vmul.f32 %v604, 1.442695
      %v640 = vpow.pop %v639
      %v641 = vmul.f32 %v605, 1.442695
      %v642 = vpow.pop %v641
      %v643 = vmul.f32 %v606, 1.442695
      %v644 = vpow.pop %v643
      %v645 = vmul.f32 %v607, 1.442695
      %v646 = vpow.pop %v645
      %v647 = vmul.f32 %v608, 1.442695
      %v648 = vpow.pop %v647
      %v649 = vmul.f32 %v609, 1.442695
      %v650 = vpow.pop %v649
      %v651 = vmul.f32 %v610, 1.442695
      %v652 = vpow.pop %v651
      %v653 = vmul.f32 %v611, 1.442695
      %v654 = vpow.pop %v653
      %v655 = vmul.f32 %v612, 1.442695
      %v656 = vpow.pop %v655
      %v657 = vmul.f32 %v613, 1.442695
      %v658 = vpow.pop %v657
      %v659 = vmul.f32 %v614, 1.442695
      %v660 = vpow.pop %v659
      %v661 = vmul.f32 %v615, 1.442695
      %v662 = vpow.pop %v661
      %v663 = vmul.f32 %v616, 1.442695
      %v664 = vpow.pop %v663
      %v665 = vmul.f32 %v617, 1.442695
      %v666 = vpow.pop %v665
      %v667 = vmul.f32 %v618, 1.442695
      %v668 = vpow.pop %v667
      %v669 = vmul.f32 %v619, 1.442695
      %v670 = vpow.pop %v669
      %v671 = vmul.f32 %v620, 1.442695
      %v672 = vpow.pop %v671
      %v673 = vmul.f32 %v621, 1.442695
      %v674 = vpow.pop %v673
      %v675 = vmul.f32 %v622, 1.442695
      %v676 = vpow.pop %v675
      %v677 = vmul.f32 %v623, 1.442695
      %v678 = vpow.pop %v677
      %v679 = vmul.f32 %v624, 1.442695
      %v680 = vpow.pop %v679
      %v681 = vmul.f32 %v625, 1.442695
      %v682 = vpow.pop %v681
      %v683 = vmul.f32 %v626, 1.442695
      %v684 = vpow.pop %v683
      %v685 = vmul.f32 %v627, 1.442695
      %v686 = vpow.pop %v685
      %v687 = vmul.f32 %v628, 1.442695
      %v688 = vpow.pop %v687
      %v689 = vmul.f32 %v629, 1.442695
      %v690 = vpow.pop %v689
      %v691 = vmul.f32 %v630, 1.442695
      %v692 = vpow.pop %v691
      %v693 = vmul.f32 %v631, 1.442695
      %v694 = vpow.pop %v693
      %v695 = vmul.f32 %v632, 1.442695
      %v696 = vpow.pop %v695
      %v697 = vadd.f32 %v634, 1.0
      %v698 = vadd.f32 %v636, 1.0
      %v699 = vadd.f32 %v638, 1.0
      %v700 = vadd.f32 %v640, 1.0
      %v701 = vadd.f32 %v642, 1.0
      %v702 = vadd.f32 %v644, 1.0
      %v703 = vadd.f32 %v646, 1.0
      %v704 = vadd.f32 %v648, 1.0
      %v705 = vadd.f32 %v650, 1.0
      %v706 = vadd.f32 %v652, 1.0
      %v707 = vadd.f32 %v654, 1.0
      %v708 = vadd.f32 %v656, 1.0
      %v709 = vadd.f32 %v658, 1.0
      %v710 = vadd.f32 %v660, 1.0
      %v711 = vadd.f32 %v662, 1.0
      %v712 = vadd.f32 %v664, 1.0
      %v713 = vadd.f32 %v666, 1.0
      %v714 = vadd.f32 %v668, 1.0
      %v715 = vadd.f32 %v670, 1.0
      %v716 = vadd.f32 %v672, 1.0
      %v717 = vadd.f32 %v674, 1.0
      %v718 = vadd.f32 %v676, 1.0
      %v719 = vadd.f32 %v678, 1.0
      %v720 = vadd.f32 %v680, 1.0
      %v721 = vadd.f32 %v682, 1.0
      %v722 = vadd.f32 %v684, 1.0
      %v723 = vadd.f32 %v686, 1.0
      %v724 = vadd.f32 %v688, 1.0
      %v725 = vadd.f32 %v690, 1.0
      %v726 = vadd.f32 %v692, 1.0
      %v727 = vadd.f32 %v694, 1.0
      %v728 = vadd.f32 %v696, 1.0
      %v729 = vrcp.pop %v697
      %v730 = vmul.f32 1.0, %v729
      %v731 = vrcp.pop %v698
      %v732 = vmul.f32 1.0, %v731
      %v733 = vrcp.pop %v699
      %v734 = vmul.f32 1.0, %v733
      %v735 = vrcp.pop %v700
      %v736 = vmul.f32 1.0, %v735
      %v737 = vrcp.pop %v701
      %v738 = vmul.f32 1.0, %v737
      %v739 = vrcp.pop %v702
      %v740 = vmul.f32 1.0, %v739
      %v741 = vrcp.pop %v703
      %v742 = vmul.f32 1.0, %v741
      %v743 = vrcp.pop %v704
      %v744 = vmul.f32 1.0, %v743
      %v745 = vrcp.pop %v705
      %v746 = vmul.f32 1.0, %v745
      %v747 = vrcp.pop %v706
      %v748 = vmul.f32 1.0, %v747
      %v749 = vrcp.pop %v707
      %v750 = vmul.f32 1.0, %v749
      %v751 = vrcp.pop %v708
      %v752 = vmul.f32 1.0, %v751
      %v753 = vrcp.pop %v709
      %v754 = vmul.f32 1.0, %v753
      %v755 = vrcp.pop %v710
      %v756 = vmul.f32 1.0, %v755
      %v757 = vrcp.pop %v711
      %v758 = vmul.f32 1.0, %v757
      %v759 = vrcp.pop %v712
      %v760 = vmul.f32 1.0, %v759
      %v761 = vrcp.pop %v713
      %v762 = vmul.f32 1.0, %v761
      %v763 = vrcp.pop %v714
      %v764 = vmul.f32 1.0, %v763
      %v765 = vrcp.pop %v715
      %v766 = vmul.f32 1.0, %v765
      %v767 = vrcp.pop %v716
      %v768 = vmul.f32 1.0, %v767
      %v769 = vrcp.pop %v717
      %v770 = vmul.f32 1.0, %v769
      %v771 = vrcp.pop %v718
      %v772 = vmul.f32 1.0, %v771
      %v773 = vrcp.pop %v719
      %v774 = vmul.f32 1.0, %v773
      %v775 = vrcp.pop %v720
      %v776 = vmul.f32 1.0, %v775
      %v777 = vrcp.pop %v721
      %v778 = vmul.f32 1.0, %v777
      %v779 = vrcp.pop %v722
      %v780 = vmul.f32 1.0, %v779
      %v781 = vrcp.pop %v723
      %v782 = vmul.f32 1.0, %v781
      %v783 = vrcp.pop %v724
      %v784 = vmul.f32 1.0, %v783
      %v785 = vrcp.pop %v725
      %v786 = vmul.f32 1.0, %v785
      %v787 = vrcp.pop %v726
      %v788 = vmul.f32 1.0, %v787
      %v789 = vrcp.pop %v727
      %v790 = vmul.f32 1.0, %v789
      %v791 = vrcp.pop %v728
      %v792 = vmul.f32 1.0, %v791
      %v793 = vmul.f32 %v443, %v730
      %v794 = vmul.f32 %v448, %v732
      %v795 = vmul.f32 %v453, %v734
      %v796 = vmul.f32 %v458, %v736
      %v797 = vmul.f32 %v463, %v738
      %v798 = vmul.f32 %v468, %v740
      %v799 = vmul.f32 %v473, %v742
      %v800 = vmul.f32 %v478, %v744
      %v801 = vmul.f32 %v483, %v746
      %v802 = vmul.f32 %v488, %v748
      %v803 = vmul.f32 %v493, %v750
      %v804 = vmul.f32 %v498, %v752
      %v805 = vmul.f32 %v503, %v754
      %v806 = vmul.f32 %v508, %v756
      %v807 = vmul.f32 %v513, %v758
      %v808 = vmul.f32 %v518, %v760
      %v809 = vmul.f32 %v523, %v762
      %v810 = vmul.f32 %v528, %v764
      %v811 = vmul.f32 %v533, %v766
      %v812 = vmul.f32 %v538, %v768
      %v813 = vmul.f32 %v543, %v770
      %v814 = vmul.f32 %v548, %v772
      %v815 = vmul.f32 %v553, %v774
      %v816 = vmul.f32 %v558, %v776
      %v817 = vmul.f32 %v563, %v778
      %v818 = vmul.f32 %v568, %v780
      %v819 = vmul.f32 %v573, %v782
      %v820 = vmul.f32 %v578, %v784
      %v821 = vmul.f32 %v583, %v786
      %v822 = vmul.f32 %v588, %v788
      %v823 = vmul.f32 %v593, %v790
      %v824 = vmul.f32 %v598, %v792
      %s825 = scalar_lea.vmem [#allocation2], 16
      %vm826 = vcmask 15360
      %827 = vst.msk [vmem:[%s825] sm:$0xff] %vm826, %v793
      %828 = vst.msk [vmem:[%s825 + $0x8] sm:$0xff] %vm826, %v794
      %829 = vst.msk [vmem:[%s825 + $0x10] sm:$0xff] %vm826, %v795
      %830 = vst.msk [vmem:[%s825 + $0x18] sm:$0xff] %vm826, %v796
      %831 = vst.msk [vmem:[%s825 + $0x20] sm:$0xff] %vm826, %v797
      %832 = vst.msk [vmem:[%s825 + $0x28] sm:$0xff] %vm826, %v798
      %833 = vst.msk [vmem:[%s825 + $0x30] sm:$0xff] %vm826, %v799
      %834 = vst.msk [vmem:[%s825 + $0x38] sm:$0xff] %vm826, %v800
      %835 = vst.msk [vmem:[%s825 + $0x40] sm:$0xff] %vm826, %v801
      %836 = vst.msk [vmem:[%s825 + $0x48] sm:$0xff] %vm826, %v802
      %837 = vst.msk [vmem:[%s825 + $0x50] sm:$0xff] %vm826, %v803
      %838 = vst.msk [vmem:[%s825 + $0x58] sm:$0xff] %vm826, %v804
      %839 = vst.msk [vmem:[%s825 + $0x60] sm:$0xff] %vm826, %v805
      %840 = vst.msk [vmem:[%s825 + $0x68] sm:$0xff] %vm826, %v806
      %841 = vst.msk [vmem:[%s825 + $0x70] sm:$0xff] %vm826, %v807
      %842 = vst.msk [vmem:[%s825 + $0x78] sm:$0xff] %vm826, %v808
      %843 = vst.msk [vmem:[%s825 + $0x80] sm:$0xff] %vm826, %v809
      %844 = vst.msk [vmem:[%s825 + $0x88] sm:$0xff] %vm826, %v810
      %845 = vst.msk [vmem:[%s825 + $0x90] sm:$0xff] %vm826, %v811
      %846 = vst.msk [vmem:[%s825 + $0x98] sm:$0xff] %vm826, %v812
      %847 = vst.msk [vmem:[%s825 + $0xa0] sm:$0xff] %vm826, %v813
      %848 = vst.msk [vmem:[%s825 + $0xa8] sm:$0xff] %vm826, %v814
      %849 = vst.msk [vmem:[%s825 + $0xb0] sm:$0xff] %vm826, %v815
      %850 = vst.msk [vmem:[%s825 + $0xb8] sm:$0xff] %vm826, %v816
      %851 = vst.msk [vmem:[%s825 + $0xc0] sm:$0xff] %vm826, %v817
      %852 = vst.msk [vmem:[%s825 + $0xc8] sm:$0xff] %vm826, %v818
      %853 = vst.msk [vmem:[%s825 + $0xd0] sm:$0xff] %vm826, %v819
      %854 = vst.msk [vmem:[%s825 + $0xd8] sm:$0xff] %vm826, %v820
      %855 = vst.msk [vmem:[%s825 + $0xe0] sm:$0xff] %vm826, %v821
      %856 = vst.msk [vmem:[%s825 + $0xe8] sm:$0xff] %vm826, %v822
      %857 = vst.msk [vmem:[%s825 + $0xf0] sm:$0xff] %vm826, %v823
      %858 = vst.msk [vmem:[%s825 + $0xf8] sm:$0xff] %vm826, %v824
      %v859 = vlaneseq
      %v860 = vshrl.u32 %v859, 7
      %v861 = vadd.s32 %v860, 8
      %vm862 = vcmp.eq.s32.totalorder %v860, 0
      %vm863 = vcmp.eq.s32.totalorder %v861, 0
      %vm864 = vcmp.eq.s32.totalorder %v860, 15
      %vm865 = vcmp.eq.s32.totalorder %v861, 15
      %v866 = vld [vmem:[#allocation2] sm:$0xff]
      %v867 = vld [vmem:[#allocation2 + $0x8] sm:$0xff]
      %v868 = vld [vmem:[#allocation2 + $0x10] sm:$0xff]
      %v869 = vld [vmem:[#allocation2 + $0x18] sm:$0xff]
      %v870 = vld [vmem:[#allocation2 + $0x20] sm:$0xff]
      %v871 = vld [vmem:[#allocation2 + $0x28] sm:$0xff]
      %v872 = vld [vmem:[#allocation2 + $0x30] sm:$0xff]
      %v873 = vld [vmem:[#allocation2 + $0x38] sm:$0xff]
      %v874 = vld [vmem:[#allocation2 + $0x40] sm:$0xff]
      %v875 = vld [vmem:[#allocation2 + $0x48] sm:$0xff]
      %v876 = vld [vmem:[#allocation2 + $0x50] sm:$0xff]
      %v877 = vld [vmem:[#allocation2 + $0x58] sm:$0xff]
      %v878 = vld [vmem:[#allocation2 + $0x60] sm:$0xff]
      %v879 = vld [vmem:[#allocation2 + $0x68] sm:$0xff]
      %v880 = vld [vmem:[#allocation2 + $0x70] sm:$0xff]
      %v881 = vld [vmem:[#allocation2 + $0x78] sm:$0xff]
      %v882 = vld [vmem:[#allocation2 + $0x80] sm:$0xff]
      %v883 = vld [vmem:[#allocation2 + $0x88] sm:$0xff]
      %v884 = vld [vmem:[#allocation2 + $0x90] sm:$0xff]
      %v885 = vld [vmem:[#allocation2 + $0x98] sm:$0xff]
      %v886 = vld [vmem:[#allocation2 + $0xa0] sm:$0xff]
      %v887 = vld [vmem:[#allocation2 + $0xa8] sm:$0xff]
      %v888 = vld [vmem:[#allocation2 + $0xb0] sm:$0xff]
      %v889 = vld [vmem:[#allocation2 + $0xb8] sm:$0xff]
      %v890 = vld [vmem:[#allocation2 + $0xc0] sm:$0xff]
      %v891 = vld [vmem:[#allocation2 + $0xc8] sm:$0xff]
      %v892 = vld [vmem:[#allocation2 + $0xd0] sm:$0xff]
      %v893 = vld [vmem:[#allocation2 + $0xd8] sm:$0xff]
      %v894 = vld [vmem:[#allocation2 + $0xe0] sm:$0xff]
      %v895 = vld [vmem:[#allocation2 + $0xe8] sm:$0xff]
      %v896 = vld [vmem:[#allocation2 + $0xf0] sm:$0xff]
      %v897 = vld [vmem:[#allocation2 + $0xf8] sm:$0xff]
      %v898 = vrot.slane %v866, 7
      %v899 = vrot.slane %v868, 7
      %v900 = vrot.slane %v870, 7
      %v901 = vrot.slane %v872, 7
      %v902 = vrot.slane %v874, 7
      %v903 = vrot.slane %v876, 7
      %v904 = vrot.slane %v878, 7
      %v905 = vrot.slane %v880, 7
      %v906 = vrot.slane %v882, 7
      %v907 = vrot.slane %v884, 7
      %v908 = vrot.slane %v886, 7
      %v909 = vrot.slane %v888, 7
      %v910 = vrot.slane %v890, 7
      %v911 = vrot.slane %v892, 7
      %v912 = vrot.slane %v894, 7
      %v913 = vrot.slane %v896, 7
      %v914 = vrot.slane %v867, 7
      %v915 = vrot.slane %v869, 7
      %v916 = vrot.slane %v871, 7
      %v917 = vrot.slane %v873, 7
      %v918 = vrot.slane %v875, 7
      %v919 = vrot.slane %v877, 7
      %v920 = vrot.slane %v879, 7
      %v921 = vrot.slane %v881, 7
      %v922 = vrot.slane %v883, 7
      %v923 = vrot.slane %v885, 7
      %v924 = vrot.slane %v887, 7
      %v925 = vrot.slane %v889, 7
      %v926 = vrot.slane %v891, 7
      %v927 = vrot.slane %v893, 7
      %v928 = vrot.slane %v895, 7
      %v929 = vrot.slane %v897, 7
      %vm930 = vcmp.lt.s32.totalorder %v860, 1
      %v931 = vsel %vm930, %v898, %v914
      %v932 = vsel %vm930, %v899, %v915
      %v933 = vsel %vm930, %v900, %v916
      %v934 = vsel %vm930, %v901, %v917
      %v935 = vsel %vm930, %v902, %v918
      %v936 = vsel %vm930, %v903, %v919
      %v937 = vsel %vm930, %v904, %v920
      %v938 = vsel %vm930, %v905, %v921
      %v939 = vsel %vm930, %v906, %v922
      %v940 = vsel %vm930, %v907, %v923
      %v941 = vsel %vm930, %v908, %v924
      %v942 = vsel %vm930, %v909, %v925
      %v943 = vsel %vm930, %v910, %v926
      %v944 = vsel %vm930, %v911, %v927
      %v945 = vsel %vm930, %v912, %v928
      %v946 = vsel %vm930, %v913, %v929
      %v947 = vsel %vm930, %v914, %v898
      %v948 = vsel %vm930, %v915, %v899
      %v949 = vsel %vm930, %v916, %v900
      %v950 = vsel %vm930, %v917, %v901
      %v951 = vsel %vm930, %v918, %v902
      %v952 = vsel %vm930, %v919, %v903
      %v953 = vsel %vm930, %v920, %v904
      %v954 = vsel %vm930, %v921, %v905
      %v955 = vsel %vm930, %v922, %v906
      %v956 = vsel %vm930, %v923, %v907
      %v957 = vsel %vm930, %v924, %v908
      %v958 = vsel %vm930, %v925, %v909
      %v959 = vsel %vm930, %v926, %v910
      %v960 = vsel %vm930, %v927, %v911
      %v961 = vsel %vm930, %v928, %v912
      %v962 = vsel %vm930, %v929, %v913
      %v963 = vsel %vm862, 0.0, %v947
      %v964 = vsel %vm863, 0.0, %v931
      %v965 = vsel %vm862, 0.0, %v948
      %v966 = vsel %vm863, 0.0, %v932
      %v967 = vsel %vm862, 0.0, %v949
      %v968 = vsel %vm863, 0.0, %v933
      %v969 = vsel %vm862, 0.0, %v950
      %v970 = vsel %vm863, 0.0, %v934
      %v971 = vsel %vm862, 0.0, %v951
      %v972 = vsel %vm863, 0.0, %v935
      %v973 = vsel %vm862, 0.0, %v952
      %v974 = vsel %vm863, 0.0, %v936
      %v975 = vsel %vm862, 0.0, %v953
      %v976 = vsel %vm863, 0.0, %v937
      %v977 = vsel %vm862, 0.0, %v954
      %v978 = vsel %vm863, 0.0, %v938
      %v979 = vsel %vm862, 0.0, %v955
      %v980 = vsel %vm863, 0.0, %v939
      %v981 = vsel %vm862, 0.0, %v956
      %v982 = vsel %vm863, 0.0, %v940
      %v983 = vsel %vm862, 0.0, %v957
      %v984 = vsel %vm863, 0.0, %v941
      %v985 = vsel %vm862, 0.0, %v958
      %v986 = vsel %vm863, 0.0, %v942
      %v987 = vsel %vm862, 0.0, %v959
      %v988 = vsel %vm863, 0.0, %v943
      %v989 = vsel %vm862, 0.0, %v960
      %v990 = vsel %vm863, 0.0, %v944
      %v991 = vsel %vm862, 0.0, %v961
      %v992 = vsel %vm863, 0.0, %v945
      %v993 = vsel %vm862, 0.0, %v962
      %v994 = vsel %vm863, 0.0, %v946
      %v995 = vrot.slane %v866, 1
      %v996 = vrot.slane %v868, 1
      %v997 = vrot.slane %v870, 1
      %v998 = vrot.slane %v872, 1
      %v999 = vrot.slane %v874, 1
      %v1000 = vrot.slane %v876, 1
      %v1001 = vrot.slane %v878, 1
      %v1002 = vrot.slane %v880, 1
      %v1003 = vrot.slane %v882, 1
      %v1004 = vrot.slane %v884, 1
      %v1005 = vrot.slane %v886, 1
      %v1006 = vrot.slane %v888, 1
      %v1007 = vrot.slane %v890, 1
      %v1008 = vrot.slane %v892, 1
      %v1009 = vrot.slane %v894, 1
      %v1010 = vrot.slane %v896, 1
      %v1011 = vrot.slane %v867, 1
      %v1012 = vrot.slane %v869, 1
      %v1013 = vrot.slane %v871, 1
      %v1014 = vrot.slane %v873, 1
      %v1015 = vrot.slane %v875, 1
      %v1016 = vrot.slane %v877, 1
      %v1017 = vrot.slane %v879, 1
      %v1018 = vrot.slane %v881, 1
      %v1019 = vrot.slane %v883, 1
      %v1020 = vrot.slane %v885, 1
      %v1021 = vrot.slane %v887, 1
      %v1022 = vrot.slane %v889, 1
      %v1023 = vrot.slane %v891, 1
      %v1024 = vrot.slane %v893, 1
      %v1025 = vrot.slane %v895, 1
      %v1026 = vrot.slane %v897, 1
      %vm1027 = vcmp.lt.s32.totalorder %v860, 7
      %v1028 = vsel %vm1027, %v995, %v1011
      %v1029 = vsel %vm1027, %v996, %v1012
      %v1030 = vsel %vm1027, %v997, %v1013
      %v1031 = vsel %vm1027, %v998, %v1014
      %v1032 = vsel %vm1027, %v999, %v1015
      %v1033 = vsel %vm1027, %v1000, %v1016
      %v1034 = vsel %vm1027, %v1001, %v1017
      %v1035 = vsel %vm1027, %v1002, %v1018
      %v1036 = vsel %vm1027, %v1003, %v1019
      %v1037 = vsel %vm1027, %v1004, %v1020
      %v1038 = vsel %vm1027, %v1005, %v1021
      %v1039 = vsel %vm1027, %v1006, %v1022
      %v1040 = vsel %vm1027, %v1007, %v1023
      %v1041 = vsel %vm1027, %v1008, %v1024
      %v1042 = vsel %vm1027, %v1009, %v1025
      %v1043 = vsel %vm1027, %v1010, %v1026
      %v1044 = vsel %vm1027, %v1011, %v995
      %v1045 = vsel %vm1027, %v1012, %v996
      %v1046 = vsel %vm1027, %v1013, %v997
      %v1047 = vsel %vm1027, %v1014, %v998
      %v1048 = vsel %vm1027, %v1015, %v999
      %v1049 = vsel %vm1027, %v1016, %v1000
      %v1050 = vsel %vm1027, %v1017, %v1001
      %v1051 = vsel %vm1027, %v1018, %v1002
      %v1052 = vsel %vm1027, %v1019, %v1003
      %v1053 = vsel %vm1027, %v1020, %v1004
      %v1054 = vsel %vm1027, %v1021, %v1005
      %v1055 = vsel %vm1027, %v1022, %v1006
      %v1056 = vsel %vm1027, %v1023, %v1007
      %v1057 = vsel %vm1027, %v1024, %v1008
      %v1058 = vsel %vm1027, %v1025, %v1009
      %v1059 = vsel %vm1027, %v1026, %v1010
      %v1060 = vsel %vm864, 0.0, %v1028
      %v1061 = vsel %vm865, 0.0, %v1044
      %v1062 = vsel %vm864, 0.0, %v1029
      %v1063 = vsel %vm865, 0.0, %v1045
      %v1064 = vsel %vm864, 0.0, %v1030
      %v1065 = vsel %vm865, 0.0, %v1046
      %v1066 = vsel %vm864, 0.0, %v1031
      %v1067 = vsel %vm865, 0.0, %v1047
      %v1068 = vsel %vm864, 0.0, %v1032
      %v1069 = vsel %vm865, 0.0, %v1048
      %v1070 = vsel %vm864, 0.0, %v1033
      %v1071 = vsel %vm865, 0.0, %v1049
      %v1072 = vsel %vm864, 0.0, %v1034
      %v1073 = vsel %vm865, 0.0, %v1050
      %v1074 = vsel %vm864, 0.0, %v1035
      %v1075 = vsel %vm865, 0.0, %v1051
      %v1076 = vsel %vm864, 0.0, %v1036
      %v1077 = vsel %vm865, 0.0, %v1052
      %v1078 = vsel %vm864, 0.0, %v1037
      %v1079 = vsel %vm865, 0.0, %v1053
      %v1080 = vsel %vm864, 0.0, %v1038
      %v1081 = vsel %vm865, 0.0, %v1054
      %v1082 = vsel %vm864, 0.0, %v1039
      %v1083 = vsel %vm865, 0.0, %v1055
      %v1084 = vsel %vm864, 0.0, %v1040
      %v1085 = vsel %vm865, 0.0, %v1056
      %v1086 = vsel %vm864, 0.0, %v1041
      %v1087 = vsel %vm865, 0.0, %v1057
      %v1088 = vsel %vm864, 0.0, %v1042
      %v1089 = vsel %vm865, 0.0, %v1058
      %v1090 = vsel %vm864, 0.0, %v1043
      %v1091 = vsel %vm865, 0.0, %v1059
      %1124 = vrot.lane.b32.xlu0 %v866, 2
      %v1125 = vpop.permute.xlu0 %1124
      %1126 = vrot.lane.b32.xlu0 %v867, 2
      %v1127 = vpop.permute.xlu0 %1126
      %1128 = vrot.lane.b32.xlu0 %v868, 2
      %v1129 = vpop.permute.xlu0 %1128
      %1130 = vrot.lane.b32.xlu0 %v869, 2
      %v1131 = vpop.permute.xlu0 %1130
      %1132 = vrot.lane.b32.xlu0 %v870, 2
      %v1133 = vpop.permute.xlu0 %1132
      %1134 = vrot.lane.b32.xlu0 %v871, 2
      %v1135 = vpop.permute.xlu0 %1134
      %1136 = vrot.lane.b32.xlu0 %v872, 2
      %v1137 = vpop.permute.xlu0 %1136
      %1138 = vrot.lane.b32.xlu0 %v873, 2
      %v1139 = vpop.permute.xlu0 %1138
      %1140 = vrot.lane.b32.xlu0 %v874, 2
      %v1141 = vpop.permute.xlu0 %1140
      %1142 = vrot.lane.b32.xlu0 %v875, 2
      %v1143 = vpop.permute.xlu0 %1142
      %1144 = vrot.lane.b32.xlu0 %v876, 2
      %v1145 = vpop.permute.xlu0 %1144
      %1146 = vrot.lane.b32.xlu0 %v877, 2
      %v1147 = vpop.permute.xlu0 %1146
      %1148 = vrot.lane.b32.xlu0 %v878, 2
      %v1149 = vpop.permute.xlu0 %1148
      %1150 = vrot.lane.b32.xlu0 %v879, 2
      %v1151 = vpop.permute.xlu0 %1150
      %1152 = vrot.lane.b32.xlu0 %v880, 2
      %v1153 = vpop.permute.xlu0 %1152
      %1154 = vrot.lane.b32.xlu0 %v881, 2
      %v1155 = vpop.permute.xlu0 %1154
      %1156 = vrot.lane.b32.xlu0 %v882, 2
      %v1157 = vpop.permute.xlu0 %1156
      %1158 = vrot.lane.b32.xlu0 %v883, 2
      %v1159 = vpop.permute.xlu0 %1158
      %1160 = vrot.lane.b32.xlu0 %v884, 2
      %v1161 = vpop.permute.xlu0 %1160
      %1162 = vrot.lane.b32.xlu0 %v885, 2
      %v1163 = vpop.permute.xlu0 %1162
      %1164 = vrot.lane.b32.xlu0 %v886, 2
      %v1165 = vpop.permute.xlu0 %1164
      %1166 = vrot.lane.b32.xlu0 %v887, 2
      %v1167 = vpop.permute.xlu0 %1166
      %1168 = vrot.lane.b32.xlu0 %v888, 2
      %v1169 = vpop.permute.xlu0 %1168
      %1170 = vrot.lane.b32.xlu0 %v889, 2
      %v1171 = vpop.permute.xlu0 %1170
      %1172 = vrot.lane.b32.xlu0 %v890, 2
      %v1173 = vpop.permute.xlu0 %1172
      %1174 = vrot.lane.b32.xlu0 %v891, 2
      %v1175 = vpop.permute.xlu0 %1174
      %1176 = vrot.lane.b32.xlu0 %v892, 2
      %v1177 = vpop.permute.xlu0 %1176
      %1178 = vrot.lane.b32.xlu0 %v893, 2
      %v1179 = vpop.permute.xlu0 %1178
      %1180 = vrot.lane.b32.xlu0 %v894, 2
      %v1181 = vpop.permute.xlu0 %1180
      %1182 = vrot.lane.b32.xlu0 %v895, 2
      %v1183 = vpop.permute.xlu0 %1182
      %1184 = vrot.lane.b32.xlu0 %v896, 2
      %v1185 = vpop.permute.xlu0 %1184
      %1186 = vrot.lane.b32.xlu0 %v897, 2
      %v1187 = vpop.permute.xlu0 %1186
      %1252 = vrot.lane.b32.xlu0 %v1060, 4
      %v1253 = vpop.permute.xlu0 %1252
      %1254 = vrot.lane.b32.xlu0 %v1061, 4
      %v1255 = vpop.permute.xlu0 %1254
      %1256 = vrot.lane.b32.xlu0 %v1062, 4
      %v1257 = vpop.permute.xlu0 %1256
      %1258 = vrot.lane.b32.xlu0 %v1063, 4
      %v1259 = vpop.permute.xlu0 %1258
      %1260 = vrot.lane.b32.xlu0 %v1064, 4
      %v1261 = vpop.permute.xlu0 %1260
      %1262 = vrot.lane.b32.xlu0 %v1065, 4
      %v1263 = vpop.permute.xlu0 %1262
      %1264 = vrot.lane.b32.xlu0 %v1066, 4
      %v1265 = vpop.permute.xlu0 %1264
      %1266 = vrot.lane.b32.xlu0 %v1067, 4
      %v1267 = vpop.permute.xlu0 %1266
      %1268 = vrot.lane.b32.xlu0 %v1068, 4
      %v1269 = vpop.permute.xlu0 %1268
      %1270 = vrot.lane.b32.xlu0 %v1069, 4
      %v1271 = vpop.permute.xlu0 %1270
      %1272 = vrot.lane.b32.xlu0 %v1070, 4
      %v1273 = vpop.permute.xlu0 %1272
      %1274 = vrot.lane.b32.xlu0 %v1071, 4
      %v1275 = vpop.permute.xlu0 %1274
      %1276 = vrot.lane.b32.xlu0 %v1072, 4
      %v1277 = vpop.permute.xlu0 %1276
      %1278 = vrot.lane.b32.xlu0 %v1073, 4
      %v1279 = vpop.permute.xlu0 %1278
      %1280 = vrot.lane.b32.xlu0 %v1074, 4
      %v1281 = vpop.permute.xlu0 %1280
      %1282 = vrot.lane.b32.xlu0 %v1075, 4
      %v1283 = vpop.permute.xlu0 %1282
      %1284 = vrot.lane.b32.xlu0 %v1076, 4
      %v1285 = vpop.permute.xlu0 %1284
      %1286 = vrot.lane.b32.xlu0 %v1077, 4
      %v1287 = vpop.permute.xlu0 %1286
      %1288 = vrot.lane.b32.xlu0 %v1078, 4
      %v1289 = vpop.permute.xlu0 %1288
      %1290 = vrot.lane.b32.xlu0 %v1079, 4
      %v1291 = vpop.permute.xlu0 %1290
      %1292 = vrot.lane.b32.xlu0 %v1080, 4
      %v1293 = vpop.permute.xlu0 %1292
      %1294 = vrot.lane.b32.xlu0 %v1081, 4
      %v1295 = vpop.permute.xlu0 %1294
      %1296 = vrot.lane.b32.xlu0 %v1082, 4
      %v1297 = vpop.permute.xlu0 %1296
      %1298 = vrot.lane.b32.xlu0 %v1083, 4
      %v1299 = vpop.permute.xlu0 %1298
      %1300 = vrot.lane.b32.xlu0 %v1084, 4
      %v1301 = vpop.permute.xlu0 %1300
      %1302 = vrot.lane.b32.xlu0 %v1085, 4
      %v1303 = vpop.permute.xlu0 %1302
      %1304 = vrot.lane.b32.xlu0 %v1086, 4
      %v1305 = vpop.permute.xlu0 %1304
      %1306 = vrot.lane.b32.xlu0 %v1087, 4
      %v1307 = vpop.permute.xlu0 %1306
      %1308 = vrot.lane.b32.xlu0 %v1088, 4
      %v1309 = vpop.permute.xlu0 %1308
      %1310 = vrot.lane.b32.xlu0 %v1089, 4
      %v1311 = vpop.permute.xlu0 %1310
      %1312 = vrot.lane.b32.xlu0 %v1090, 4
      %v1313 = vpop.permute.xlu0 %1312
      %1314 = vrot.lane.b32.xlu0 %v1091, 4
      %v1315 = vpop.permute.xlu0 %1314
      %v1348 = vsel %vm826, %v963, %v1125
      %v1349 = vsel %vm826, %v964, %v1127
      %v1350 = vsel %vm826, %v965, %v1129
      %v1351 = vsel %vm826, %v966, %v1131
      %v1352 = vsel %vm826, %v967, %v1133
      %v1353 = vsel %vm826, %v968, %v1135
      %v1354 = vsel %vm826, %v969, %v1137
      %v1355 = vsel %vm826, %v970, %v1139
      %v1356 = vsel %vm826, %v971, %v1141
      %v1357 = vsel %vm826, %v972, %v1143
      %v1358 = vsel %vm826, %v973, %v1145
      %v1359 = vsel %vm826, %v974, %v1147
      %v1360 = vsel %vm826, %v975, %v1149
      %v1361 = vsel %vm826, %v976, %v1151
      %v1362 = vsel %vm826, %v977, %v1153
      %v1363 = vsel %vm826, %v978, %v1155
      %v1364 = vsel %vm826, %v979, %v1157
      %v1365 = vsel %vm826, %v980, %v1159
      %v1366 = vsel %vm826, %v981, %v1161
      %v1367 = vsel %vm826, %v982, %v1163
      %v1368 = vsel %vm826, %v983, %v1165
      %v1369 = vsel %vm826, %v984, %v1167
      %v1370 = vsel %vm826, %v985, %v1169
      %v1371 = vsel %vm826, %v986, %v1171
      %v1372 = vsel %vm826, %v987, %v1173
      %v1373 = vsel %vm826, %v988, %v1175
      %v1374 = vsel %vm826, %v989, %v1177
      %v1375 = vsel %vm826, %v990, %v1179
      %v1376 = vsel %vm826, %v991, %v1181
      %v1377 = vsel %vm826, %v992, %v1183
      %v1378 = vsel %vm826, %v993, %v1185
      %v1379 = vsel %vm826, %v994, %v1187
      %v1380 = vsel %vm275, %v1348, %v1253
      %v1381 = vsel %vm275, %v1349, %v1255
      %v1382 = vsel %vm275, %v1350, %v1257
      %v1383 = vsel %vm275, %v1351, %v1259
      %v1384 = vsel %vm275, %v1352, %v1261
      %v1385 = vsel %vm275, %v1353, %v1263
      %v1386 = vsel %vm275, %v1354, %v1265
      %v1387 = vsel %vm275, %v1355, %v1267
      %v1388 = vsel %vm275, %v1356, %v1269
      %v1389 = vsel %vm275, %v1357, %v1271
      %v1390 = vsel %vm275, %v1358, %v1273
      %v1391 = vsel %vm275, %v1359, %v1275
      %v1392 = vsel %vm275, %v1360, %v1277
      %v1393 = vsel %vm275, %v1361, %v1279
      %v1394 = vsel %vm275, %v1362, %v1281
      %v1395 = vsel %vm275, %v1363, %v1283
      %v1396 = vsel %vm275, %v1364, %v1285
      %v1397 = vsel %vm275, %v1365, %v1287
      %v1398 = vsel %vm275, %v1366, %v1289
      %v1399 = vsel %vm275, %v1367, %v1291
      %v1400 = vsel %vm275, %v1368, %v1293
      %v1401 = vsel %vm275, %v1369, %v1295
      %v1402 = vsel %vm275, %v1370, %v1297
      %v1403 = vsel %vm275, %v1371, %v1299
      %v1404 = vsel %vm275, %v1372, %v1301
      %v1405 = vsel %vm275, %v1373, %v1303
      %v1406 = vsel %vm275, %v1374, %v1305
      %v1407 = vsel %vm275, %v1375, %v1307
      %v1408 = vsel %vm275, %v1376, %v1309
      %v1409 = vsel %vm275, %v1377, %v1311
      %v1410 = vsel %vm275, %v1378, %v1313
      %v1411 = vsel %vm275, %v1379, %v1315
      %v1412 = vld [vmem:[%s3] sm:$0x3f]
      %v1413 = vld [vmem:[%s825] sm:$0xff]
      %v1414 = vld [vmem:[%s825 + $0x8] sm:$0xff]
      %v1415 = vld [vmem:[%s825 + $0x10] sm:$0xff]
      %v1416 = vld [vmem:[%s825 + $0x18] sm:$0xff]
      %v1417 = vld [vmem:[%s825 + $0x20] sm:$0xff]
      %v1418 = vld [vmem:[%s825 + $0x28] sm:$0xff]
      %v1419 = vld [vmem:[%s825 + $0x30] sm:$0xff]
      %v1420 = vld [vmem:[%s825 + $0x38] sm:$0xff]
      %v1421 = vld [vmem:[%s825 + $0x40] sm:$0xff]
      %v1422 = vld [vmem:[%s825 + $0x48] sm:$0xff]
      %v1423 = vld [vmem:[%s825 + $0x50] sm:$0xff]
      %v1424 = vld [vmem:[%s825 + $0x58] sm:$0xff]
      %v1425 = vld [vmem:[%s825 + $0x60] sm:$0xff]
      %v1426 = vld [vmem:[%s825 + $0x68] sm:$0xff]
      %v1427 = vld [vmem:[%s825 + $0x70] sm:$0xff]
      %v1428 = vld [vmem:[%s825 + $0x78] sm:$0xff]
      %v1429 = vld [vmem:[%s825 + $0x80] sm:$0xff]
      %v1430 = vld [vmem:[%s825 + $0x88] sm:$0xff]
      %v1431 = vld [vmem:[%s825 + $0x90] sm:$0xff]
      %v1432 = vld [vmem:[%s825 + $0x98] sm:$0xff]
      %v1433 = vld [vmem:[%s825 + $0xa0] sm:$0xff]
      %v1434 = vld [vmem:[%s825 + $0xa8] sm:$0xff]
      %v1435 = vld [vmem:[%s825 + $0xb0] sm:$0xff]
      %v1436 = vld [vmem:[%s825 + $0xb8] sm:$0xff]
      %v1437 = vld [vmem:[%s825 + $0xc0] sm:$0xff]
      %v1438 = vld [vmem:[%s825 + $0xc8] sm:$0xff]
      %v1439 = vld [vmem:[%s825 + $0xd0] sm:$0xff]
      %v1440 = vld [vmem:[%s825 + $0xd8] sm:$0xff]
      %v1441 = vld [vmem:[%s825 + $0xe0] sm:$0xff]
      %v1442 = vld [vmem:[%s825 + $0xe8] sm:$0xff]
      %v1443 = vld [vmem:[%s825 + $0xf0] sm:$0xff]
      %v1444 = vld [vmem:[%s825 + $0xf8] sm:$0xff]
      %v1445 = vrot.slane %v1413, 7
      %v1446 = vrot.slane %v1415, 7
      %v1447 = vrot.slane %v1417, 7
      %v1448 = vrot.slane %v1419, 7
      %v1449 = vrot.slane %v1421, 7
      %v1450 = vrot.slane %v1423, 7
      %v1451 = vrot.slane %v1425, 7
      %v1452 = vrot.slane %v1427, 7
      %v1453 = vrot.slane %v1429, 7
      %v1454 = vrot.slane %v1431, 7
      %v1455 = vrot.slane %v1433, 7
      %v1456 = vrot.slane %v1435, 7
      %v1457 = vrot.slane %v1437, 7
      %v1458 = vrot.slane %v1439, 7
      %v1459 = vrot.slane %v1441, 7
      %v1460 = vrot.slane %v1443, 7
      %v1461 = vrot.slane %v1414, 7
      %v1462 = vrot.slane %v1416, 7
      %v1463 = vrot.slane %v1418, 7
      %v1464 = vrot.slane %v1420, 7
      %v1465 = vrot.slane %v1422, 7
      %v1466 = vrot.slane %v1424, 7
      %v1467 = vrot.slane %v1426, 7
      %v1468 = vrot.slane %v1428, 7
      %v1469 = vrot.slane %v1430, 7
      %v1470 = vrot.slane %v1432, 7
      %v1471 = vrot.slane %v1434, 7
      %v1472 = vrot.slane %v1436, 7
      %v1473 = vrot.slane %v1438, 7
      %v1474 = vrot.slane %v1440, 7
      %v1475 = vrot.slane %v1442, 7
      %v1476 = vrot.slane %v1444, 7
      %v1477 = vsel %vm930, %v1445, %v1461
      %v1478 = vsel %vm930, %v1446, %v1462
      %v1479 = vsel %vm930, %v1447, %v1463
      %v1480 = vsel %vm930, %v1448, %v1464
      %v1481 = vsel %vm930, %v1449, %v1465
      %v1482 = vsel %vm930, %v1450, %v1466
      %v1483 = vsel %vm930, %v1451, %v1467
      %v1484 = vsel %vm930, %v1452, %v1468
      %v1485 = vsel %vm930, %v1453, %v1469
      %v1486 = vsel %vm930, %v1454, %v1470
      %v1487 = vsel %vm930, %v1455, %v1471
      %v1488 = vsel %vm930, %v1456, %v1472
      %v1489 = vsel %vm930, %v1457, %v1473
      %v1490 = vsel %vm930, %v1458, %v1474
      %v1491 = vsel %vm930, %v1459, %v1475
      %v1492 = vsel %vm930, %v1460, %v1476
      %v1493 = vsel %vm930, %v1461, %v1445
      %v1494 = vsel %vm930, %v1462, %v1446
      %v1495 = vsel %vm930, %v1463, %v1447
      %v1496 = vsel %vm930, %v1464, %v1448
      %v1497 = vsel %vm930, %v1465, %v1449
      %v1498 = vsel %vm930, %v1466, %v1450
      %v1499 = vsel %vm930, %v1467, %v1451
      %v1500 = vsel %vm930, %v1468, %v1452
      %v1501 = vsel %vm930, %v1469, %v1453
      %v1502 = vsel %vm930, %v1470, %v1454
      %v1503 = vsel %vm930, %v1471, %v1455
      %v1504 = vsel %vm930, %v1472, %v1456
      %v1505 = vsel %vm930, %v1473, %v1457
      %v1506 = vsel %vm930, %v1474, %v1458
      %v1507 = vsel %vm930, %v1475, %v1459
      %v1508 = vsel %vm930, %v1476, %v1460
      %v1509 = vsel %vm862, 0.0, %v1493
      %v1510 = vsel %vm863, 0.0, %v1477
      %v1511 = vsel %vm862, 0.0, %v1494
      %v1512 = vsel %vm863, 0.0, %v1478
      %v1513 = vsel %vm862, 0.0, %v1495
      %v1514 = vsel %vm863, 0.0, %v1479
      %v1515 = vsel %vm862, 0.0, %v1496
      %v1516 = vsel %vm863, 0.0, %v1480
      %v1517 = vsel %vm862, 0.0, %v1497
      %v1518 = vsel %vm863, 0.0, %v1481
      %v1519 = vsel %vm862, 0.0, %v1498
      %v1520 = vsel %vm863, 0.0, %v1482
      %v1521 = vsel %vm862, 0.0, %v1499
      %v1522 = vsel %vm863, 0.0, %v1483
      %v1523 = vsel %vm862, 0.0, %v1500
      %v1524 = vsel %vm863, 0.0, %v1484
      %v1525 = vsel %vm862, 0.0, %v1501
      %v1526 = vsel %vm863, 0.0, %v1485
      %v1527 = vsel %vm862, 0.0, %v1502
      %v1528 = vsel %vm863, 0.0, %v1486
      %v1529 = vsel %vm862, 0.0, %v1503
      %v1530 = vsel %vm863, 0.0, %v1487
      %v1531 = vsel %vm862, 0.0, %v1504
      %v1532 = vsel %vm863, 0.0, %v1488
      %v1533 = vsel %vm862, 0.0, %v1505
      %v1534 = vsel %vm863, 0.0, %v1489
      %v1535 = vsel %vm862, 0.0, %v1506
      %v1536 = vsel %vm863, 0.0, %v1490
      %v1537 = vsel %vm862, 0.0, %v1507
      %v1538 = vsel %vm863, 0.0, %v1491
      %v1539 = vsel %vm862, 0.0, %v1508
      %v1540 = vsel %vm863, 0.0, %v1492
      %v1541 = vrot.slane %v1413, 1
      %v1542 = vrot.slane %v1415, 1
      %v1543 = vrot.slane %v1417, 1
      %v1544 = vrot.slane %v1419, 1
      %v1545 = vrot.slane %v1421, 1
      %v1546 = vrot.slane %v1423, 1
      %v1547 = vrot.slane %v1425, 1
      %v1548 = vrot.slane %v1427, 1
      %v1549 = vrot.slane %v1429, 1
      %v1550 = vrot.slane %v1431, 1
      %v1551 = vrot.slane %v1433, 1
      %v1552 = vrot.slane %v1435, 1
      %v1553 = vrot.slane %v1437, 1
      %v1554 = vrot.slane %v1439, 1
      %v1555 = vrot.slane %v1441, 1
      %v1556 = vrot.slane %v1443, 1
      %v1557 = vrot.slane %v1414, 1
      %v1558 = vrot.slane %v1416, 1
      %v1559 = vrot.slane %v1418, 1
      %v1560 = vrot.slane %v1420, 1
      %v1561 = vrot.slane %v1422, 1
      %v1562 = vrot.slane %v1424, 1
      %v1563 = vrot.slane %v1426, 1
      %v1564 = vrot.slane %v1428, 1
      %v1565 = vrot.slane %v1430, 1
      %v1566 = vrot.slane %v1432, 1
      %v1567 = vrot.slane %v1434, 1
      %v1568 = vrot.slane %v1436, 1
      %v1569 = vrot.slane %v1438, 1
      %v1570 = vrot.slane %v1440, 1
      %v1571 = vrot.slane %v1442, 1
      %v1572 = vrot.slane %v1444, 1
      %v1573 = vsel %vm1027, %v1541, %v1557
      %v1574 = vsel %vm1027, %v1542, %v1558
      %v1575 = vsel %vm1027, %v1543, %v1559
      %v1576 = vsel %vm1027, %v1544, %v1560
      %v1577 = vsel %vm1027, %v1545, %v1561
      %v1578 = vsel %vm1027, %v1546, %v1562
      %v1579 = vsel %vm1027, %v1547, %v1563
      %v1580 = vsel %vm1027, %v1548, %v1564
      %v1581 = vsel %vm1027, %v1549, %v1565
      %v1582 = vsel %vm1027, %v1550, %v1566
      %v1583 = vsel %vm1027, %v1551, %v1567
      %v1584 = vsel %vm1027, %v1552, %v1568
      %v1585 = vsel %vm1027, %v1553, %v1569
      %v1586 = vsel %vm1027, %v1554, %v1570
      %v1587 = vsel %vm1027, %v1555, %v1571
      %v1588 = vsel %vm1027, %v1556, %v1572
      %v1589 = vsel %vm1027, %v1557, %v1541
      %v1590 = vsel %vm1027, %v1558, %v1542
      %v1591 = vsel %vm1027, %v1559, %v1543
      %v1592 = vsel %vm1027, %v1560, %v1544
      %v1593 = vsel %vm1027, %v1561, %v1545
      %v1594 = vsel %vm1027, %v1562, %v1546
      %v1595 = vsel %vm1027, %v1563, %v1547
      %v1596 = vsel %vm1027, %v1564, %v1548
      %v1597 = vsel %vm1027, %v1565, %v1549
      %v1598 = vsel %vm1027, %v1566, %v1550
      %v1599 = vsel %vm1027, %v1567, %v1551
      %v1600 = vsel %vm1027, %v1568, %v1552
      %v1601 = vsel %vm1027, %v1569, %v1553
      %v1602 = vsel %vm1027, %v1570, %v1554
      %v1603 = vsel %vm1027, %v1571, %v1555
      %v1604 = vsel %vm1027, %v1572, %v1556
      %v1605 = vsel %vm864, 0.0, %v1573
      %v1606 = vsel %vm865, 0.0, %v1589
      %v1607 = vsel %vm864, 0.0, %v1574
      %v1608 = vsel %vm865, 0.0, %v1590
      %v1609 = vsel %vm864, 0.0, %v1575
      %v1610 = vsel %vm865, 0.0, %v1591
      %v1611 = vsel %vm864, 0.0, %v1576
      %v1612 = vsel %vm865, 0.0, %v1592
      %v1613 = vsel %vm864, 0.0, %v1577
      %v1614 = vsel %vm865, 0.0, %v1593
      %v1615 = vsel %vm864, 0.0, %v1578
      %v1616 = vsel %vm865, 0.0, %v1594
      %v1617 = vsel %vm864, 0.0, %v1579
      %v1618 = vsel %vm865, 0.0, %v1595
      %v1619 = vsel %vm864, 0.0, %v1580
      %v1620 = vsel %vm865, 0.0, %v1596
      %v1621 = vsel %vm864, 0.0, %v1581
      %v1622 = vsel %vm865, 0.0, %v1597
      %v1623 = vsel %vm864, 0.0, %v1582
      %v1624 = vsel %vm865, 0.0, %v1598
      %v1625 = vsel %vm864, 0.0, %v1583
      %v1626 = vsel %vm865, 0.0, %v1599
      %v1627 = vsel %vm864, 0.0, %v1584
      %v1628 = vsel %vm865, 0.0, %v1600
      %v1629 = vsel %vm864, 0.0, %v1585
      %v1630 = vsel %vm865, 0.0, %v1601
      %v1631 = vsel %vm864, 0.0, %v1586
      %v1632 = vsel %vm865, 0.0, %v1602
      %v1633 = vsel %vm864, 0.0, %v1587
      %v1634 = vsel %vm865, 0.0, %v1603
      %v1635 = vsel %vm864, 0.0, %v1588
      %v1636 = vsel %vm865, 0.0, %v1604
      %1669 = vrot.lane.b32.xlu0 %v1413, 2
      %v1670 = vpop.permute.xlu0 %1669
      %1671 = vrot.lane.b32.xlu0 %v1414, 2
      %v1672 = vpop.permute.xlu0 %1671
      %1673 = vrot.lane.b32.xlu0 %v1415, 2
      %v1674 = vpop.permute.xlu0 %1673
      %1675 = vrot.lane.b32.xlu0 %v1416, 2
      %v1676 = vpop.permute.xlu0 %1675
      %1677 = vrot.lane.b32.xlu0 %v1417, 2
      %v1678 = vpop.permute.xlu0 %1677
      %1679 = vrot.lane.b32.xlu0 %v1418, 2
      %v1680 = vpop.permute.xlu0 %1679
      %1681 = vrot.lane.b32.xlu0 %v1419, 2
      %v1682 = vpop.permute.xlu0 %1681
      %1683 = vrot.lane.b32.xlu0 %v1420, 2
      %v1684 = vpop.permute.xlu0 %1683
      %1685 = vrot.lane.b32.xlu0 %v1421, 2
      %v1686 = vpop.permute.xlu0 %1685
      %1687 = vrot.lane.b32.xlu0 %v1422, 2
      %v1688 = vpop.permute.xlu0 %1687
      %1689 = vrot.lane.b32.xlu0 %v1423, 2
      %v1690 = vpop.permute.xlu0 %1689
      %1691 = vrot.lane.b32.xlu0 %v1424, 2
      %v1692 = vpop.permute.xlu0 %1691
      %1693 = vrot.lane.b32.xlu0 %v1425, 2
      %v1694 = vpop.permute.xlu0 %1693
      %1695 = vrot.lane.b32.xlu0 %v1426, 2
      %v1696 = vpop.permute.xlu0 %1695
      %1697 = vrot.lane.b32.xlu0 %v1427, 2
      %v1698 = vpop.permute.xlu0 %1697
      %1699 = vrot.lane.b32.xlu0 %v1428, 2
      %v1700 = vpop.permute.xlu0 %1699
      %1701 = vrot.lane.b32.xlu0 %v1429, 2
      %v1702 = vpop.permute.xlu0 %1701
      %1703 = vrot.lane.b32.xlu0 %v1430, 2
      %v1704 = vpop.permute.xlu0 %1703
      %1705 = vrot.lane.b32.xlu0 %v1431, 2
      %v1706 = vpop.permute.xlu0 %1705
      %1707 = vrot.lane.b32.xlu0 %v1432, 2
      %v1708 = vpop.permute.xlu0 %1707
      %1709 = vrot.lane.b32.xlu0 %v1433, 2
      %v1710 = vpop.permute.xlu0 %1709
      %1711 = vrot.lane.b32.xlu0 %v1434, 2
      %v1712 = vpop.permute.xlu0 %1711
      %1713 = vrot.lane.b32.xlu0 %v1435, 2
      %v1714 = vpop.permute.xlu0 %1713
      %1715 = vrot.lane.b32.xlu0 %v1436, 2
      %v1716 = vpop.permute.xlu0 %1715
      %1717 = vrot.lane.b32.xlu0 %v1437, 2
      %v1718 = vpop.permute.xlu0 %1717
      %1719 = vrot.lane.b32.xlu0 %v1438, 2
      %v1720 = vpop.permute.xlu0 %1719
      %1721 = vrot.lane.b32.xlu0 %v1439, 2
      %v1722 = vpop.permute.xlu0 %1721
      %1723 = vrot.lane.b32.xlu0 %v1440, 2
      %v1724 = vpop.permute.xlu0 %1723
      %1725 = vrot.lane.b32.xlu0 %v1441, 2
      %v1726 = vpop.permute.xlu0 %1725
      %1727 = vrot.lane.b32.xlu0 %v1442, 2
      %v1728 = vpop.permute.xlu0 %1727
      %1729 = vrot.lane.b32.xlu0 %v1443, 2
      %v1730 = vpop.permute.xlu0 %1729
      %1731 = vrot.lane.b32.xlu0 %v1444, 2
      %v1732 = vpop.permute.xlu0 %1731
      %1797 = vrot.lane.b32.xlu0 %v1605, 4
      %v1798 = vpop.permute.xlu0 %1797
      %1799 = vrot.lane.b32.xlu0 %v1606, 4
      %v1800 = vpop.permute.xlu0 %1799
      %1801 = vrot.lane.b32.xlu0 %v1607, 4
      %v1802 = vpop.permute.xlu0 %1801
      %1803 = vrot.lane.b32.xlu0 %v1608, 4
      %v1804 = vpop.permute.xlu0 %1803
      %1805 = vrot.lane.b32.xlu0 %v1609, 4
      %v1806 = vpop.permute.xlu0 %1805
      %1807 = vrot.lane.b32.xlu0 %v1610, 4
      %v1808 = vpop.permute.xlu0 %1807
      %1809 = vrot.lane.b32.xlu0 %v1611, 4
      %v1810 = vpop.permute.xlu0 %1809
      %1811 = vrot.lane.b32.xlu0 %v1612, 4
      %v1812 = vpop.permute.xlu0 %1811
      %1813 = vrot.lane.b32.xlu0 %v1613, 4
      %v1814 = vpop.permute.xlu0 %1813
      %1815 = vrot.lane.b32.xlu0 %v1614, 4
      %v1816 = vpop.permute.xlu0 %1815
      %1817 = vrot.lane.b32.xlu0 %v1615, 4
      %v1818 = vpop.permute.xlu0 %1817
      %1819 = vrot.lane.b32.xlu0 %v1616, 4
      %v1820 = vpop.permute.xlu0 %1819
      %1821 = vrot.lane.b32.xlu0 %v1617, 4
      %v1822 = vpop.permute.xlu0 %1821
      %1823 = vrot.lane.b32.xlu0 %v1618, 4
      %v1824 = vpop.permute.xlu0 %1823
      %1825 = vrot.lane.b32.xlu0 %v1619, 4
      %v1826 = vpop.permute.xlu0 %1825
      %1827 = vrot.lane.b32.xlu0 %v1620, 4
      %v1828 = vpop.permute.xlu0 %1827
      %1829 = vrot.lane.b32.xlu0 %v1621, 4
      %v1830 = vpop.permute.xlu0 %1829
      %1831 = vrot.lane.b32.xlu0 %v1622, 4
      %v1832 = vpop.permute.xlu0 %1831
      %1833 = vrot.lane.b32.xlu0 %v1623, 4
      %v1834 = vpop.permute.xlu0 %1833
      %1835 = vrot.lane.b32.xlu0 %v1624, 4
      %v1836 = vpop.permute.xlu0 %1835
      %1837 = vrot.lane.b32.xlu0 %v1625, 4
      %v1838 = vpop.permute.xlu0 %1837
      %1839 = vrot.lane.b32.xlu0 %v1626, 4
      %v1840 = vpop.permute.xlu0 %1839
      %1841 = vrot.lane.b32.xlu0 %v1627, 4
      %v1842 = vpop.permute.xlu0 %1841
      %1843 = vrot.lane.b32.xlu0 %v1628, 4
      %v1844 = vpop.permute.xlu0 %1843
      %1845 = vrot.lane.b32.xlu0 %v1629, 4
      %v1846 = vpop.permute.xlu0 %1845
      %1847 = vrot.lane.b32.xlu0 %v1630, 4
      %v1848 = vpop.permute.xlu0 %1847
      %1849 = vrot.lane.b32.xlu0 %v1631, 4
      %v1850 = vpop.permute.xlu0 %1849
      %1851 = vrot.lane.b32.xlu0 %v1632, 4
      %v1852 = vpop.permute.xlu0 %1851
      %1853 = vrot.lane.b32.xlu0 %v1633, 4
      %v1854 = vpop.permute.xlu0 %1853
      %1855 = vrot.lane.b32.xlu0 %v1634, 4
      %v1856 = vpop.permute.xlu0 %1855
      %1857 = vrot.lane.b32.xlu0 %v1635, 4
      %v1858 = vpop.permute.xlu0 %1857
      %1859 = vrot.lane.b32.xlu0 %v1636, 4
      %v1860 = vpop.permute.xlu0 %1859
      %v1893 = vsel %vm826, %v1509, %v1670
      %v1894 = vsel %vm826, %v1510, %v1672
      %v1895 = vsel %vm826, %v1511, %v1674
      %v1896 = vsel %vm826, %v1512, %v1676
      %v1897 = vsel %vm826, %v1513, %v1678
      %v1898 = vsel %vm826, %v1514, %v1680
      %v1899 = vsel %vm826, %v1515, %v1682
      %v1900 = vsel %vm826, %v1516, %v1684
      %v1901 = vsel %vm826, %v1517, %v1686
      %v1902 = vsel %vm826, %v1518, %v1688
      %v1903 = vsel %vm826, %v1519, %v1690
      %v1904 = vsel %vm826, %v1520, %v1692
      %v1905 = vsel %vm826, %v1521, %v1694
      %v1906 = vsel %vm826, %v1522, %v1696
      %v1907 = vsel %vm826, %v1523, %v1698
      %v1908 = vsel %vm826, %v1524, %v1700
      %v1909 = vsel %vm826, %v1525, %v1702
      %v1910 = vsel %vm826, %v1526, %v1704
      %v1911 = vsel %vm826, %v1527, %v1706
      %v1912 = vsel %vm826, %v1528, %v1708
      %v1913 = vsel %vm826, %v1529, %v1710
      %v1914 = vsel %vm826, %v1530, %v1712
      %v1915 = vsel %vm826, %v1531, %v1714
      %v1916 = vsel %vm826, %v1532, %v1716
      %v1917 = vsel %vm826, %v1533, %v1718
      %v1918 = vsel %vm826, %v1534, %v1720
      %v1919 = vsel %vm826, %v1535, %v1722
      %v1920 = vsel %vm826, %v1536, %v1724
      %v1921 = vsel %vm826, %v1537, %v1726
      %v1922 = vsel %vm826, %v1538, %v1728
      %v1923 = vsel %vm826, %v1539, %v1730
      %v1924 = vsel %vm826, %v1540, %v1732
      %v1925 = vsel %vm275, %v1893, %v1798
      %v1926 = vsel %vm275, %v1894, %v1800
      %v1927 = vsel %vm275, %v1895, %v1802
      %v1928 = vsel %vm275, %v1896, %v1804
      %v1929 = vsel %vm275, %v1897, %v1806
      %v1930 = vsel %vm275, %v1898, %v1808
      %v1931 = vsel %vm275, %v1899, %v1810
      %v1932 = vsel %vm275, %v1900, %v1812
      %v1933 = vsel %vm275, %v1901, %v1814
      %v1934 = vsel %vm275, %v1902, %v1816
      %v1935 = vsel %vm275, %v1903, %v1818
      %v1936 = vsel %vm275, %v1904, %v1820
      %v1937 = vsel %vm275, %v1905, %v1822
      %v1938 = vsel %vm275, %v1906, %v1824
      %v1939 = vsel %vm275, %v1907, %v1826
      %v1940 = vsel %vm275, %v1908, %v1828
      %v1941 = vsel %vm275, %v1909, %v1830
      %v1942 = vsel %vm275, %v1910, %v1832
      %v1943 = vsel %vm275, %v1911, %v1834
      %v1944 = vsel %vm275, %v1912, %v1836
      %v1945 = vsel %vm275, %v1913, %v1838
      %v1946 = vsel %vm275, %v1914, %v1840
      %v1947 = vsel %vm275, %v1915, %v1842
      %v1948 = vsel %vm275, %v1916, %v1844
      %v1949 = vsel %vm275, %v1917, %v1846
      %v1950 = vsel %vm275, %v1918, %v1848
      %v1951 = vsel %vm275, %v1919, %v1850
      %v1952 = vsel %vm275, %v1920, %v1852
      %v1953 = vsel %vm275, %v1921, %v1854
      %v1954 = vsel %vm275, %v1922, %v1856
      %v1955 = vsel %vm275, %v1923, %v1858
      %v1956 = vsel %vm275, %v1924, %v1860
      %s1957 = scalar_lea.vmem %s3, 8
      %v1958 = vld [vmem:[%s1957] sm:$0x3f]
      %vm1959 = vcmask 48128
      %v1961 = vsel %vm1959, %v1925, 0
      %v1964 = vsel %vm1959, %v1926, 0
      %v1967 = vsel %vm1959, %v1927, 0
      %v1970 = vsel %vm1959, %v1928, 0
      %v1973 = vsel %vm1959, %v1929, 0
      %v1976 = vsel %vm1959, %v1930, 0
      %v1979 = vsel %vm1959, %v1931, 0
      %v1982 = vsel %vm1959, %v1932, 0
      %v1985 = vsel %vm1959, %v1933, 0
      %v1988 = vsel %vm1959, %v1934, 0
      %v1991 = vsel %vm1959, %v1935, 0
      %v1994 = vsel %vm1959, %v1936, 0
      %v1997 = vsel %vm1959, %v1937, 0
      %v2000 = vsel %vm1959, %v1938, 0
      %v2003 = vsel %vm1959, %v1939, 0
      %v2006 = vsel %vm1959, %v1940, 0
      %v2009 = vsel %vm1959, %v1941, 0
      %v2012 = vsel %vm1959, %v1942, 0
      %v2015 = vsel %vm1959, %v1943, 0
      %v2018 = vsel %vm1959, %v1944, 0
      %v2021 = vsel %vm1959, %v1945, 0
      %v2024 = vsel %vm1959, %v1946, 0
      %v2027 = vsel %vm1959, %v1947, 0
      %v2030 = vsel %vm1959, %v1948, 0
      %v2033 = vsel %vm1959, %v1949, 0
      %v2036 = vsel %vm1959, %v1950, 0
      %v2039 = vsel %vm1959, %v1951, 0
      %v2042 = vsel %vm1959, %v1952, 0
      %v2045 = vsel %vm1959, %v1953, 0
      %v2048 = vsel %vm1959, %v1954, 0
      %v2051 = vsel %vm1959, %v1955, 0
      %v2054 = vsel %vm1959, %v1956, 0
      %vm2056 = vcmask 1045504
      %v2058 = vsel %vm2056, %v1958, 0
      %2060 = vmatprep.subr.mxu0 0.0
      %2061 = vmatpush1.msra.mxu0 %v2058
      %2062 = vmatprep.subr.mxu0 0.0
      %2063 = vmatpush1.msra.mxu0 0.0
      %2064 = vmatprep.subr.mxu0 0.0
      %2065 = vmatpush1.msra.mxu0 0.0
      %2066 = vmatprep.subr.mxu0 0.0
      %2067 = vmatpush1.msra.mxu0 0.0
      %2068 = vmatprep.subr.mxu0 0.0
      %2069 = vmatpush1.msra.mxu0 0.0
      %2070 = vmatprep.subr.mxu0 0.0
      %2071 = vmatpush1.msra.mxu0 0.0
      %2072 = vmatprep.subr.mxu0 0.0
      %2073 = vmatpush1.msra.mxu0 0.0
      %2074 = vmatprep.subr.mxu0 0.0
      %2075 = vmatpush1.msra.mxu0 0.0
      %2076 = vmatprep.subr.mxu0 0.0
      %2077 = vmatpush1.msra.mxu0 0.0
      %2078 = vmatprep.subr.mxu0 0.0
      %2079 = vmatpush1.msra.mxu0 0.0
      %2080 = vmatprep.subr.mxu0 0.0
      %2081 = vmatpush1.msra.mxu0 0.0
      %2082 = vmatprep.subr.mxu0 0.0
      %2083 = vmatpush1.msra.mxu0 0.0
      %2084 = vmatprep.subr.mxu0 0.0
      %2085 = vmatpush1.msra.mxu0 0.0
      %2086 = vmatprep.subr.mxu0 0.0
      %2087 = vmatpush1.msra.mxu0 0.0
      %2088 = vmatprep.subr.mxu0 0.0
      %2089 = vmatpush1.msra.mxu0 0.0
      %2090 = vmatprep.subr.mxu0 0.0
      %2091 = vmatpush1.msra.mxu0 0.0
      %2092 = vmatprep.subr.mxu0 0.0
      %2093 = vmatpush1.msra.mxu0 0.0
      %2094 = vmatprep.subr.mxu0 0.0
      %2095 = vmatpush1.msra.mxu0 0.0
      %2096 = vmatprep.subr.mxu0 0.0
      %2097 = vmatpush1.msra.mxu0 0.0
      %2098 = vmatprep.subr.mxu0 0.0
      %2099 = vmatpush1.msra.mxu0 0.0
      %2100 = vmatprep.subr.mxu0 0.0
      %2101 = vmatpush1.msra.mxu0 0.0
      %2102 = vmatprep.subr.mxu0 0.0
      %2103 = vmatpush1.msra.mxu0 0.0
      %2104 = vmatprep.subr.mxu0 0.0
      %2105 = vmatpush1.msra.mxu0 0.0
      %2106 = vmatprep.subr.mxu0 0.0
      %2107 = vmatpush1.msra.mxu0 0.0
      %2108 = vmatprep.subr.mxu0 0.0
      %2109 = vmatpush1.msra.mxu0 0.0
      %2110 = vmatprep.subr.mxu0 0.0
      %2111 = vmatpush1.msra.mxu0 0.0
      %2112 = vmatprep.subr.mxu0 0.0
      %2113 = vmatpush1.msra.mxu0 0.0
      %2114 = vmatprep.subr.mxu0 0.0
      %2115 = vmatpush1.msra.mxu0 0.0
      %2116 = vmatprep.subr.mxu0 0.0
      %2117 = vmatpush1.msra.mxu0 0.0
      %2118 = vmatprep.subr.mxu0 0.0
      %2119 = vmatpush1.msra.mxu0 0.0
      %2120 = vmatprep.subr.mxu0 0.0
      %2121 = vmatpush1.msra.mxu0 0.0
      %2122 = vmatprep.subr.mxu0 0.0
      %2123 = vmatpush1.msra.mxu0 0.0
      %2124 = vmatprep.mubr.f32.mxu0 0.0
      %2125 = vmatmul.mubr.f32.gmra.mrb[0].mxu0 %v1961
      %v2126 = vpop.f32.mrb[0].mxu0
      %v2127 = vadd.f32 0.0, %v2126
      %v2128 = vpop.f32.mrb[0].mxu0
      %2129 = vmatprep.mubr.f32.mxu0 0.0
      %2130 = vmatmul.mubr.f32.gmra.mrb[0].mxu0 %v1964
      %v2131 = vpop.f32.mrb[0].mxu0
      %v2132 = vadd.f32 0.0, %v2131
      %v2133 = vpop.f32.mrb[0].mxu0
      %2134 = vmatprep.mubr.f32.mxu0 0.0
      %2135 = vmatmul.mubr.f32.gmra.mrb[0].mxu0 %v1967
      %v2136 = vpop.f32.mrb[0].mxu0
      %v2137 = vadd.f32 0.0, %v2136
      %v2138 = vpop.f32.mrb[0].mxu0
      %2139 = vmatprep.mubr.f32.mxu0 0.0
      %2140 = vmatmul.mubr.f32.gmra.mrb[0].mxu0 %v1970
      %v2141 = vpop.f32.mrb[0].mxu0
      %v2142 = vadd.f32 0.0, %v2141
      %v2143 = vpop.f32.mrb[0].mxu0
      %2144 = vmatprep.mubr.f32.mxu0 0.0
      %2145 = vmatmul.mubr.f32.gmra.mrb[0].mxu0 %v1973
      %v2146 = vpop.f32.mrb[0].mxu0
      %v2147 = vadd.f32 0.0, %v2146
      %v2148 = vpop.f32.mrb[0].mxu0
      %2149 = vmatprep.mubr.f32.mxu0 0.0
      %2150 = vmatmul.mubr.f32.gmra.mrb[0].mxu0 %v1976
      %v2151 = vpop.f32.mrb[0].mxu0
      %v2152 = vadd.f32 0.0, %v2151
      %v2153 = vpop.f32.mrb[0].mxu0
      %2154 = vmatprep.mubr.f32.mxu0 0.0
      %2155 = vmatmul.mubr.f32.gmra.mrb[0].mxu0 %v1979
      %v2156 = vpop.f32.mrb[0].mxu0
      %v2157 = vadd.f32 0.0, %v2156
      %v2158 = vpop.f32.mrb[0].mxu0
      %2159 = vmatprep.mubr.f32.mxu0 0.0
      %2160 = vmatmul.mubr.f32.gmra.mrb[0].mxu0 %v1982
      %v2161 = vpop.f32.mrb[0].mxu0
      %v2162 = vadd.f32 0.0, %v2161
      %v2163 = vpop.f32.mrb[0].mxu0
      %2164 = vmatprep.mubr.f32.mxu0 0.0
      %2165 = vmatmul.mubr.f32.gmra.mrb[0].mxu0 %v1985
      %v2166 = vpop.f32.mrb[0].mxu0
      %v2167 = vadd.f32 0.0, %v2166
      %v2168 = vpop.f32.mrb[0].mxu0
      %2169 = vmatprep.mubr.f32.mxu0 0.0
      %2170 = vmatmul.mubr.f32.gmra.mrb[0].mxu0 %v1988
      %v2171 = vpop.f32.mrb[0].mxu0
      %v2172 = vadd.f32 0.0, %v2171
      %v2173 = vpop.f32.mrb[0].mxu0
      %2174 = vmatprep.mubr.f32.mxu0 0.0
      %2175 = vmatmul.mubr.f32.gmra.mrb[0].mxu0 %v1991
      %v2176 = vpop.f32.mrb[0].mxu0
      %v2177 = vadd.f32 0.0, %v2176
      %v2178 = vpop.f32.mrb[0].mxu0
      %2179 = vmatprep.mubr.f32.mxu0 0.0
      %2180 = vmatmul.mubr.f32.gmra.mrb[0].mxu0 %v1994
      %v2181 = vpop.f32.mrb[0].mxu0
      %v2182 = vadd.f32 0.0, %v2181
      %v2183 = vpop.f32.mrb[0].mxu0
      %2184 = vmatprep.mubr.f32.mxu0 0.0
      %2185 = vmatmul.mubr.f32.gmra.mrb[0].mxu0 %v1997
      %v2186 = vpop.f32.mrb[0].mxu0
      %v2187 = vadd.f32 0.0, %v2186
      %v2188 = vpop.f32.mrb[0].mxu0
      %2189 = vmatprep.mubr.f32.mxu0 0.0
      %2190 = vmatmul.mubr.f32.gmra.mrb[0].mxu0 %v2000
      %v2191 = vpop.f32.mrb[0].mxu0
      %v2192 = vadd.f32 0.0, %v2191
      %v2193 = vpop.f32.mrb[0].mxu0
      %2194 = vmatprep.mubr.f32.mxu0 0.0
      %2195 = vmatmul.mubr.f32.gmra.mrb[0].mxu0 %v2003
      %v2196 = vpop.f32.mrb[0].mxu0
      %v2197 = vadd.f32 0.0, %v2196
      %v2198 = vpop.f32.mrb[0].mxu0
      %2199 = vmatprep.mubr.f32.mxu0 0.0
      %2200 = vmatmul.mubr.f32.gmra.mrb[0].mxu0 %v2006
      %v2201 = vpop.f32.mrb[0].mxu0
      %v2202 = vadd.f32 0.0, %v2201
      %v2203 = vpop.f32.mrb[0].mxu0
      %2204 = vmatprep.mubr.f32.mxu0 0.0
      %2205 = vmatmul.mubr.f32.gmra.mrb[0].mxu0 %v2009
      %v2206 = vpop.f32.mrb[0].mxu0
      %v2207 = vadd.f32 0.0, %v2206
      %v2208 = vpop.f32.mrb[0].mxu0
      %2209 = vmatprep.mubr.f32.mxu0 0.0
      %2210 = vmatmul.mubr.f32.gmra.mrb[0].mxu0 %v2012
      %v2211 = vpop.f32.mrb[0].mxu0
      %v2212 = vadd.f32 0.0, %v2211
      %v2213 = vpop.f32.mrb[0].mxu0
      %2214 = vmatprep.mubr.f32.mxu0 0.0
      %2215 = vmatmul.mubr.f32.gmra.mrb[0].mxu0 %v2015
      %v2216 = vpop.f32.mrb[0].mxu0
      %v2217 = vadd.f32 0.0, %v2216
      %v2218 = vpop.f32.mrb[0].mxu0
      %2219 = vmatprep.mubr.f32.mxu0 0.0
      %2220 = vmatmul.mubr.f32.gmra.mrb[0].mxu0 %v2018
      %v2221 = vpop.f32.mrb[0].mxu0
      %v2222 = vadd.f32 0.0, %v2221
      %v2223 = vpop.f32.mrb[0].mxu0
      %2224 = vmatprep.mubr.f32.mxu0 0.0
      %2225 = vmatmul.mubr.f32.gmra.mrb[0].mxu0 %v2021
      %v2226 = vpop.f32.mrb[0].mxu0
      %v2227 = vadd.f32 0.0, %v2226
      %v2228 = vpop.f32.mrb[0].mxu0
      %2229 = vmatprep.mubr.f32.mxu0 0.0
      %2230 = vmatmul.mubr.f32.gmra.mrb[0].mxu0 %v2024
      %v2231 = vpop.f32.mrb[0].mxu0
      %v2232 = vadd.f32 0.0, %v2231
      %v2233 = vpop.f32.mrb[0].mxu0
      %2234 = vmatprep.mubr.f32.mxu0 0.0
      %2235 = vmatmul.mubr.f32.gmra.mrb[0].mxu0 %v2027
      %v2236 = vpop.f32.mrb[0].mxu0
      %v2237 = vadd.f32 0.0, %v2236
      %v2238 = vpop.f32.mrb[0].mxu0
      %2239 = vmatprep.mubr.f32.mxu0 0.0
      %2240 = vmatmul.mubr.f32.gmra.mrb[0].mxu0 %v2030
      %v2241 = vpop.f32.mrb[0].mxu0
      %v2242 = vadd.f32 0.0, %v2241
      %v2243 = vpop.f32.mrb[0].mxu0
      %2244 = vmatprep.mubr.f32.mxu0 0.0
      %2245 = vmatmul.mubr.f32.gmra.mrb[0].mxu0 %v2033
      %v2246 = vpop.f32.mrb[0].mxu0
      %v2247 = vadd.f32 0.0, %v2246
      %v2248 = vpop.f32.mrb[0].mxu0
      %2249 = vmatprep.mubr.f32.mxu0 0.0
      %2250 = vmatmul.mubr.f32.gmra.mrb[0].mxu0 %v2036
      %v2251 = vpop.f32.mrb[0].mxu0
      %v2252 = vadd.f32 0.0, %v2251
      %v2253 = vpop.f32.mrb[0].mxu0
      %2254 = vmatprep.mubr.f32.mxu0 0.0
      %2255 = vmatmul.mubr.f32.gmra.mrb[0].mxu0 %v2039
      %v2256 = vpop.f32.mrb[0].mxu0
      %v2257 = vadd.f32 0.0, %v2256
      %v2258 = vpop.f32.mrb[0].mxu0
      %2259 = vmatprep.mubr.f32.mxu0 0.0
      %2260 = vmatmul.mubr.f32.gmra.mrb[0].mxu0 %v2042
      %v2261 = vpop.f32.mrb[0].mxu0
      %v2262 = vadd.f32 0.0, %v2261
      %v2263 = vpop.f32.mrb[0].mxu0
      %2264 = vmatprep.mubr.f32.mxu0 0.0
      %2265 = vmatmul.mubr.f32.gmra.mrb[0].mxu0 %v2045
      %v2266 = vpop.f32.mrb[0].mxu0
      %v2267 = vadd.f32 0.0, %v2266
      %v2268 = vpop.f32.mrb[0].mxu0
      %2269 = vmatprep.mubr.f32.mxu0 0.0
      %2270 = vmatmul.mubr.f32.gmra.mrb[0].mxu0 %v2048
      %v2271 = vpop.f32.mrb[0].mxu0
      %v2272 = vadd.f32 0.0, %v2271
      %v2273 = vpop.f32.mrb[0].mxu0
      %2274 = vmatprep.mubr.f32.mxu0 0.0
      %2275 = vmatmul.mubr.f32.gmra.mrb[0].mxu0 %v2051
      %v2276 = vpop.f32.mrb[0].mxu0
      %v2277 = vadd.f32 0.0, %v2276
      %v2278 = vpop.f32.mrb[0].mxu0
      %2279 = vmatprep.mubr.f32.mxu0 0.0
      %2280 = vmatmul.mubr.f32.gmra.mrb[0].mxu0 %v2054
      %v2281 = vpop.f32.mrb[0].mxu0
      %v2282 = vadd.f32 0.0, %v2281
      %v2283 = vpop.f32.mrb[0].mxu0
      %2284 = vdwg.mxu0
      %v2286 = vsel %vm1959, %v1380, 0
      %v2289 = vsel %vm1959, %v1381, 0
      %v2292 = vsel %vm1959, %v1382, 0
      %v2295 = vsel %vm1959, %v1383, 0
      %v2298 = vsel %vm1959, %v1384, 0
      %v2301 = vsel %vm1959, %v1385, 0
      %v2304 = vsel %vm1959, %v1386, 0
      %v2307 = vsel %vm1959, %v1387, 0
      %v2310 = vsel %vm1959, %v1388, 0
      %v2313 = vsel %vm1959, %v1389, 0
      %v2316 = vsel %vm1959, %v1390, 0
      %v2319 = vsel %vm1959, %v1391, 0
      %v2322 = vsel %vm1959, %v1392, 0
      %v2325 = vsel %vm1959, %v1393, 0
      %v2328 = vsel %vm1959, %v1394, 0
      %v2331 = vsel %vm1959, %v1395, 0
      %v2334 = vsel %vm1959, %v1396, 0
      %v2337 = vsel %vm1959, %v1397, 0
      %v2340 = vsel %vm1959, %v1398, 0
      %v2343 = vsel %vm1959, %v1399, 0
      %v2346 = vsel %vm1959, %v1400, 0
      %v2349 = vsel %vm1959, %v1401, 0
      %v2352 = vsel %vm1959, %v1402, 0
      %v2355 = vsel %vm1959, %v1403, 0
      %v2358 = vsel %vm1959, %v1404, 0
      %v2361 = vsel %vm1959, %v1405, 0
      %v2364 = vsel %vm1959, %v1406, 0
      %v2367 = vsel %vm1959, %v1407, 0
      %v2370 = vsel %vm1959, %v1408, 0
      %v2373 = vsel %vm1959, %v1409, 0
      %v2376 = vsel %vm1959, %v1410, 0
      %v2379 = vsel %vm1959, %v1411, 0
      %v2382 = vsel %vm2056, %v1412, 0
      %2384 = vmatprep.subr.mxu0 0.0
      %2385 = vmatpush1.msra.mxu0 %v2382
      %2386 = vmatprep.subr.mxu0 0.0
      %2387 = vmatpush1.msra.mxu0 0.0
      %2388 = vmatprep.subr.mxu0 0.0
      %2389 = vmatpush1.msra.mxu0 0.0
      %2390 = vmatprep.subr.mxu0 0.0
      %2391 = vmatpush1.msra.mxu0 0.0
      %2392 = vmatprep.subr.mxu0 0.0
      %2393 = vmatpush1.msra.mxu0 0.0
      %2394 = vmatprep.subr.mxu0 0.0
      %2395 = vmatpush1.msra.mxu0 0.0
      %2396 = vmatprep.subr.mxu0 0.0
      %2397 = vmatpush1.msra.mxu0 0.0
      %2398 = vmatprep.subr.mxu0 0.0
      %2399 = vmatpush1.msra.mxu0 0.0
      %2400 = vmatprep.subr.mxu0 0.0
      %2401 = vmatpush1.msra.mxu0 0.0
      %2402 = vmatprep.subr.mxu0 0.0
      %2403 = vmatpush1.msra.mxu0 0.0
      %2404 = vmatprep.subr.mxu0 0.0
      %2405 = vmatpush1.msra.mxu0 0.0
      %2406 = vmatprep.subr.mxu0 0.0
      %2407 = vmatpush1.msra.mxu0 0.0
      %2408 = vmatprep.subr.mxu0 0.0
      %2409 = vmatpush1.msra.mxu0 0.0
      %2410 = vmatprep.subr.mxu0 0.0
      %2411 = vmatpush1.msra.mxu0 0.0
      %2412 = vmatprep.subr.mxu0 0.0
      %2413 = vmatpush1.msra.mxu0 0.0
      %2414 = vmatprep.subr.mxu0 0.0
      %2415 = vmatpush1.msra.mxu0 0.0
      %2416 = vmatprep.subr.mxu0 0.0
      %2417 = vmatpush1.msra.mxu0 0.0
      %2418 = vmatprep.subr.mxu0 0.0
      %2419 = vmatpush1.msra.mxu0 0.0
      %2420 = vmatprep.subr.mxu0 0.0
      %2421 = vmatpush1.msra.mxu0 0.0
      %2422 = vmatprep.subr.mxu0 0.0
      %2423 = vmatpush1.msra.mxu0 0.0
      %2424 = vmatprep.subr.mxu0 0.0
      %2425 = vmatpush1.msra.mxu0 0.0
      %2426 = vmatprep.subr.mxu0 0.0
      %2427 = vmatpush1.msra.mxu0 0.0
      %2428 = vmatprep.subr.mxu0 0.0
      %2429 = vmatpush1.msra.mxu0 0.0
      %2430 = vmatprep.subr.mxu0 0.0
      %2431 = vmatpush1.msra.mxu0 0.0
      %2432 = vmatprep.subr.mxu0 0.0
      %2433 = vmatpush1.msra.mxu0 0.0
      %2434 = vmatprep.subr.mxu0 0.0
      %2435 = vmatpush1.msra.mxu0 0.0
      %2436 = vmatprep.subr.mxu0 0.0
      %2437 = vmatpush1.msra.mxu0 0.0
      %2438 = vmatprep.subr.mxu0 0.0
      %2439 = vmatpush1.msra.mxu0 0.0
      %2440 = vmatprep.subr.mxu0 0.0
      %2441 = vmatpush1.msra.mxu0 0.0
      %2442 = vmatprep.subr.mxu0 0.0
      %2443 = vmatpush1.msra.mxu0 0.0
      %2444 = vmatprep.subr.mxu0 0.0
      %2445 = vmatpush1.msra.mxu0 0.0
      %2446 = vmatprep.subr.mxu0 0.0
      %2447 = vmatpush1.msra.mxu0 0.0
      %2448 = vmatprep.mubr.f32.mxu0 0.0
      %2449 = vmatmul.mubr.f32.gmra.mrb[0].mxu0 %v2286
      %v2450 = vpop.f32.mrb[0].mxu0
      %v2451 = vadd.f32 %v2127, %v2450
      %v2452 = vpop.f32.mrb[0].mxu0
      %2453 = vmatprep.mubr.f32.mxu0 0.0
      %2454 = vmatmul.mubr.f32.gmra.mrb[0].mxu0 %v2289
      %v2455 = vpop.f32.mrb[0].mxu0
      %v2456 = vadd.f32 %v2132, %v2455
      %v2457 = vpop.f32.mrb[0].mxu0
      %2458 = vmatprep.mubr.f32.mxu0 0.0
      %2459 = vmatmul.mubr.f32.gmra.mrb[0].mxu0 %v2292
      %v2460 = vpop.f32.mrb[0].mxu0
      %v2461 = vadd.f32 %v2137, %v2460
      %v2462 = vpop.f32.mrb[0].mxu0
      %2463 = vmatprep.mubr.f32.mxu0 0.0
      %2464 = vmatmul.mubr.f32.gmra.mrb[0].mxu0 %v2295
      %v2465 = vpop.f32.mrb[0].mxu0
      %v2466 = vadd.f32 %v2142, %v2465
      %v2467 = vpop.f32.mrb[0].mxu0
      %2468 = vmatprep.mubr.f32.mxu0 0.0
      %2469 = vmatmul.mubr.f32.gmra.mrb[0].mxu0 %v2298
      %v2470 = vpop.f32.mrb[0].mxu0
      %v2471 = vadd.f32 %v2147, %v2470
      %v2472 = vpop.f32.mrb[0].mxu0
      %2473 = vmatprep.mubr.f32.mxu0 0.0
      %2474 = vmatmul.mubr.f32.gmra.mrb[0].mxu0 %v2301
      %v2475 = vpop.f32.mrb[0].mxu0
      %v2476 = vadd.f32 %v2152, %v2475
      %v2477 = vpop.f32.mrb[0].mxu0
      %2478 = vmatprep.mubr.f32.mxu0 0.0
      %2479 = vmatmul.mubr.f32.gmra.mrb[0].mxu0 %v2304
      %v2480 = vpop.f32.mrb[0].mxu0
      %v2481 = vadd.f32 %v2157, %v2480
      %v2482 = vpop.f32.mrb[0].mxu0
      %2483 = vmatprep.mubr.f32.mxu0 0.0
      %2484 = vmatmul.mubr.f32.gmra.mrb[0].mxu0 %v2307
      %v2485 = vpop.f32.mrb[0].mxu0
      %v2486 = vadd.f32 %v2162, %v2485
      %v2487 = vpop.f32.mrb[0].mxu0
      %2488 = vmatprep.mubr.f32.mxu0 0.0
      %2489 = vmatmul.mubr.f32.gmra.mrb[0].mxu0 %v2310
      %v2490 = vpop.f32.mrb[0].mxu0
      %v2491 = vadd.f32 %v2167, %v2490
      %v2492 = vpop.f32.mrb[0].mxu0
      %2493 = vmatprep.mubr.f32.mxu0 0.0
      %2494 = vmatmul.mubr.f32.gmra.mrb[0].mxu0 %v2313
      %v2495 = vpop.f32.mrb[0].mxu0
      %v2496 = vadd.f32 %v2172, %v2495
      %v2497 = vpop.f32.mrb[0].mxu0
      %2498 = vmatprep.mubr.f32.mxu0 0.0
      %2499 = vmatmul.mubr.f32.gmra.mrb[0].mxu0 %v2316
      %v2500 = vpop.f32.mrb[0].mxu0
      %v2501 = vadd.f32 %v2177, %v2500
      %v2502 = vpop.f32.mrb[0].mxu0
      %2503 = vmatprep.mubr.f32.mxu0 0.0
      %2504 = vmatmul.mubr.f32.gmra.mrb[0].mxu0 %v2319
      %v2505 = vpop.f32.mrb[0].mxu0
      %v2506 = vadd.f32 %v2182, %v2505
      %v2507 = vpop.f32.mrb[0].mxu0
      %2508 = vmatprep.mubr.f32.mxu0 0.0
      %2509 = vmatmul.mubr.f32.gmra.mrb[0].mxu0 %v2322
      %v2510 = vpop.f32.mrb[0].mxu0
      %v2511 = vadd.f32 %v2187, %v2510
      %v2512 = vpop.f32.mrb[0].mxu0
      %2513 = vmatprep.mubr.f32.mxu0 0.0
      %2514 = vmatmul.mubr.f32.gmra.mrb[0].mxu0 %v2325
      %v2515 = vpop.f32.mrb[0].mxu0
      %v2516 = vadd.f32 %v2192, %v2515
      %v2517 = vpop.f32.mrb[0].mxu0
      %2518 = vmatprep.mubr.f32.mxu0 0.0
      %2519 = vmatmul.mubr.f32.gmra.mrb[0].mxu0 %v2328
      %v2520 = vpop.f32.mrb[0].mxu0
      %v2521 = vadd.f32 %v2197, %v2520
      %v2522 = vpop.f32.mrb[0].mxu0
      %2523 = vmatprep.mubr.f32.mxu0 0.0
      %2524 = vmatmul.mubr.f32.gmra.mrb[0].mxu0 %v2331
      %v2525 = vpop.f32.mrb[0].mxu0
      %v2526 = vadd.f32 %v2202, %v2525
      %v2527 = vpop.f32.mrb[0].mxu0
      %2528 = vmatprep.mubr.f32.mxu0 0.0
      %2529 = vmatmul.mubr.f32.gmra.mrb[0].mxu0 %v2334
      %v2530 = vpop.f32.mrb[0].mxu0
      %v2531 = vadd.f32 %v2207, %v2530
      %v2532 = vpop.f32.mrb[0].mxu0
      %2533 = vmatprep.mubr.f32.mxu0 0.0
      %2534 = vmatmul.mubr.f32.gmra.mrb[0].mxu0 %v2337
      %v2535 = vpop.f32.mrb[0].mxu0
      %v2536 = vadd.f32 %v2212, %v2535
      %v2537 = vpop.f32.mrb[0].mxu0
      %2538 = vmatprep.mubr.f32.mxu0 0.0
      %2539 = vmatmul.mubr.f32.gmra.mrb[0].mxu0 %v2340
      %v2540 = vpop.f32.mrb[0].mxu0
      %v2541 = vadd.f32 %v2217, %v2540
      %v2542 = vpop.f32.mrb[0].mxu0
      %2543 = vmatprep.mubr.f32.mxu0 0.0
      %2544 = vmatmul.mubr.f32.gmra.mrb[0].mxu0 %v2343
      %v2545 = vpop.f32.mrb[0].mxu0
      %v2546 = vadd.f32 %v2222, %v2545
      %v2547 = vpop.f32.mrb[0].mxu0
      %2548 = vmatprep.mubr.f32.mxu0 0.0
      %2549 = vmatmul.mubr.f32.gmra.mrb[0].mxu0 %v2346
      %v2550 = vpop.f32.mrb[0].mxu0
      %v2551 = vadd.f32 %v2227, %v2550
      %v2552 = vpop.f32.mrb[0].mxu0
      %2553 = vmatprep.mubr.f32.mxu0 0.0
      %2554 = vmatmul.mubr.f32.gmra.mrb[0].mxu0 %v2349
      %v2555 = vpop.f32.mrb[0].mxu0
      %v2556 = vadd.f32 %v2232, %v2555
      %v2557 = vpop.f32.mrb[0].mxu0
      %2558 = vmatprep.mubr.f32.mxu0 0.0
      %2559 = vmatmul.mubr.f32.gmra.mrb[0].mxu0 %v2352
      %v2560 = vpop.f32.mrb[0].mxu0
      %v2561 = vadd.f32 %v2237, %v2560
      %v2562 = vpop.f32.mrb[0].mxu0
      %2563 = vmatprep.mubr.f32.mxu0 0.0
      %2564 = vmatmul.mubr.f32.gmra.mrb[0].mxu0 %v2355
      %v2565 = vpop.f32.mrb[0].mxu0
      %v2566 = vadd.f32 %v2242, %v2565
      %v2567 = vpop.f32.mrb[0].mxu0
      %2568 = vmatprep.mubr.f32.mxu0 0.0
      %2569 = vmatmul.mubr.f32.gmra.mrb[0].mxu0 %v2358
      %v2570 = vpop.f32.mrb[0].mxu0
      %v2571 = vadd.f32 %v2247, %v2570
      %v2572 = vpop.f32.mrb[0].mxu0
      %2573 = vmatprep.mubr.f32.mxu0 0.0
      %2574 = vmatmul.mubr.f32.gmra.mrb[0].mxu0 %v2361
      %v2575 = vpop.f32.mrb[0].mxu0
      %v2576 = vadd.f32 %v2252, %v2575
      %v2577 = vpop.f32.mrb[0].mxu0
      %2578 = vmatprep.mubr.f32.mxu0 0.0
      %2579 = vmatmul.mubr.f32.gmra.mrb[0].mxu0 %v2364
      %v2580 = vpop.f32.mrb[0].mxu0
      %v2581 = vadd.f32 %v2257, %v2580
      %v2582 = vpop.f32.mrb[0].mxu0
      %2583 = vmatprep.mubr.f32.mxu0 0.0
      %2584 = vmatmul.mubr.f32.gmra.mrb[0].mxu0 %v2367
      %v2585 = vpop.f32.mrb[0].mxu0
      %v2586 = vadd.f32 %v2262, %v2585
      %v2587 = vpop.f32.mrb[0].mxu0
      %2588 = vmatprep.mubr.f32.mxu0 0.0
      %2589 = vmatmul.mubr.f32.gmra.mrb[0].mxu0 %v2370
      %v2590 = vpop.f32.mrb[0].mxu0
      %v2591 = vadd.f32 %v2267, %v2590
      %v2592 = vpop.f32.mrb[0].mxu0
      %2593 = vmatprep.mubr.f32.mxu0 0.0
      %2594 = vmatmul.mubr.f32.gmra.mrb[0].mxu0 %v2373
      %v2595 = vpop.f32.mrb[0].mxu0
      %v2596 = vadd.f32 %v2272, %v2595
      %v2597 = vpop.f32.mrb[0].mxu0
      %2598 = vmatprep.mubr.f32.mxu0 0.0
      %2599 = vmatmul.mubr.f32.gmra.mrb[0].mxu0 %v2376
      %v2600 = vpop.f32.mrb[0].mxu0
      %v2601 = vadd.f32 %v2277, %v2600
      %v2602 = vpop.f32.mrb[0].mxu0
      %2603 = vmatprep.mubr.f32.mxu0 0.0
      %2604 = vmatmul.mubr.f32.gmra.mrb[0].mxu0 %v2379
      %v2605 = vpop.f32.mrb[0].mxu0
      %v2606 = vadd.f32 %v2282, %v2605
      %v2607 = vpop.f32.mrb[0].mxu0
      %2608 = vdwg.mxu0
      %s2609 = scalar_lea.vmem [#allocation2], 32
      %v2610 = vld [vmem:[%s2609] sm:$0xff]
      %v2611 = vld [vmem:[%s2609 + $0x8] sm:$0xff]
      %v2612 = vld [vmem:[%s2609 + $0x10] sm:$0xff]
      %v2613 = vld [vmem:[%s2609 + $0x18] sm:$0xff]
      %v2614 = vld [vmem:[%s2609 + $0x20] sm:$0xff]
      %v2615 = vld [vmem:[%s2609 + $0x28] sm:$0xff]
      %v2616 = vld [vmem:[%s2609 + $0x30] sm:$0xff]
      %v2617 = vld [vmem:[%s2609 + $0x38] sm:$0xff]
      %v2618 = vld [vmem:[%s2609 + $0x40] sm:$0xff]
      %v2619 = vld [vmem:[%s2609 + $0x48] sm:$0xff]
      %v2620 = vld [vmem:[%s2609 + $0x50] sm:$0xff]
      %v2621 = vld [vmem:[%s2609 + $0x58] sm:$0xff]
      %v2622 = vld [vmem:[%s2609 + $0x60] sm:$0xff]
      %v2623 = vld [vmem:[%s2609 + $0x68] sm:$0xff]
      %v2624 = vld [vmem:[%s2609 + $0x70] sm:$0xff]
      %v2625 = vld [vmem:[%s2609 + $0x78] sm:$0xff]
      %v2626 = vld [vmem:[%s2609 + $0x80] sm:$0xff]
      %v2627 = vld [vmem:[%s2609 + $0x88] sm:$0xff]
      %v2628 = vld [vmem:[%s2609 + $0x90] sm:$0xff]
      %v2629 = vld [vmem:[%s2609 + $0x98] sm:$0xff]
      %v2630 = vld [vmem:[%s2609 + $0xa0] sm:$0xff]
      %v2631 = vld [vmem:[%s2609 + $0xa8] sm:$0xff]
      %v2632 = vld [vmem:[%s2609 + $0xb0] sm:$0xff]
      %v2633 = vld [vmem:[%s2609 + $0xb8] sm:$0xff]
      %v2634 = vld [vmem:[%s2609 + $0xc0] sm:$0xff]
      %v2635 = vld [vmem:[%s2609 + $0xc8] sm:$0xff]
      %v2636 = vld [vmem:[%s2609 + $0xd0] sm:$0xff]
      %v2637 = vld [vmem:[%s2609 + $0xd8] sm:$0xff]
      %v2638 = vld [vmem:[%s2609 + $0xe0] sm:$0xff]
      %v2639 = vld [vmem:[%s2609 + $0xe8] sm:$0xff]
      %v2640 = vld [vmem:[%s2609 + $0xf0] sm:$0xff]
      %v2641 = vld [vmem:[%s2609 + $0xf8] sm:$0xff]
      %v2642 = vrot.slane %v2610, 7
      %v2643 = vrot.slane %v2612, 7
      %v2644 = vrot.slane %v2614, 7
      %v2645 = vrot.slane %v2616, 7
      %v2646 = vrot.slane %v2618, 7
      %v2647 = vrot.slane %v2620, 7
      %v2648 = vrot.slane %v2622, 7
      %v2649 = vrot.slane %v2624, 7
      %v2650 = vrot.slane %v2626, 7
      %v2651 = vrot.slane %v2628, 7
      %v2652 = vrot.slane %v2630, 7
      %v2653 = vrot.slane %v2632, 7
      %v2654 = vrot.slane %v2634, 7
      %v2655 = vrot.slane %v2636, 7
      %v2656 = vrot.slane %v2638, 7
      %v2657 = vrot.slane %v2640, 7
      %v2658 = vrot.slane %v2611, 7
      %v2659 = vrot.slane %v2613, 7
      %v2660 = vrot.slane %v2615, 7
      %v2661 = vrot.slane %v2617, 7
      %v2662 = vrot.slane %v2619, 7
      %v2663 = vrot.slane %v2621, 7
      %v2664 = vrot.slane %v2623, 7
      %v2665 = vrot.slane %v2625, 7
      %v2666 = vrot.slane %v2627, 7
      %v2667 = vrot.slane %v2629, 7
      %v2668 = vrot.slane %v2631, 7
      %v2669 = vrot.slane %v2633, 7
      %v2670 = vrot.slane %v2635, 7
      %v2671 = vrot.slane %v2637, 7
      %v2672 = vrot.slane %v2639, 7
      %v2673 = vrot.slane %v2641, 7
      %v2674 = vsel %vm930, %v2642, %v2658
      %v2675 = vsel %vm930, %v2643, %v2659
      %v2676 = vsel %vm930, %v2644, %v2660
      %v2677 = vsel %vm930, %v2645, %v2661
      %v2678 = vsel %vm930, %v2646, %v2662
      %v2679 = vsel %vm930, %v2647, %v2663
      %v2680 = vsel %vm930, %v2648, %v2664
      %v2681 = vsel %vm930, %v2649, %v2665
      %v2682 = vsel %vm930, %v2650, %v2666
      %v2683 = vsel %vm930, %v2651, %v2667
      %v2684 = vsel %vm930, %v2652, %v2668
      %v2685 = vsel %vm930, %v2653, %v2669
      %v2686 = vsel %vm930, %v2654, %v2670
      %v2687 = vsel %vm930, %v2655, %v2671
      %v2688 = vsel %vm930, %v2656, %v2672
      %v2689 = vsel %vm930, %v2657, %v2673
      %v2690 = vsel %vm930, %v2658, %v2642
      %v2691 = vsel %vm930, %v2659, %v2643
      %v2692 = vsel %vm930, %v2660, %v2644
      %v2693 = vsel %vm930, %v2661, %v2645
      %v2694 = vsel %vm930, %v2662, %v2646
      %v2695 = vsel %vm930, %v2663, %v2647
      %v2696 = vsel %vm930, %v2664, %v2648
      %v2697 = vsel %vm930, %v2665, %v2649
      %v2698 = vsel %vm930, %v2666, %v2650
      %v2699 = vsel %vm930, %v2667, %v2651
      %v2700 = vsel %vm930, %v2668, %v2652
      %v2701 = vsel %vm930, %v2669, %v2653
      %v2702 = vsel %vm930, %v2670, %v2654
      %v2703 = vsel %vm930, %v2671, %v2655
      %v2704 = vsel %vm930, %v2672, %v2656
      %v2705 = vsel %vm930, %v2673, %v2657
      %v2706 = vsel %vm862, 0.0, %v2690
      %v2707 = vsel %vm863, 0.0, %v2674
      %v2708 = vsel %vm862, 0.0, %v2691
      %v2709 = vsel %vm863, 0.0, %v2675
      %v2710 = vsel %vm862, 0.0, %v2692
      %v2711 = vsel %vm863, 0.0, %v2676
      %v2712 = vsel %vm862, 0.0, %v2693
      %v2713 = vsel %vm863, 0.0, %v2677
      %v2714 = vsel %vm862, 0.0, %v2694
      %v2715 = vsel %vm863, 0.0, %v2678
      %v2716 = vsel %vm862, 0.0, %v2695
      %v2717 = vsel %vm863, 0.0, %v2679
      %v2718 = vsel %vm862, 0.0, %v2696
      %v2719 = vsel %vm863, 0.0, %v2680
      %v2720 = vsel %vm862, 0.0, %v2697
      %v2721 = vsel %vm863, 0.0, %v2681
      %v2722 = vsel %vm862, 0.0, %v2698
      %v2723 = vsel %vm863, 0.0, %v2682
      %v2724 = vsel %vm862, 0.0, %v2699
      %v2725 = vsel %vm863, 0.0, %v2683
      %v2726 = vsel %vm862, 0.0, %v2700
      %v2727 = vsel %vm863, 0.0, %v2684
      %v2728 = vsel %vm862, 0.0, %v2701
      %v2729 = vsel %vm863, 0.0, %v2685
      %v2730 = vsel %vm862, 0.0, %v2702
      %v2731 = vsel %vm863, 0.0, %v2686
      %v2732 = vsel %vm862, 0.0, %v2703
      %v2733 = vsel %vm863, 0.0, %v2687
      %v2734 = vsel %vm862, 0.0, %v2704
      %v2735 = vsel %vm863, 0.0, %v2688
      %v2736 = vsel %vm862, 0.0, %v2705
      %v2737 = vsel %vm863, 0.0, %v2689
      %v2738 = vrot.slane %v2610, 1
      %v2739 = vrot.slane %v2612, 1
      %v2740 = vrot.slane %v2614, 1
      %v2741 = vrot.slane %v2616, 1
      %v2742 = vrot.slane %v2618, 1
      %v2743 = vrot.slane %v2620, 1
      %v2744 = vrot.slane %v2622, 1
      %v2745 = vrot.slane %v2624, 1
      %v2746 = vrot.slane %v2626, 1
      %v2747 = vrot.slane %v2628, 1
      %v2748 = vrot.slane %v2630, 1
      %v2749 = vrot.slane %v2632, 1
      %v2750 = vrot.slane %v2634, 1
      %v2751 = vrot.slane %v2636, 1
      %v2752 = vrot.slane %v2638, 1
      %v2753 = vrot.slane %v2640, 1
      %v2754 = vrot.slane %v2611, 1
      %v2755 = vrot.slane %v2613, 1
      %v2756 = vrot.slane %v2615, 1
      %v2757 = vrot.slane %v2617, 1
      %v2758 = vrot.slane %v2619, 1
      %v2759 = vrot.slane %v2621, 1
      %v2760 = vrot.slane %v2623, 1
      %v2761 = vrot.slane %v2625, 1
      %v2762 = vrot.slane %v2627, 1
      %v2763 = vrot.slane %v2629, 1
      %v2764 = vrot.slane %v2631, 1
      %v2765 = vrot.slane %v2633, 1
      %v2766 = vrot.slane %v2635, 1
      %v2767 = vrot.slane %v2637, 1
      %v2768 = vrot.slane %v2639, 1
      %v2769 = vrot.slane %v2641, 1
      %v2770 = vsel %vm1027, %v2738, %v2754
      %v2771 = vsel %vm1027, %v2739, %v2755
      %v2772 = vsel %vm1027, %v2740, %v2756
      %v2773 = vsel %vm1027, %v2741, %v2757
      %v2774 = vsel %vm1027, %v2742, %v2758
      %v2775 = vsel %vm1027, %v2743, %v2759
      %v2776 = vsel %vm1027, %v2744, %v2760
      %v2777 = vsel %vm1027, %v2745, %v2761
      %v2778 = vsel %vm1027, %v2746, %v2762
      %v2779 = vsel %vm1027, %v2747, %v2763
      %v2780 = vsel %vm1027, %v2748, %v2764
      %v2781 = vsel %vm1027, %v2749, %v2765
      %v2782 = vsel %vm1027, %v2750, %v2766
      %v2783 = vsel %vm1027, %v2751, %v2767
      %v2784 = vsel %vm1027, %v2752, %v2768
      %v2785 = vsel %vm1027, %v2753, %v2769
      %v2786 = vsel %vm1027, %v2754, %v2738
      %v2787 = vsel %vm1027, %v2755, %v2739
      %v2788 = vsel %vm1027, %v2756, %v2740
      %v2789 = vsel %vm1027, %v2757, %v2741
      %v2790 = vsel %vm1027, %v2758, %v2742
      %v2791 = vsel %vm1027, %v2759, %v2743
      %v2792 = vsel %vm1027, %v2760, %v2744
      %v2793 = vsel %vm1027, %v2761, %v2745
      %v2794 = vsel %vm1027, %v2762, %v2746
      %v2795 = vsel %vm1027, %v2763, %v2747
      %v2796 = vsel %vm1027, %v2764, %v2748
      %v2797 = vsel %vm1027, %v2765, %v2749
      %v2798 = vsel %vm1027, %v2766, %v2750
      %v2799 = vsel %vm1027, %v2767, %v2751
      %v2800 = vsel %vm1027, %v2768, %v2752
      %v2801 = vsel %vm1027, %v2769, %v2753
      %v2802 = vsel %vm864, 0.0, %v2770
      %v2803 = vsel %vm865, 0.0, %v2786
      %v2804 = vsel %vm864, 0.0, %v2771
      %v2805 = vsel %vm865, 0.0, %v2787
      %v2806 = vsel %vm864, 0.0, %v2772
      %v2807 = vsel %vm865, 0.0, %v2788
      %v2808 = vsel %vm864, 0.0, %v2773
      %v2809 = vsel %vm865, 0.0, %v2789
      %v2810 = vsel %vm864, 0.0, %v2774
      %v2811 = vsel %vm865, 0.0, %v2790
      %v2812 = vsel %vm864, 0.0, %v2775
      %v2813 = vsel %vm865, 0.0, %v2791
      %v2814 = vsel %vm864, 0.0, %v2776
      %v2815 = vsel %vm865, 0.0, %v2792
      %v2816 = vsel %vm864, 0.0, %v2777
      %v2817 = vsel %vm865, 0.0, %v2793
      %v2818 = vsel %vm864, 0.0, %v2778
      %v2819 = vsel %vm865, 0.0, %v2794
      %v2820 = vsel %vm864, 0.0, %v2779
      %v2821 = vsel %vm865, 0.0, %v2795
      %v2822 = vsel %vm864, 0.0, %v2780
      %v2823 = vsel %vm865, 0.0, %v2796
      %v2824 = vsel %vm864, 0.0, %v2781
      %v2825 = vsel %vm865, 0.0, %v2797
      %v2826 = vsel %vm864, 0.0, %v2782
      %v2827 = vsel %vm865, 0.0, %v2798
      %v2828 = vsel %vm864, 0.0, %v2783
      %v2829 = vsel %vm865, 0.0, %v2799
      %v2830 = vsel %vm864, 0.0, %v2784
      %v2831 = vsel %vm865, 0.0, %v2800
      %v2832 = vsel %vm864, 0.0, %v2785
      %v2833 = vsel %vm865, 0.0, %v2801
      %2866 = vrot.lane.b32.xlu0 %v2610, 2
      %v2867 = vpop.permute.xlu0 %2866
      %2868 = vrot.lane.b32.xlu0 %v2611, 2
      %v2869 = vpop.permute.xlu0 %2868
      %2870 = vrot.lane.b32.xlu0 %v2612, 2
      %v2871 = vpop.permute.xlu0 %2870
      %2872 = vrot.lane.b32.xlu0 %v2613, 2
      %v2873 = vpop.permute.xlu0 %2872
      %2874 = vrot.lane.b32.xlu0 %v2614, 2
      %v2875 = vpop.permute.xlu0 %2874
      %2876 = vrot.lane.b32.xlu0 %v2615, 2
      %v2877 = vpop.permute.xlu0 %2876
      %2878 = vrot.lane.b32.xlu0 %v2616, 2
      %v2879 = vpop.permute.xlu0 %2878
      %2880 = vrot.lane.b32.xlu0 %v2617, 2
      %v2881 = vpop.permute.xlu0 %2880
      %2882 = vrot.lane.b32.xlu0 %v2618, 2
      %v2883 = vpop.permute.xlu0 %2882
      %2884 = vrot.lane.b32.xlu0 %v2619, 2
      %v2885 = vpop.permute.xlu0 %2884
      %2886 = vrot.lane.b32.xlu0 %v2620, 2
      %v2887 = vpop.permute.xlu0 %2886
      %2888 = vrot.lane.b32.xlu0 %v2621, 2
      %v2889 = vpop.permute.xlu0 %2888
      %2890 = vrot.lane.b32.xlu0 %v2622, 2
      %v2891 = vpop.permute.xlu0 %2890
      %2892 = vrot.lane.b32.xlu0 %v2623, 2
      %v2893 = vpop.permute.xlu0 %2892
      %2894 = vrot.lane.b32.xlu0 %v2624, 2
      %v2895 = vpop.permute.xlu0 %2894
      %2896 = vrot.lane.b32.xlu0 %v2625, 2
      %v2897 = vpop.permute.xlu0 %2896
      %2898 = vrot.lane.b32.xlu0 %v2626, 2
      %v2899 = vpop.permute.xlu0 %2898
      %2900 = vrot.lane.b32.xlu0 %v2627, 2
      %v2901 = vpop.permute.xlu0 %2900
      %2902 = vrot.lane.b32.xlu0 %v2628, 2
      %v2903 = vpop.permute.xlu0 %2902
      %2904 = vrot.lane.b32.xlu0 %v2629, 2
      %v2905 = vpop.permute.xlu0 %2904
      %2906 = vrot.lane.b32.xlu0 %v2630, 2
      %v2907 = vpop.permute.xlu0 %2906
      %2908 = vrot.lane.b32.xlu0 %v2631, 2
      %v2909 = vpop.permute.xlu0 %2908
      %2910 = vrot.lane.b32.xlu0 %v2632, 2
      %v2911 = vpop.permute.xlu0 %2910
      %2912 = vrot.lane.b32.xlu0 %v2633, 2
      %v2913 = vpop.permute.xlu0 %2912
      %2914 = vrot.lane.b32.xlu0 %v2634, 2
      %v2915 = vpop.permute.xlu0 %2914
      %2916 = vrot.lane.b32.xlu0 %v2635, 2
      %v2917 = vpop.permute.xlu0 %2916
      %2918 = vrot.lane.b32.xlu0 %v2636, 2
      %v2919 = vpop.permute.xlu0 %2918
      %2920 = vrot.lane.b32.xlu0 %v2637, 2
      %v2921 = vpop.permute.xlu0 %2920
      %2922 = vrot.lane.b32.xlu0 %v2638, 2
      %v2923 = vpop.permute.xlu0 %2922
      %2924 = vrot.lane.b32.xlu0 %v2639, 2
      %v2925 = vpop.permute.xlu0 %2924
      %2926 = vrot.lane.b32.xlu0 %v2640, 2
      %v2927 = vpop.permute.xlu0 %2926
      %2928 = vrot.lane.b32.xlu0 %v2641, 2
      %v2929 = vpop.permute.xlu0 %2928
      %2994 = vrot.lane.b32.xlu0 %v2802, 4
      %v2995 = vpop.permute.xlu0 %2994
      %2996 = vrot.lane.b32.xlu0 %v2803, 4
      %v2997 = vpop.permute.xlu0 %2996
      %2998 = vrot.lane.b32.xlu0 %v2804, 4
      %v2999 = vpop.permute.xlu0 %2998
      %3000 = vrot.lane.b32.xlu0 %v2805, 4
      %v3001 = vpop.permute.xlu0 %3000
      %3002 = vrot.lane.b32.xlu0 %v2806, 4
      %v3003 = vpop.permute.xlu0 %3002
      %3004 = vrot.lane.b32.xlu0 %v2807, 4
      %v3005 = vpop.permute.xlu0 %3004
      %3006 = vrot.lane.b32.xlu0 %v2808, 4
      %v3007 = vpop.permute.xlu0 %3006
      %3008 = vrot.lane.b32.xlu0 %v2809, 4
      %v3009 = vpop.permute.xlu0 %3008
      %3010 = vrot.lane.b32.xlu0 %v2810, 4
      %v3011 = vpop.permute.xlu0 %3010
      %3012 = vrot.lane.b32.xlu0 %v2811, 4
      %v3013 = vpop.permute.xlu0 %3012
      %3014 = vrot.lane.b32.xlu0 %v2812, 4
      %v3015 = vpop.permute.xlu0 %3014
      %3016 = vrot.lane.b32.xlu0 %v2813, 4
      %v3017 = vpop.permute.xlu0 %3016
      %3018 = vrot.lane.b32.xlu0 %v2814, 4
      %v3019 = vpop.permute.xlu0 %3018
      %3020 = vrot.lane.b32.xlu0 %v2815, 4
      %v3021 = vpop.permute.xlu0 %3020
      %3022 = vrot.lane.b32.xlu0 %v2816, 4
      %v3023 = vpop.permute.xlu0 %3022
      %3024 = vrot.lane.b32.xlu0 %v2817, 4
      %v3025 = vpop.permute.xlu0 %3024
      %3026 = vrot.lane.b32.xlu0 %v2818, 4
      %v3027 = vpop.permute.xlu0 %3026
      %3028 = vrot.lane.b32.xlu0 %v2819, 4
      %v3029 = vpop.permute.xlu0 %3028
      %3030 = vrot.lane.b32.xlu0 %v2820, 4
      %v3031 = vpop.permute.xlu0 %3030
      %3032 = vrot.lane.b32.xlu0 %v2821, 4
      %v3033 = vpop.permute.xlu0 %3032
      %3034 = vrot.lane.b32.xlu0 %v2822, 4
      %v3035 = vpop.permute.xlu0 %3034
      %3036 = vrot.lane.b32.xlu0 %v2823, 4
      %v3037 = vpop.permute.xlu0 %3036
      %3038 = vrot.lane.b32.xlu0 %v2824, 4
      %v3039 = vpop.permute.xlu0 %3038
      %3040 = vrot.lane.b32.xlu0 %v2825, 4
      %v3041 = vpop.permute.xlu0 %3040
      %3042 = vrot.lane.b32.xlu0 %v2826, 4
      %v3043 = vpop.permute.xlu0 %3042
      %3044 = vrot.lane.b32.xlu0 %v2827, 4
      %v3045 = vpop.permute.xlu0 %3044
      %3046 = vrot.lane.b32.xlu0 %v2828, 4
      %v3047 = vpop.permute.xlu0 %3046
      %3048 = vrot.lane.b32.xlu0 %v2829, 4
      %v3049 = vpop.permute.xlu0 %3048
      %3050 = vrot.lane.b32.xlu0 %v2830, 4
      %v3051 = vpop.permute.xlu0 %3050
      %3052 = vrot.lane.b32.xlu0 %v2831, 4
      %v3053 = vpop.permute.xlu0 %3052
      %3054 = vrot.lane.b32.xlu0 %v2832, 4
      %v3055 = vpop.permute.xlu0 %3054
      %3056 = vrot.lane.b32.xlu0 %v2833, 4
      %v3057 = vpop.permute.xlu0 %3056
      %v3090 = vsel %vm826, %v2706, %v2867
      %v3091 = vsel %vm826, %v2707, %v2869
      %v3092 = vsel %vm826, %v2708, %v2871
      %v3093 = vsel %vm826, %v2709, %v2873
      %v3094 = vsel %vm826, %v2710, %v2875
      %v3095 = vsel %vm826, %v2711, %v2877
      %v3096 = vsel %vm826, %v2712, %v2879
      %v3097 = vsel %vm826, %v2713, %v2881
      %v3098 = vsel %vm826, %v2714, %v2883
      %v3099 = vsel %vm826, %v2715, %v2885
      %v3100 = vsel %vm826, %v2716, %v2887
      %v3101 = vsel %vm826, %v2717, %v2889
      %v3102 = vsel %vm826, %v2718, %v2891
      %v3103 = vsel %vm826, %v2719, %v2893
      %v3104 = vsel %vm826, %v2720, %v2895
      %v3105 = vsel %vm826, %v2721, %v2897
      %v3106 = vsel %vm826, %v2722, %v2899
      %v3107 = vsel %vm826, %v2723, %v2901
      %v3108 = vsel %vm826, %v2724, %v2903
      %v3109 = vsel %vm826, %v2725, %v2905
      %v3110 = vsel %vm826, %v2726, %v2907
      %v3111 = vsel %vm826, %v2727, %v2909
      %v3112 = vsel %vm826, %v2728, %v2911
      %v3113 = vsel %vm826, %v2729, %v2913
      %v3114 = vsel %vm826, %v2730, %v2915
      %v3115 = vsel %vm826, %v2731, %v2917
      %v3116 = vsel %vm826, %v2732, %v2919
      %v3117 = vsel %vm826, %v2733, %v2921
      %v3118 = vsel %vm826, %v2734, %v2923
      %v3119 = vsel %vm826, %v2735, %v2925
      %v3120 = vsel %vm826, %v2736, %v2927
      %v3121 = vsel %vm826, %v2737, %v2929
      %v3122 = vsel %vm275, %v3090, %v2995
      %v3123 = vsel %vm275, %v3091, %v2997
      %v3124 = vsel %vm275, %v3092, %v2999
      %v3125 = vsel %vm275, %v3093, %v3001
      %v3126 = vsel %vm275, %v3094, %v3003
      %v3127 = vsel %vm275, %v3095, %v3005
      %v3128 = vsel %vm275, %v3096, %v3007
      %v3129 = vsel %vm275, %v3097, %v3009
      %v3130 = vsel %vm275, %v3098, %v3011
      %v3131 = vsel %vm275, %v3099, %v3013
      %v3132 = vsel %vm275, %v3100, %v3015
      %v3133 = vsel %vm275, %v3101, %v3017
      %v3134 = vsel %vm275, %v3102, %v3019
      %v3135 = vsel %vm275, %v3103, %v3021
      %v3136 = vsel %vm275, %v3104, %v3023
      %v3137 = vsel %vm275, %v3105, %v3025
      %v3138 = vsel %vm275, %v3106, %v3027
      %v3139 = vsel %vm275, %v3107, %v3029
      %v3140 = vsel %vm275, %v3108, %v3031
      %v3141 = vsel %vm275, %v3109, %v3033
      %v3142 = vsel %vm275, %v3110, %v3035
      %v3143 = vsel %vm275, %v3111, %v3037
      %v3144 = vsel %vm275, %v3112, %v3039
      %v3145 = vsel %vm275, %v3113, %v3041
      %v3146 = vsel %vm275, %v3114, %v3043
      %v3147 = vsel %vm275, %v3115, %v3045
      %v3148 = vsel %vm275, %v3116, %v3047
      %v3149 = vsel %vm275, %v3117, %v3049
      %v3150 = vsel %vm275, %v3118, %v3051
      %v3151 = vsel %vm275, %v3119, %v3053
      %v3152 = vsel %vm275, %v3120, %v3055
      %v3153 = vsel %vm275, %v3121, %v3057
      %s3154 = scalar_lea.vmem %s3, 16
      %v3155 = vld [vmem:[%s3154] sm:$0x3f]
      %v3157 = vsel %vm1959, %v3122, 0
      %v3160 = vsel %vm1959, %v3123, 0
      %v3163 = vsel %vm1959, %v3124, 0
      %v3166 = vsel %vm1959, %v3125, 0
      %v3169 = vsel %vm1959, %v3126, 0
      %v3172 = vsel %vm1959, %v3127, 0
      %v3175 = vsel %vm1959, %v3128, 0
      %v3178 = vsel %vm1959, %v3129, 0
      %v3181 = vsel %vm1959, %v3130, 0
      %v3184 = vsel %vm1959, %v3131, 0
      %v3187 = vsel %vm1959, %v3132, 0
      %v3190 = vsel %vm1959, %v3133, 0
      %v3193 = vsel %vm1959, %v3134, 0
      %v3196 = vsel %vm1959, %v3135, 0
      %v3199 = vsel %vm1959, %v3136, 0
      %v3202 = vsel %vm1959, %v3137, 0
      %v3205 = vsel %vm1959, %v3138, 0
      %v3208 = vsel %vm1959, %v3139, 0
      %v3211 = vsel %vm1959, %v3140, 0
      %v3214 = vsel %vm1959, %v3141, 0
      %v3217 = vsel %vm1959, %v3142, 0
      %v3220 = vsel %vm1959, %v3143, 0
      %v3223 = vsel %vm1959, %v3144, 0
      %v3226 = vsel %vm1959, %v3145, 0
      %v3229 = vsel %vm1959, %v3146, 0
      %v3232 = vsel %vm1959, %v3147, 0
      %v3235 = vsel %vm1959, %v3148, 0
      %v3238 = vsel %vm1959, %v3149, 0
      %v3241 = vsel %vm1959, %v3150, 0
      %v3244 = vsel %vm1959, %v3151, 0
      %v3247 = vsel %vm1959, %v3152, 0
      %v3250 = vsel %vm1959, %v3153, 0
      %v3253 = vsel %vm2056, %v3155, 0
      %3255 = vmatprep.subr.mxu0 0.0
      %3256 = vmatpush1.msra.mxu0 %v3253
      %3257 = vmatprep.subr.mxu0 0.0
      %3258 = vmatpush1.msra.mxu0 0.0
      %3259 = vmatprep.subr.mxu0 0.0
      %3260 = vmatpush1.msra.mxu0 0.0
      %3261 = vmatprep.subr.mxu0 0.0
      %3262 = vmatpush1.msra.mxu0 0.0
      %3263 = vmatprep.subr.mxu0 0.0
      %3264 = vmatpush1.msra.mxu0 0.0
      %3265 = vmatprep.subr.mxu0 0.0
      %3266 = vmatpush1.msra.mxu0 0.0
      %3267 = vmatprep.subr.mxu0 0.0
      %3268 = vmatpush1.msra.mxu0 0.0
      %3269 = vmatprep.subr.mxu0 0.0
      %3270 = vmatpush1.msra.mxu0 0.0
      %3271 = vmatprep.subr.mxu0 0.0
      %3272 = vmatpush1.msra.mxu0 0.0
      %3273 = vmatprep.subr.mxu0 0.0
      %3274 = vmatpush1.msra.mxu0 0.0
      %3275 = vmatprep.subr.mxu0 0.0
      %3276 = vmatpush1.msra.mxu0 0.0
      %3277 = vmatprep.subr.mxu0 0.0
      %3278 = vmatpush1.msra.mxu0 0.0
      %3279 = vmatprep.subr.mxu0 0.0
      %3280 = vmatpush1.msra.mxu0 0.0
      %3281 = vmatprep.subr.mxu0 0.0
      %3282 = vmatpush1.msra.mxu0 0.0
      %3283 = vmatprep.subr.mxu0 0.0
      %3284 = vmatpush1.msra.mxu0 0.0
      %3285 = vmatprep.subr.mxu0 0.0
      %3286 = vmatpush1.msra.mxu0 0.0
      %3287 = vmatprep.subr.mxu0 0.0
      %3288 = vmatpush1.msra.mxu0 0.0
      %3289 = vmatprep.subr.mxu0 0.0
      %3290 = vmatpush1.msra.mxu0 0.0
      %3291 = vmatprep.subr.mxu0 0.0
      %3292 = vmatpush1.msra.mxu0 0.0
      %3293 = vmatprep.subr.mxu0 0.0
      %3294 = vmatpush1.msra.mxu0 0.0
      %3295 = vmatprep.subr.mxu0 0.0
      %3296 = vmatpush1.msra.mxu0 0.0
      %3297 = vmatprep.subr.mxu0 0.0
      %3298 = vmatpush1.msra.mxu0 0.0
      %3299 = vmatprep.subr.mxu0 0.0
      %3300 = vmatpush1.msra.mxu0 0.0
      %3301 = vmatprep.subr.mxu0 0.0
      %3302 = vmatpush1.msra.mxu0 0.0
      %3303 = vmatprep.subr.mxu0 0.0
      %3304 = vmatpush1.msra.mxu0 0.0
      %3305 = vmatprep.subr.mxu0 0.0
      %3306 = vmatpush1.msra.mxu0 0.0
      %3307 = vmatprep.subr.mxu0 0.0
      %3308 = vmatpush1.msra.mxu0 0.0
      %3309 = vmatprep.subr.mxu0 0.0
      %3310 = vmatpush1.msra.mxu0 0.0
      %3311 = vmatprep.subr.mxu0 0.0
      %3312 = vmatpush1.msra.mxu0 0.0
      %3313 = vmatprep.subr.mxu0 0.0
      %3314 = vmatpush1.msra.mxu0 0.0
      %3315 = vmatprep.subr.mxu0 0.0
      %3316 = vmatpush1.msra.mxu0 0.0
      %3317 = vmatprep.subr.mxu0 0.0
      %3318 = vmatpush1.msra.mxu0 0.0
      %3319 = vmatprep.mubr.f32.mxu0 0.0
      %3320 = vmatmul.mubr.f32.gmra.mrb[0].mxu0 %v3157
      %v3321 = vpop.f32.mrb[0].mxu0
      %v3322 = vadd.f32 0.0, %v3321
      %v3323 = vpop.f32.mrb[0].mxu0
      %3324 = vmatprep.mubr.f32.mxu0 0.0
      %3325 = vmatmul.mubr.f32.gmra.mrb[0].mxu0 %v3160
      %v3326 = vpop.f32.mrb[0].mxu0
      %v3327 = vadd.f32 0.0, %v3326
      %v3328 = vpop.f32.mrb[0].mxu0
      %3329 = vmatprep.mubr.f32.mxu0 0.0
      %3330 = vmatmul.mubr.f32.gmra.mrb[0].mxu0 %v3163
      %v3331 = vpop.f32.mrb[0].mxu0
      %v3332 = vadd.f32 0.0, %v3331
      %v3333 = vpop.f32.mrb[0].mxu0
      %3334 = vmatprep.mubr.f32.mxu0 0.0
      %3335 = vmatmul.mubr.f32.gmra.mrb[0].mxu0 %v3166
      %v3336 = vpop.f32.mrb[0].mxu0
      %v3337 = vadd.f32 0.0, %v3336
      %v3338 = vpop.f32.mrb[0].mxu0
      %3339 = vmatprep.mubr.f32.mxu0 0.0
      %3340 = vmatmul.mubr.f32.gmra.mrb[0].mxu0 %v3169
      %v3341 = vpop.f32.mrb[0].mxu0
      %v3342 = vadd.f32 0.0, %v3341
      %v3343 = vpop.f32.mrb[0].mxu0
      %3344 = vmatprep.mubr.f32.mxu0 0.0
      %3345 = vmatmul.mubr.f32.gmra.mrb[0].mxu0 %v3172
      %v3346 = vpop.f32.mrb[0].mxu0
      %v3347 = vadd.f32 0.0, %v3346
      %v3348 = vpop.f32.mrb[0].mxu0
      %3349 = vmatprep.mubr.f32.mxu0 0.0
      %3350 = vmatmul.mubr.f32.gmra.mrb[0].mxu0 %v3175
      %v3351 = vpop.f32.mrb[0].mxu0
      %v3352 = vadd.f32 0.0, %v3351
      %v3353 = vpop.f32.mrb[0].mxu0
      %3354 = vmatprep.mubr.f32.mxu0 0.0
      %3355 = vmatmul.mubr.f32.gmra.mrb[0].mxu0 %v3178
      %v3356 = vpop.f32.mrb[0].mxu0
      %v3357 = vadd.f32 0.0, %v3356
      %v3358 = vpop.f32.mrb[0].mxu0
      %3359 = vmatprep.mubr.f32.mxu0 0.0
      %3360 = vmatmul.mubr.f32.gmra.mrb[0].mxu0 %v3181
      %v3361 = vpop.f32.mrb[0].mxu0
      %v3362 = vadd.f32 0.0, %v3361
      %v3363 = vpop.f32.mrb[0].mxu0
      %3364 = vmatprep.mubr.f32.mxu0 0.0
      %3365 = vmatmul.mubr.f32.gmra.mrb[0].mxu0 %v3184
      %v3366 = vpop.f32.mrb[0].mxu0
      %v3367 = vadd.f32 0.0, %v3366
      %v3368 = vpop.f32.mrb[0].mxu0
      %3369 = vmatprep.mubr.f32.mxu0 0.0
      %3370 = vmatmul.mubr.f32.gmra.mrb[0].mxu0 %v3187
      %v3371 = vpop.f32.mrb[0].mxu0
      %v3372 = vadd.f32 0.0, %v3371
      %v3373 = vpop.f32.mrb[0].mxu0
      %3374 = vmatprep.mubr.f32.mxu0 0.0
      %3375 = vmatmul.mubr.f32.gmra.mrb[0].mxu0 %v3190
      %v3376 = vpop.f32.mrb[0].mxu0
      %v3377 = vadd.f32 0.0, %v3376
      %v3378 = vpop.f32.mrb[0].mxu0
      %3379 = vmatprep.mubr.f32.mxu0 0.0
      %3380 = vmatmul.mubr.f32.gmra.mrb[0].mxu0 %v3193
      %v3381 = vpop.f32.mrb[0].mxu0
      %v3382 = vadd.f32 0.0, %v3381
      %v3383 = vpop.f32.mrb[0].mxu0
      %3384 = vmatprep.mubr.f32.mxu0 0.0
      %3385 = vmatmul.mubr.f32.gmra.mrb[0].mxu0 %v3196
      %v3386 = vpop.f32.mrb[0].mxu0
      %v3387 = vadd.f32 0.0, %v3386
      %v3388 = vpop.f32.mrb[0].mxu0
      %3389 = vmatprep.mubr.f32.mxu0 0.0
      %3390 = vmatmul.mubr.f32.gmra.mrb[0].mxu0 %v3199
      %v3391 = vpop.f32.mrb[0].mxu0
      %v3392 = vadd.f32 0.0, %v3391
      %v3393 = vpop.f32.mrb[0].mxu0
      %3394 = vmatprep.mubr.f32.mxu0 0.0
      %3395 = vmatmul.mubr.f32.gmra.mrb[0].mxu0 %v3202
      %v3396 = vpop.f32.mrb[0].mxu0
      %v3397 = vadd.f32 0.0, %v3396
      %v3398 = vpop.f32.mrb[0].mxu0
      %3399 = vmatprep.mubr.f32.mxu0 0.0
      %3400 = vmatmul.mubr.f32.gmra.mrb[0].mxu0 %v3205
      %v3401 = vpop.f32.mrb[0].mxu0
      %v3402 = vadd.f32 0.0, %v3401
      %v3403 = vpop.f32.mrb[0].mxu0
      %3404 = vmatprep.mubr.f32.mxu0 0.0
      %3405 = vmatmul.mubr.f32.gmra.mrb[0].mxu0 %v3208
      %v3406 = vpop.f32.mrb[0].mxu0
      %v3407 = vadd.f32 0.0, %v3406
      %v3408 = vpop.f32.mrb[0].mxu0
      %3409 = vmatprep.mubr.f32.mxu0 0.0
      %3410 = vmatmul.mubr.f32.gmra.mrb[0].mxu0 %v3211
      %v3411 = vpop.f32.mrb[0].mxu0
      %v3412 = vadd.f32 0.0, %v3411
      %v3413 = vpop.f32.mrb[0].mxu0
      %3414 = vmatprep.mubr.f32.mxu0 0.0
      %3415 = vmatmul.mubr.f32.gmra.mrb[0].mxu0 %v3214
      %v3416 = vpop.f32.mrb[0].mxu0
      %v3417 = vadd.f32 0.0, %v3416
      %v3418 = vpop.f32.mrb[0].mxu0
      %3419 = vmatprep.mubr.f32.mxu0 0.0
      %3420 = vmatmul.mubr.f32.gmra.mrb[0].mxu0 %v3217
      %v3421 = vpop.f32.mrb[0].mxu0
      %v3422 = vadd.f32 0.0, %v3421
      %v3423 = vpop.f32.mrb[0].mxu0
      %3424 = vmatprep.mubr.f32.mxu0 0.0
      %3425 = vmatmul.mubr.f32.gmra.mrb[0].mxu0 %v3220
      %v3426 = vpop.f32.mrb[0].mxu0
      %v3427 = vadd.f32 0.0, %v3426
      %v3428 = vpop.f32.mrb[0].mxu0
      %3429 = vmatprep.mubr.f32.mxu0 0.0
      %3430 = vmatmul.mubr.f32.gmra.mrb[0].mxu0 %v3223
      %v3431 = vpop.f32.mrb[0].mxu0
      %v3432 = vadd.f32 0.0, %v3431
      %v3433 = vpop.f32.mrb[0].mxu0
      %3434 = vmatprep.mubr.f32.mxu0 0.0
      %3435 = vmatmul.mubr.f32.gmra.mrb[0].mxu0 %v3226
      %v3436 = vpop.f32.mrb[0].mxu0
      %v3437 = vadd.f32 0.0, %v3436
      %v3438 = vpop.f32.mrb[0].mxu0
      %3439 = vmatprep.mubr.f32.mxu0 0.0
      %3440 = vmatmul.mubr.f32.gmra.mrb[0].mxu0 %v3229
      %v3441 = vpop.f32.mrb[0].mxu0
      %v3442 = vadd.f32 0.0, %v3441
      %v3443 = vpop.f32.mrb[0].mxu0
      %3444 = vmatprep.mubr.f32.mxu0 0.0
      %3445 = vmatmul.mubr.f32.gmra.mrb[0].mxu0 %v3232
      %v3446 = vpop.f32.mrb[0].mxu0
      %v3447 = vadd.f32 0.0, %v3446
      %v3448 = vpop.f32.mrb[0].mxu0
      %3449 = vmatprep.mubr.f32.mxu0 0.0
      %3450 = vmatmul.mubr.f32.gmra.mrb[0].mxu0 %v3235
      %v3451 = vpop.f32.mrb[0].mxu0
      %v3452 = vadd.f32 0.0, %v3451
      %v3453 = vpop.f32.mrb[0].mxu0
      %3454 = vmatprep.mubr.f32.mxu0 0.0
      %3455 = vmatmul.mubr.f32.gmra.mrb[0].mxu0 %v3238
      %v3456 = vpop.f32.mrb[0].mxu0
      %v3457 = vadd.f32 0.0, %v3456
      %v3458 = vpop.f32.mrb[0].mxu0
      %3459 = vmatprep.mubr.f32.mxu0 0.0
      %3460 = vmatmul.mubr.f32.gmra.mrb[0].mxu0 %v3241
      %v3461 = vpop.f32.mrb[0].mxu0
      %v3462 = vadd.f32 0.0, %v3461
      %v3463 = vpop.f32.mrb[0].mxu0
      %3464 = vmatprep.mubr.f32.mxu0 0.0
      %3465 = vmatmul.mubr.f32.gmra.mrb[0].mxu0 %v3244
      %v3466 = vpop.f32.mrb[0].mxu0
      %v3467 = vadd.f32 0.0, %v3466
      %v3468 = vpop.f32.mrb[0].mxu0
      %3469 = vmatprep.mubr.f32.mxu0 0.0
      %3470 = vmatmul.mubr.f32.gmra.mrb[0].mxu0 %v3247
      %v3471 = vpop.f32.mrb[0].mxu0
      %v3472 = vadd.f32 0.0, %v3471
      %v3473 = vpop.f32.mrb[0].mxu0
      %3474 = vmatprep.mubr.f32.mxu0 0.0
      %3475 = vmatmul.mubr.f32.gmra.mrb[0].mxu0 %v3250
      %v3476 = vpop.f32.mrb[0].mxu0
      %v3477 = vadd.f32 0.0, %v3476
      %v3478 = vpop.f32.mrb[0].mxu0
      %3479 = vdwg.mxu0
      %v3480 = vadd.f32 %v2451, %v3322
      %v3481 = vadd.f32 %v2456, %v3327
      %v3482 = vadd.f32 %v2461, %v3332
      %v3483 = vadd.f32 %v2466, %v3337
      %v3484 = vadd.f32 %v2471, %v3342
      %v3485 = vadd.f32 %v2476, %v3347
      %v3486 = vadd.f32 %v2481, %v3352
      %v3487 = vadd.f32 %v2486, %v3357
      %v3488 = vadd.f32 %v2491, %v3362
      %v3489 = vadd.f32 %v2496, %v3367
      %v3490 = vadd.f32 %v2501, %v3372
      %v3491 = vadd.f32 %v2506, %v3377
      %v3492 = vadd.f32 %v2511, %v3382
      %v3493 = vadd.f32 %v2516, %v3387
      %v3494 = vadd.f32 %v2521, %v3392
      %v3495 = vadd.f32 %v2526, %v3397
      %v3496 = vadd.f32 %v2531, %v3402
      %v3497 = vadd.f32 %v2536, %v3407
      %v3498 = vadd.f32 %v2541, %v3412
      %v3499 = vadd.f32 %v2546, %v3417
      %v3500 = vadd.f32 %v2551, %v3422
      %v3501 = vadd.f32 %v2556, %v3427
      %v3502 = vadd.f32 %v2561, %v3432
      %v3503 = vadd.f32 %v2566, %v3437
      %v3504 = vadd.f32 %v2571, %v3442
      %v3505 = vadd.f32 %v2576, %v3447
      %v3506 = vadd.f32 %v2581, %v3452
      %v3507 = vadd.f32 %v2586, %v3457
      %v3508 = vadd.f32 %v2591, %v3462
      %v3509 = vadd.f32 %v2596, %v3467
      %v3510 = vadd.f32 %v2601, %v3472
      %v3511 = vadd.f32 %v2606, %v3477
      %v3512 = vld [vmem:[%s4] sm:$0x1]
      %v3514 = vlaneseq
      %v3515 = vshrl.u32 %v3514, 7
      %v3516 = vsub.s32 0, %v3515
      %v3517 = vrot.slane %v3512, %v3516
      %v3519 = vadd.f32 %v3480, %v3517
      %v3520 = vadd.f32 %v3481, %v3517
      %v3521 = vadd.f32 %v3482, %v3517
      %v3522 = vadd.f32 %v3483, %v3517
      %v3523 = vadd.f32 %v3484, %v3517
      %v3524 = vadd.f32 %v3485, %v3517
      %v3525 = vadd.f32 %v3486, %v3517
      %v3526 = vadd.f32 %v3487, %v3517
      %v3527 = vadd.f32 %v3488, %v3517
      %v3528 = vadd.f32 %v3489, %v3517
      %v3529 = vadd.f32 %v3490, %v3517
      %v3530 = vadd.f32 %v3491, %v3517
      %v3531 = vadd.f32 %v3492, %v3517
      %v3532 = vadd.f32 %v3493, %v3517
      %v3533 = vadd.f32 %v3494, %v3517
      %v3534 = vadd.f32 %v3495, %v3517
      %v3535 = vadd.f32 %v3496, %v3517
      %v3536 = vadd.f32 %v3497, %v3517
      %v3537 = vadd.f32 %v3498, %v3517
      %v3538 = vadd.f32 %v3499, %v3517
      %v3539 = vadd.f32 %v3500, %v3517
      %v3540 = vadd.f32 %v3501, %v3517
      %v3541 = vadd.f32 %v3502, %v3517
      %v3542 = vadd.f32 %v3503, %v3517
      %v3543 = vadd.f32 %v3504, %v3517
      %v3544 = vadd.f32 %v3505, %v3517
      %v3545 = vadd.f32 %v3506, %v3517
      %v3546 = vadd.f32 %v3507, %v3517
      %v3547 = vadd.f32 %v3508, %v3517
      %v3548 = vadd.f32 %v3509, %v3517
      %v3549 = vadd.f32 %v3510, %v3517
      %v3550 = vadd.f32 %v3511, %v3517
      %v3551 = vxor.u32 %v3519, 2147483648
      %v3552 = vxor.u32 %v3520, 2147483648
      %v3553 = vxor.u32 %v3521, 2147483648
      %v3554 = vxor.u32 %v3522, 2147483648
      %v3555 = vxor.u32 %v3523, 2147483648
      %v3556 = vxor.u32 %v3524, 2147483648
      %v3557 = vxor.u32 %v3525, 2147483648
      %v3558 = vxor.u32 %v3526, 2147483648
      %v3559 = vxor.u32 %v3527, 2147483648
      %v3560 = vxor.u32 %v3528, 2147483648
      %v3561 = vxor.u32 %v3529, 2147483648
      %v3562 = vxor.u32 %v3530, 2147483648
      %v3563 = vxor.u32 %v3531, 2147483648
      %v3564 = vxor.u32 %v3532, 2147483648
      %v3565 = vxor.u32 %v3533, 2147483648
      %v3566 = vxor.u32 %v3534, 2147483648
      %v3567 = vxor.u32 %v3535, 2147483648
      %v3568 = vxor.u32 %v3536, 2147483648
      %v3569 = vxor.u32 %v3537, 2147483648
      %v3570 = vxor.u32 %v3538, 2147483648
      %v3571 = vxor.u32 %v3539, 2147483648
      %v3572 = vxor.u32 %v3540, 2147483648
      %v3573 = vxor.u32 %v3541, 2147483648
      %v3574 = vxor.u32 %v3542, 2147483648
      %v3575 = vxor.u32 %v3543, 2147483648
      %v3576 = vxor.u32 %v3544, 2147483648
      %v3577 = vxor.u32 %v3545, 2147483648
      %v3578 = vxor.u32 %v3546, 2147483648
      %v3579 = vxor.u32 %v3547, 2147483648
      %v3580 = vxor.u32 %v3548, 2147483648
      %v3581 = vxor.u32 %v3549, 2147483648
      %v3582 = vxor.u32 %v3550, 2147483648
      %v3583 = vmul.f32 %v3551, 1.442695
      %v3584 = vpow.pop %v3583
      %v3585 = vmul.f32 %v3552, 1.442695
      %v3586 = vpow.pop %v3585
      %v3587 = vmul.f32 %v3553, 1.442695
      %v3588 = vpow.pop %v3587
      %v3589 = vmul.f32 %v3554, 1.442695
      %v3590 = vpow.pop %v3589
      %v3591 = vmul.f32 %v3555, 1.442695
      %v3592 = vpow.pop %v3591
      %v3593 = vmul.f32 %v3556, 1.442695
      %v3594 = vpow.pop %v3593
      %v3595 = vmul.f32 %v3557, 1.442695
      %v3596 = vpow.pop %v3595
      %v3597 = vmul.f32 %v3558, 1.442695
      %v3598 = vpow.pop %v3597
      %v3599 = vmul.f32 %v3559, 1.442695
      %v3600 = vpow.pop %v3599
      %v3601 = vmul.f32 %v3560, 1.442695
      %v3602 = vpow.pop %v3601
      %v3603 = vmul.f32 %v3561, 1.442695
      %v3604 = vpow.pop %v3603
      %v3605 = vmul.f32 %v3562, 1.442695
      %v3606 = vpow.pop %v3605
      %v3607 = vmul.f32 %v3563, 1.442695
      %v3608 = vpow.pop %v3607
      %v3609 = vmul.f32 %v3564, 1.442695
      %v3610 = vpow.pop %v3609
      %v3611 = vmul.f32 %v3565, 1.442695
      %v3612 = vpow.pop %v3611
      %v3613 = vmul.f32 %v3566, 1.442695
      %v3614 = vpow.pop %v3613
      %v3615 = vmul.f32 %v3567, 1.442695
      %v3616 = vpow.pop %v3615
      %v3617 = vmul.f32 %v3568, 1.442695
      %v3618 = vpow.pop %v3617
      %v3619 = vmul.f32 %v3569, 1.442695
      %v3620 = vpow.pop %v3619
      %v3621 = vmul.f32 %v3570, 1.442695
      %v3622 = vpow.pop %v3621
      %v3623 = vmul.f32 %v3571, 1.442695
      %v3624 = vpow.pop %v3623
      %v3625 = vmul.f32 %v3572, 1.442695
      %v3626 = vpow.pop %v3625
      %v3627 = vmul.f32 %v3573, 1.442695
      %v3628 = vpow.pop %v3627
      %v3629 = vmul.f32 %v3574, 1.442695
      %v3630 = vpow.pop %v3629
      %v3631 = vmul.f32 %v3575, 1.442695
      %v3632 = vpow.pop %v3631
      %v3633 = vmul.f32 %v3576, 1.442695
      %v3634 = vpow.pop %v3633
      %v3635 = vmul.f32 %v3577, 1.442695
      %v3636 = vpow.pop %v3635
      %v3637 = vmul.f32 %v3578, 1.442695
      %v3638 = vpow.pop %v3637
      %v3639 = vmul.f32 %v3579, 1.442695
      %v3640 = vpow.pop %v3639
      %v3641 = vmul.f32 %v3580, 1.442695
      %v3642 = vpow.pop %v3641
      %v3643 = vmul.f32 %v3581, 1.442695
      %v3644 = vpow.pop %v3643
      %v3645 = vmul.f32 %v3582, 1.442695
      %v3646 = vpow.pop %v3645
      %v3647 = vadd.f32 %v3584, 1.0
      %v3648 = vadd.f32 %v3586, 1.0
      %v3649 = vadd.f32 %v3588, 1.0
      %v3650 = vadd.f32 %v3590, 1.0
      %v3651 = vadd.f32 %v3592, 1.0
      %v3652 = vadd.f32 %v3594, 1.0
      %v3653 = vadd.f32 %v3596, 1.0
      %v3654 = vadd.f32 %v3598, 1.0
      %v3655 = vadd.f32 %v3600, 1.0
      %v3656 = vadd.f32 %v3602, 1.0
      %v3657 = vadd.f32 %v3604, 1.0
      %v3658 = vadd.f32 %v3606, 1.0
      %v3659 = vadd.f32 %v3608, 1.0
      %v3660 = vadd.f32 %v3610, 1.0
      %v3661 = vadd.f32 %v3612, 1.0
      %v3662 = vadd.f32 %v3614, 1.0
      %v3663 = vadd.f32 %v3616, 1.0
      %v3664 = vadd.f32 %v3618, 1.0
      %v3665 = vadd.f32 %v3620, 1.0
      %v3666 = vadd.f32 %v3622, 1.0
      %v3667 = vadd.f32 %v3624, 1.0
      %v3668 = vadd.f32 %v3626, 1.0
      %v3669 = vadd.f32 %v3628, 1.0
      %v3670 = vadd.f32 %v3630, 1.0
      %v3671 = vadd.f32 %v3632, 1.0
      %v3672 = vadd.f32 %v3634, 1.0
      %v3673 = vadd.f32 %v3636, 1.0
      %v3674 = vadd.f32 %v3638, 1.0
      %v3675 = vadd.f32 %v3640, 1.0
      %v3676 = vadd.f32 %v3642, 1.0
      %v3677 = vadd.f32 %v3644, 1.0
      %v3678 = vadd.f32 %v3646, 1.0
      %v3679 = vrcp.pop %v3647
      %v3680 = vmul.f32 1.0, %v3679
      %v3681 = vrcp.pop %v3648
      %v3682 = vmul.f32 1.0, %v3681
      %v3683 = vrcp.pop %v3649
      %v3684 = vmul.f32 1.0, %v3683
      %v3685 = vrcp.pop %v3650
      %v3686 = vmul.f32 1.0, %v3685
      %v3687 = vrcp.pop %v3651
      %v3688 = vmul.f32 1.0, %v3687
      %v3689 = vrcp.pop %v3652
      %v3690 = vmul.f32 1.0, %v3689
      %v3691 = vrcp.pop %v3653
      %v3692 = vmul.f32 1.0, %v3691
      %v3693 = vrcp.pop %v3654
      %v3694 = vmul.f32 1.0, %v3693
      %v3695 = vrcp.pop %v3655
      %v3696 = vmul.f32 1.0, %v3695
      %v3697 = vrcp.pop %v3656
      %v3698 = vmul.f32 1.0, %v3697
      %v3699 = vrcp.pop %v3657
      %v3700 = vmul.f32 1.0, %v3699
      %v3701 = vrcp.pop %v3658
      %v3702 = vmul.f32 1.0, %v3701
      %v3703 = vrcp.pop %v3659
      %v3704 = vmul.f32 1.0, %v3703
      %v3705 = vrcp.pop %v3660
      %v3706 = vmul.f32 1.0, %v3705
      %v3707 = vrcp.pop %v3661
      %v3708 = vmul.f32 1.0, %v3707
      %v3709 = vrcp.pop %v3662
      %v3710 = vmul.f32 1.0, %v3709
      %v3711 = vrcp.pop %v3663
      %v3712 = vmul.f32 1.0, %v3711
      %v3713 = vrcp.pop %v3664
      %v3714 = vmul.f32 1.0, %v3713
      %v3715 = vrcp.pop %v3665
      %v3716 = vmul.f32 1.0, %v3715
      %v3717 = vrcp.pop %v3666
      %v3718 = vmul.f32 1.0, %v3717
      %v3719 = vrcp.pop %v3667
      %v3720 = vmul.f32 1.0, %v3719
      %v3721 = vrcp.pop %v3668
      %v3722 = vmul.f32 1.0, %v3721
      %v3723 = vrcp.pop %v3669
      %v3724 = vmul.f32 1.0, %v3723
      %v3725 = vrcp.pop %v3670
      %v3726 = vmul.f32 1.0, %v3725
      %v3727 = vrcp.pop %v3671
      %v3728 = vmul.f32 1.0, %v3727
      %v3729 = vrcp.pop %v3672
      %v3730 = vmul.f32 1.0, %v3729
      %v3731 = vrcp.pop %v3673
      %v3732 = vmul.f32 1.0, %v3731
      %v3733 = vrcp.pop %v3674
      %v3734 = vmul.f32 1.0, %v3733
      %v3735 = vrcp.pop %v3675
      %v3736 = vmul.f32 1.0, %v3735
      %v3737 = vrcp.pop %v3676
      %v3738 = vmul.f32 1.0, %v3737
      %v3739 = vrcp.pop %v3677
      %v3740 = vmul.f32 1.0, %v3739
      %v3741 = vrcp.pop %v3678
      %v3742 = vmul.f32 1.0, %v3741
      %v3743 = vmul.f32 %v3519, %v3680
      %v3744 = vmul.f32 %v3520, %v3682
      %v3745 = vmul.f32 %v3521, %v3684
      %v3746 = vmul.f32 %v3522, %v3686
      %v3747 = vmul.f32 %v3523, %v3688
      %v3748 = vmul.f32 %v3524, %v3690
      %v3749 = vmul.f32 %v3525, %v3692
      %v3750 = vmul.f32 %v3526, %v3694
      %v3751 = vmul.f32 %v3527, %v3696
      %v3752 = vmul.f32 %v3528, %v3698
      %v3753 = vmul.f32 %v3529, %v3700
      %v3754 = vmul.f32 %v3530, %v3702
      %v3755 = vmul.f32 %v3531, %v3704
      %v3756 = vmul.f32 %v3532, %v3706
      %v3757 = vmul.f32 %v3533, %v3708
      %v3758 = vmul.f32 %v3534, %v3710
      %v3759 = vmul.f32 %v3535, %v3712
      %v3760 = vmul.f32 %v3536, %v3714
      %v3761 = vmul.f32 %v3537, %v3716
      %v3762 = vmul.f32 %v3538, %v3718
      %v3763 = vmul.f32 %v3539, %v3720
      %v3764 = vmul.f32 %v3540, %v3722
      %v3765 = vmul.f32 %v3541, %v3724
      %v3766 = vmul.f32 %v3542, %v3726
      %v3767 = vmul.f32 %v3543, %v3728
      %v3768 = vmul.f32 %v3544, %v3730
      %v3769 = vmul.f32 %v3545, %v3732
      %v3770 = vmul.f32 %v3546, %v3734
      %v3771 = vmul.f32 %v3547, %v3736
      %v3772 = vmul.f32 %v3548, %v3738
      %v3773 = vmul.f32 %v3549, %v3740
      %v3774 = vmul.f32 %v3550, %v3742
      %v3775 = vadd.f32 %v3743, %v225
      %v3776 = vadd.f32 %v3744, %v226
      %v3777 = vadd.f32 %v3745, %v227
      %v3778 = vadd.f32 %v3746, %v228
      %v3779 = vadd.f32 %v3747, %v229
      %v3780 = vadd.f32 %v3748, %v230
      %v3781 = vadd.f32 %v3749, %v231
      %v3782 = vadd.f32 %v3750, %v232
      %v3783 = vadd.f32 %v3751, %v233
      %v3784 = vadd.f32 %v3752, %v234
      %v3785 = vadd.f32 %v3753, %v235
      %v3786 = vadd.f32 %v3754, %v236
      %v3787 = vadd.f32 %v3755, %v237
      %v3788 = vadd.f32 %v3756, %v238
      %v3789 = vadd.f32 %v3757, %v239
      %v3790 = vadd.f32 %v3758, %v240
      %v3791 = vadd.f32 %v3759, %v241
      %v3792 = vadd.f32 %v3760, %v242
      %v3793 = vadd.f32 %v3761, %v243
      %v3794 = vadd.f32 %v3762, %v244
      %v3795 = vadd.f32 %v3763, %v245
      %v3796 = vadd.f32 %v3764, %v246
      %v3797 = vadd.f32 %v3765, %v247
      %v3798 = vadd.f32 %v3766, %v248
      %v3799 = vadd.f32 %v3767, %v249
      %v3800 = vadd.f32 %v3768, %v250
      %v3801 = vadd.f32 %v3769, %v251
      %v3802 = vadd.f32 %v3770, %v252
      %v3803 = vadd.f32 %v3771, %v253
      %v3804 = vadd.f32 %v3772, %v254
      %v3805 = vadd.f32 %v3773, %v255
      %v3806 = vadd.f32 %v3774, %v256
      %3807 = vst.msk [vmem:[%s224] sm:$0xff] %vm275, %v3775
      %3808 = vst.msk [vmem:[%s224 + $0x8] sm:$0xff] %vm275, %v3776
      %3809 = vst.msk [vmem:[%s224 + $0x10] sm:$0xff] %vm275, %v3777
      %3810 = vst.msk [vmem:[%s224 + $0x18] sm:$0xff] %vm275, %v3778
      %3811 = vst.msk [vmem:[%s224 + $0x20] sm:$0xff] %vm275, %v3779
      %3812 = vst.msk [vmem:[%s224 + $0x28] sm:$0xff] %vm275, %v3780
      %3813 = vst.msk [vmem:[%s224 + $0x30] sm:$0xff] %vm275, %v3781
      %3814 = vst.msk [vmem:[%s224 + $0x38] sm:$0xff] %vm275, %v3782
      %3815 = vst.msk [vmem:[%s224 + $0x40] sm:$0xff] %vm275, %v3783
      %3816 = vst.msk [vmem:[%s224 + $0x48] sm:$0xff] %vm275, %v3784
      %3817 = vst.msk [vmem:[%s224 + $0x50] sm:$0xff] %vm275, %v3785
      %3818 = vst.msk [vmem:[%s224 + $0x58] sm:$0xff] %vm275, %v3786
      %3819 = vst.msk [vmem:[%s224 + $0x60] sm:$0xff] %vm275, %v3787
      %3820 = vst.msk [vmem:[%s224 + $0x68] sm:$0xff] %vm275, %v3788
      %3821 = vst.msk [vmem:[%s224 + $0x70] sm:$0xff] %vm275, %v3789
      %3822 = vst.msk [vmem:[%s224 + $0x78] sm:$0xff] %vm275, %v3790
      %3823 = vst.msk [vmem:[%s224 + $0x80] sm:$0xff] %vm275, %v3791
      %3824 = vst.msk [vmem:[%s224 + $0x88] sm:$0xff] %vm275, %v3792
      %3825 = vst.msk [vmem:[%s224 + $0x90] sm:$0xff] %vm275, %v3793
      %3826 = vst.msk [vmem:[%s224 + $0x98] sm:$0xff] %vm275, %v3794
      %3827 = vst.msk [vmem:[%s224 + $0xa0] sm:$0xff] %vm275, %v3795
      %3828 = vst.msk [vmem:[%s224 + $0xa8] sm:$0xff] %vm275, %v3796
      %3829 = vst.msk [vmem:[%s224 + $0xb0] sm:$0xff] %vm275, %v3797
      %3830 = vst.msk [vmem:[%s224 + $0xb8] sm:$0xff] %vm275, %v3798
      %3831 = vst.msk [vmem:[%s224 + $0xc0] sm:$0xff] %vm275, %v3799
      %3832 = vst.msk [vmem:[%s224 + $0xc8] sm:$0xff] %vm275, %v3800
      %3833 = vst.msk [vmem:[%s224 + $0xd0] sm:$0xff] %vm275, %v3801
      %3834 = vst.msk [vmem:[%s224 + $0xd8] sm:$0xff] %vm275, %v3802
      %3835 = vst.msk [vmem:[%s224 + $0xe0] sm:$0xff] %vm275, %v3803
      %3836 = vst.msk [vmem:[%s224 + $0xe8] sm:$0xff] %vm275, %v3804
      %3837 = vst.msk [vmem:[%s224 + $0xf0] sm:$0xff] %vm275, %v3805
      %3838 = vst.msk [vmem:[%s224 + $0xf8] sm:$0xff] %vm275, %v3806
      %p3839 = scmp.lt.s32.totalorder %s16, 1
      %s3840 = scalar_select %p3839, %s16, 1
      %s3841 = smul.addr %s3840, 32
      %s3842 = smul.addr %s3841, 8
      %s3843 = scalar_lea.vmem %s5, %s3842
      // Predicated region
      $region45: #{tpu_custom_call.1} parent=39 // pred_check
        %p3844 = pneg %p144
      $region46: #{tpu_custom_call.1} parent=39 // pred_check_branch
        %3846 = sbr.rel (%p3844) target = $region48
      $region47: #{tpu_custom_call.1} parent=39 // pred_region
        _
      $region48: #{tpu_custom_call.1} parent=39 // pred_fallthru
        _
    $region40: #{tpu_custom_call.1} parent=5 // pred_fallthru
      _
    %p3847 = scmp.le.s32.totalorder 2, %s11
    // Predicated region
    $region49: #{tpu_custom_call.1} parent=5 // pred_check
      %p3848 = pneg %p3847
    $region50: #{tpu_custom_call.1} parent=5 // pred_check_branch
      %3850 = sbr.rel (%p3848) target = $region52
    $region51: #{tpu_custom_call.1} parent=5 // pred_region
      %s3851 = ssub.s32 %s11, 2
      // Predicated region
      $region53: #{tpu_custom_call.1} parent=51 // pred_check
        %p3852 = pneg %p150
      $region54: #{tpu_custom_call.1} parent=51 // pred_check_branch
        %3854 = sbr.rel (%p3852) target = $region56
      $region55: #{tpu_custom_call.1} parent=51 // pred_region
        %p3855 = scmp.lt.s32.totalorder %s17, 1
        %s3856 = scalar_select %p3855, %s17, 1
        %s3857 = smul.addr %s3856, 32
        %s3858 = smul.addr %s3857, 8
        %s3859 = scalar_lea.vmem %s5, %s3858
      $region56: #{tpu_custom_call.1} parent=51 // pred_fallthru
        _
    $region52: #{tpu_custom_call.1} parent=5 // pred_fallthru
      _
  $region6: #{tpu_custom_call.1} parent=0 // loop_footer
    %s15 = sadd.s32 1, %s11
  $region7: #{tpu_custom_call.1} parent=0 // loop_footer_branch
    %10 = sbr.rel target = $region3
  $region8: #{tpu_custom_call.1} parent=0 // loop_exit
    _

</llo_original>
